<compile_context>
chip_gen: v5e
topology: v5e:2x2
jax: 0.10.0
libtpu: 0.0.40
codegen_flags: <defaults>
</compile_context>

<pallas_src>
import jax
import jax.numpy as jnp
from jax.experimental import pallas as pl
from jax.experimental.pallas import tpu as pltpu

BN_EPS = 1e-5


def _basic_block_kernel(x_ref, band1_ref, bias1_ref, band2_ref, bias2_ref,
                        o_ref, xp1, xp2):
    """Fused conv1+bn1+relu -> conv2+bn2+residual+relu for one batch sample.

    x_ref:    (D, H*W*Cin)            input sample, (H,W,C) lane-merged, f32
    band?_ref:(3, H*W*Cin, H*W*Cout)  kd-tap banded weights (kh/kw taps, H/W
                                      zero padding and BN scale folded in)
    bias?_ref:(1, H*W*Cout)           folded BN bias (tiled over H*W), f32
    o_ref:    (D, H*W*Cout)
    xp1/xp2:  (D+2, H*W*C)            depth-halo scratch (zero border rows)
    """
    D = x_ref.shape[0]
    f32 = jnp.float32

    # ---- conv1 + bn1 + relu ------------------------------------------------
    # Zero the depth-halo rows every grid step: with a "parallel" grid each
    # TensorCore owns its own scratch, so this must NOT be gated on
    # program_id == 0.  It's only 2 rows (~4 KB) per scratch.
    xp1[0:1, :] = jnp.zeros((1, xp1.shape[1]), xp1.dtype)
    xp1[D + 1:D + 2, :] = jnp.zeros((1, xp1.shape[1]), xp1.dtype)
    xp1[1:D + 1, :] = x_ref[...].astype(xp1.dtype)

    acc1 = jnp.dot(xp1[0:D, :], band1_ref[0], preferred_element_type=f32)
    acc1 = acc1 + jnp.dot(xp1[1:D + 1, :], band1_ref[1],
                          preferred_element_type=f32)
    acc1 = acc1 + jnp.dot(xp1[2:D + 2, :], band1_ref[2],
                          preferred_element_type=f32)
    mid = jnp.maximum(acc1 + bias1_ref[...], 0.0)          # f32 epilogue

    # ---- conv2 + bn2 + residual + relu (intermediate stays in VMEM) --------
    xp2[0:1, :] = jnp.zeros((1, xp2.shape[1]), xp2.dtype)
    xp2[D + 1:D + 2, :] = jnp.zeros((1, xp2.shape[1]), xp2.dtype)
    xp2[1:D + 1, :] = mid.astype(xp2.dtype)

    acc2 = jnp.dot(xp2[0:D, :], band2_ref[0], preferred_element_type=f32)
    acc2 = acc2 + jnp.dot(xp2[1:D + 1, :], band2_ref[1],
                          preferred_element_type=f32)
    acc2 = acc2 + jnp.dot(xp2[2:D + 2, :], band2_ref[2],
                          preferred_element_type=f32)

    out = acc2 + bias2_ref[...] + x_ref[...].astype(f32)    # identity residual
    o_ref[...] = jnp.maximum(out, 0.0).astype(o_ref.dtype)


def _build_band(w_dhwio, H, W):
    """(3,3,3,Cin,Cout) -> (3, H*W*Cin, H*W*Cout) banded weight matrices.

    band[kd] maps the lane-flattened input slab x[d+kd-1] (over (H, W, Cin))
    to the lane-flattened output slab out[d] (over (H, W, Cout)); the kh/kw
    taps and the zero padding along H and W are folded into the band, so the
    kernel needs no im2col or shifted slices along H/W.
    """
    kD, kH, kW, cin, cout = w_dhwio.shape
    h = jnp.arange(H)
    w = jnp.arange(W)
    bands = []
    for kd in range(kD):
        m = jnp.zeros((H, W, cin, H, W, cout), jnp.float32)
        for kh in range(kH):
            # sel_h[h_in, h_out] = 1 iff h_in == h_out + kh - 1 (zero padding
            # along H falls out automatically: no matching h_in -> no term).
            sel_h = (h[:, None] == h[None, :] + (kh - 1)).astype(jnp.float32)
            for kw in range(kW):
                sel_w = (w[:, None] == w[None, :] + (kw - 1)).astype(jnp.float32)
                m = m + (sel_h[:, None, None, :, None, None]
                         * sel_w[None, :, None, None, :, None]
                         * w_dhwio[kd, kh, kw].astype(jnp.float32)
                         [None, None, :, None, None, :])
        bands.append(m.reshape(H * W * cin, H * W * cout))
    return jnp.stack(bands, axis=0)


def _fold_bn(gamma, beta, mean, var):
    scale = gamma / jnp.sqrt(var + BN_EPS)
    return scale, beta - mean * scale


def prepare_basic_block_params(params, H, W, matmul_dtype=jnp.float32):
    """Hoisted parameter prep: BN fold + banded weight construction.

    Run once at parameter-prep time (not inside the per-forward path).
    Use matmul_dtype=jnp.bfloat16 for the fast MXU path on v5e/v6e/v7x.
    """
    s1, b1 = _fold_bn(params["gamma1"], params["beta1"],
                      params["mean1"], params["var1"])
    s2, b2 = _fold_bn(params["gamma2"], params["beta2"],
                      params["mean2"], params["var2"])
    w1 = params["w1"].astype(jnp.float32) * s1[None, None, None, None, :]
    w2 = params["w2"].astype(jnp.float32) * s2[None, None, None, None, :]
    c1 = params["w1"].shape[-1]
    c2 = params["w2"].shape[-1]
    return dict(
        band1=_build_band(w1, H, W).astype(matmul_dtype),
        bias1=jnp.tile(b1.astype(jnp.float32), H * W).reshape(1, H * W * c1),
        band2=_build_band(w2, H, W).astype(matmul_dtype),
        bias2=jnp.tile(b2.astype(jnp.float32), H * W).reshape(1, H * W * c2),
    )


def basic_block_forward(x_ncdhw, prepped):
    """BasicBlock forward (stride=1, downsample=None). Input/output NCDHW."""
    N, C, D, H, W = x_ncdhw.shape
    band1, bias1 = prepped["band1"], prepped["bias1"]
    band2, bias2 = prepped["band2"], prepped["bias2"]
    hwc_in = H * W * C
    hwc_mid = bias1.shape[-1]
    hwc_out = bias2.shape[-1]
    assert band1.shape == (3, hwc_in, hwc_mid), band1.shape
    assert band2.shape == (3, hwc_mid, hwc_out), band2.shape
    assert hwc_out == hwc_in, "identity residual requires in_planes == planes"
    mdt = band1.dtype

    # NCDHW -> (N, D, H*W*C) channels-last, lane-merged.
    x = jnp.transpose(x_ncdhw, (0, 2, 3, 4, 1)).reshape(N, D, hwc_in)

    out = pl.pallas_call(
        _basic_block_kernel,
        out_shape=jax.ShapeDtypeStruct((N, D, hwc_out), x_ncdhw.dtype),
        grid=(N,),
        in_specs=[
            pl.BlockSpec((None, D, hwc_in), lambda n: (n, 0, 0)),
            pl.BlockSpec((3, hwc_in, hwc_mid), lambda n: (0, 0, 0)),
            pl.BlockSpec((1, hwc_mid), lambda n: (0, 0)),
            pl.BlockSpec((3, hwc_mid, hwc_out), lambda n: (0, 0, 0)),
            pl.BlockSpec((1, hwc_out), lambda n: (0, 0)),
        ],
        out_specs=pl.BlockSpec((None, D, hwc_out), lambda n: (n, 0, 0)),
        scratch_shapes=[
            pltpu.VMEM((D + 2, hwc_in), mdt),    # depth-padded input slab
            pltpu.VMEM((D + 2, hwc_mid), mdt),   # depth-padded conv1 output
        ],
        compiler_params=pltpu.CompilerParams(
            dimension_semantics=("parallel",),
            vmem_limit_bytes=32 * 1024 * 1024),
    )(x, band1, bias1, band2, bias2)

    return jnp.transpose(out.reshape(N, D, H, W, C), (0, 4, 1, 2, 3))


def _reference_forward(x_ncdhw, params):
    """Pure-JAX reference (lax conv) for correctness checking."""
    x = jnp.transpose(x_ncdhw, (0, 2, 3, 4, 1))
    dn = ("NDHWC", "DHWIO", "NDHWC")

    def conv(v, w):
        return jax.lax.conv_general_dilated(v, w, (1, 1, 1), "SAME",
                                            dimension_numbers=dn)

    s1, b1 = _fold_bn(params["gamma1"], params["beta1"],
                      params["mean1"], params["var1"])
    s2, b2 = _fold_bn(params["gamma2"], params["beta2"],
                      params["mean2"], params["var2"])
    out = jnp.maximum(conv(x, params["w1"]) * s1 + b1, 0.0)
    out = conv(out, params["w2"]) * s2 + b2
    out = jnp.maximum(out + x, 0.0)
    return jnp.transpose(out, (0, 4, 1, 2, 3))


if __name__ == "__main__":
    # Small shapes: batch=2, in_planes=planes=8, D=H=W=8 (stride=1, no downsample).
    N, C, D, H, W = 2, 8, 8, 8, 8
    key = jax.random.PRNGKey(0)
    ks = jax.random.split(key, 11)

    x = jax.random.normal(ks[0], (N, C, D, H, W), jnp.float32)
    w1 = 0.1 * jax.random.normal(ks[1], (3, 3, 3, C, C), jnp.float32)
    w2 = 0.1 * jax.random.normal(ks[2], (3, 3, 3, C, C), jnp.float32)

    params = dict(
        w1=w1, w2=w2,
        gamma1=1.0 + 0.1 * jax.random.normal(ks[3], (C,), jnp.float32),
        beta1=0.1 * jax.random.normal(ks[4], (C,), jnp.float32),
        mean1=0.1 * jax.random.normal(ks[5], (C,), jnp.float32),
        var1=1.0 + 0.1 * jax.random.uniform(ks[6], (C,), jnp.float32),
        gamma2=1.0 + 0.1 * jax.random.normal(ks[7], (C,), jnp.float32),
        beta2=0.1 * jax.random.normal(ks[8], (C,), jnp.float32),
        mean2=0.1 * jax.random.normal(ks[9], (C,), jnp.float32),
        var2=1.0 + 0.1 * jax.random.uniform(ks[10], (C,), jnp.float32),
    )

    ref = jax.block_until_ready(_reference_forward(x, params))
    fwd = jax.jit(basic_block_forward)

    # f32 MXU operands: exact-semantics check against the lax reference.
    prepped_f32 = prepare_basic_block_params(params, H, W, jnp.float32)
    out_f32 = jax.block_until_ready(fwd(x, prepped_f32))
    assert out_f32.shape == (N, C, D, H, W), out_f32.shape
    assert jnp.allclose(out_f32, ref, rtol=1e-4, atol=1e-4), float(
        jnp.max(jnp.abs(out_f32 - ref)))

    # bf16 MXU operands (fast path on v5e/v6e/v7x); epilogue stays f32, so
    # only matmul rounding differs -> loosened tolerance.
    prepped_bf16 = prepare_basic_block_params(params, H, W, jnp.bfloat16)
    out_bf16 = jax.block_until_ready(fwd(x, prepped_bf16))
    assert jnp.allclose(out_bf16, ref, rtol=1e-1, atol=1e-1), float(
        jnp.max(jnp.abs(out_bf16 - ref)))

    print("KERNEL_OK")
</pallas_src>

<mosaic_0001>
module attributes {stable_mosaic.version = 11 : i64} {
  func.func @_basic_block_kernel(%arg0: i32, %arg1: memref<1x8x512xf32, #tpu.memory_space<vmem>>, %arg2: memref<3x512x512xf32, #tpu.memory_space<vmem>>, %arg3: memref<1x512xf32, #tpu.memory_space<vmem>>, %arg4: memref<3x512x512xf32, #tpu.memory_space<vmem>>, %arg5: memref<1x512xf32, #tpu.memory_space<vmem>>, %arg6: memref<1x8x512xf32, #tpu.memory_space<vmem>>, %arg7: memref<10x512xf32, #tpu.memory_space<vmem>>, %arg8: memref<10x512xf32, #tpu.memory_space<vmem>>) attributes {dimension_semantics = [#tpu.dimension_semantics<parallel>], iteration_bounds = array<i64: 2>, scalar_prefetch = 0 : i64, scratch_operands = 2 : i64, tpu.core_type = #tpu.core_type<tc>, window_params = [{transform_indices = @transform_0, window_bounds = array<i64: 1, 8, 512>}, {pipeline_mode = #tpu.pipeline_mode<synchronous>, transform_indices = @transform_1, window_bounds = array<i64: 3, 512, 512>}, {pipeline_mode = #tpu.pipeline_mode<synchronous>, transform_indices = @transform_2, window_bounds = array<i64: 1, 512>}, {pipeline_mode = #tpu.pipeline_mode<synchronous>, transform_indices = @transform_3, window_bounds = array<i64: 3, 512, 512>}, {pipeline_mode = #tpu.pipeline_mode<synchronous>, transform_indices = @transform_4, window_bounds = array<i64: 1, 512>}, {transform_indices = @transform_5, window_bounds = array<i64: 1, 8, 512>}]} {
    %cst = arith.constant 0.000000e+00 : f32
    %0 = vector.broadcast %cst : f32 to vector<1x512xf32>
    %c0 = arith.constant 0 : index
    %c0_0 = arith.constant 0 : index
    %1 = vector.load %arg7[%c0, %c0_0] : memref<10x512xf32, #tpu.memory_space<vmem>>, vector<1x512xf32>
    tpu.vector_store %arg7[%c0, %c0_0], %0 {strides = array<i32>} : memref<10x512xf32, #tpu.memory_space<vmem>>, vector<1x512xf32>,
    %cst_1 = arith.constant 0.000000e+00 : f32
    %2 = vector.broadcast %cst_1 : f32 to vector<1x512xf32>
    %c9 = arith.constant 9 : index
    %c0_2 = arith.constant 0 : index
    %3 = vector.load %arg7[%c9, %c0_2] : memref<10x512xf32, #tpu.memory_space<vmem>>, vector<1x512xf32>
    tpu.vector_store %arg7[%c9, %c0_2], %2 {strides = array<i32>} : memref<10x512xf32, #tpu.memory_space<vmem>>, vector<1x512xf32>,
    %c0_3 = arith.constant 0 : index
    %c0_4 = arith.constant 0 : index
    %c0_5 = arith.constant 0 : index
    %4 = vector.load %arg1[%c0_3, %c0_4, %c0_5] : memref<1x8x512xf32, #tpu.memory_space<vmem>>, vector<1x8x512xf32>
    %5 = vector.shape_cast %4 : vector<1x8x512xf32> to vector<8x512xf32>
    %c1 = arith.constant 1 : index
    %c0_6 = arith.constant 0 : index
    %6 = vector.load %arg7[%c1, %c0_6] : memref<10x512xf32, #tpu.memory_space<vmem>>, vector<8x512xf32>
    tpu.vector_store %arg7[%c1, %c0_6], %5 {strides = array<i32>} : memref<10x512xf32, #tpu.memory_space<vmem>>, vector<8x512xf32>,
    %c0_7 = arith.constant 0 : index
    %c0_8 = arith.constant 0 : index
    %7 = vector.load %arg7[%c0_7, %c0_8] : memref<10x512xf32, #tpu.memory_space<vmem>>, vector<8x512xf32>
    %c0_9 = arith.constant 0 : index
    %c0_10 = arith.constant 0 : index
    %c0_11 = arith.constant 0 : index
    %8 = vector.load %arg2[%c0_9, %c0_10, %c0_11] : memref<3x512x512xf32, #tpu.memory_space<vmem>>, vector<1x512x512xf32>
    %9 = vector.shape_cast %8 : vector<1x512x512xf32> to vector<512x512xf32>
    %cst_12 = arith.constant dense<0.000000e+00> : vector<8x512xf32>
    %10 = tpu.matmul %7, %9, %cst_12 {dimension_numbers = #tpu.dot_dimension_numbers<[1], [0], [0], [1], [0, 0, 1, 1], [], []>} : vector<8x512xf32>, vector<512x512xf32>, vector<8x512xf32> -> vector<8x512xf32>
    %c1_13 = arith.constant 1 : index
    %c0_14 = arith.constant 0 : index
    %11 = vector.load %arg7[%c1_13, %c0_14] : memref<10x512xf32, #tpu.memory_space<vmem>>, vector<8x512xf32>
    %c1_15 = arith.constant 1 : index
    %c0_16 = arith.constant 0 : index
    %c0_17 = arith.constant 0 : index
    %12 = vector.load %arg2[%c1_15, %c0_16, %c0_17] : memref<3x512x512xf32, #tpu.memory_space<vmem>>, vector<1x512x512xf32>
    %13 = vector.shape_cast %12 : vector<1x512x512xf32> to vector<512x512xf32>
    %cst_18 = arith.constant dense<0.000000e+00> : vector<8x512xf32>
    %14 = tpu.matmul %11, %13, %cst_18 {dimension_numbers = #tpu.dot_dimension_numbers<[1], [0], [0], [1], [0, 0, 1, 1], [], []>} : vector<8x512xf32>, vector<512x512xf32>, vector<8x512xf32> -> vector<8x512xf32>
    %15 = arith.addf %10, %14 : vector<8x512xf32>
    %c2 = arith.constant 2 : index
    %c0_19 = arith.constant 0 : index
    %16 = vector.load %arg7[%c2, %c0_19] : memref<10x512xf32, #tpu.memory_space<vmem>>, vector<8x512xf32>
    %c2_20 = arith.constant 2 : index
    %c0_21 = arith.constant 0 : index
    %c0_22 = arith.constant 0 : index
    %17 = vector.load %arg2[%c2_20, %c0_21, %c0_22] : memref<3x512x512xf32, #tpu.memory_space<vmem>>, vector<1x512x512xf32>
    %18 = vector.shape_cast %17 : vector<1x512x512xf32> to vector<512x512xf32>
    %cst_23 = arith.constant dense<0.000000e+00> : vector<8x512xf32>
    %19 = tpu.matmul %16, %18, %cst_23 {dimension_numbers = #tpu.dot_dimension_numbers<[1], [0], [0], [1], [0, 0, 1, 1], [], []>} : vector<8x512xf32>, vector<512x512xf32>, vector<8x512xf32> -> vector<8x512xf32>
    %20 = arith.addf %15, %19 : vector<8x512xf32>
    %c0_24 = arith.constant 0 : index
    %c0_25 = arith.constant 0 : index
    %21 = vector.load %arg3[%c0_24, %c0_25] : memref<1x512xf32, #tpu.memory_space<vmem>>, vector<1x512xf32>
    %22 = vector.broadcast %21 : vector<1x512xf32> to vector<8x512xf32>
    %23 = arith.addf %20, %22 : vector<8x512xf32>
    %cst_26 = arith.constant 0.000000e+00 : f32
    %24 = vector.broadcast %cst_26 : f32 to vector<8x512xf32>
    %25 = arith.maximumf %23, %24 : vector<8x512xf32>
    %cst_27 = arith.constant 0.000000e+00 : f32
    %26 = vector.broadcast %cst_27 : f32 to vector<1x512xf32>
    %c0_28 = arith.constant 0 : index
    %c0_29 = arith.constant 0 : index
    %27 = vector.load %arg8[%c0_28, %c0_29] : memref<10x512xf32, #tpu.memory_space<vmem>>, vector<1x512xf32>
    tpu.vector_store %arg8[%c0_28, %c0_29], %26 {strides = array<i32>} : memref<10x512xf32, #tpu.memory_space<vmem>>, vector<1x512xf32>,
    %cst_30 = arith.constant 0.000000e+00 : f32
    %28 = vector.broadcast %cst_30 : f32 to vector<1x512xf32>
    %c9_31 = arith.constant 9 : index
    %c0_32 = arith.constant 0 : index
    %29 = vector.load %arg8[%c9_31, %c0_32] : memref<10x512xf32, #tpu.memory_space<vmem>>, vector<1x512xf32>
    tpu.vector_store %arg8[%c9_31, %c0_32], %28 {strides = array<i32>} : memref<10x512xf32, #tpu.memory_space<vmem>>, vector<1x512xf32>,
    %c1_33 = arith.constant 1 : index
    %c0_34 = arith.constant 0 : index
    %30 = vector.load %arg8[%c1_33, %c0_34] : memref<10x512xf32, #tpu.memory_space<vmem>>, vector<8x512xf32>
    tpu.vector_store %arg8[%c1_33, %c0_34], %25 {strides = array<i32>} : memref<10x512xf32, #tpu.memory_space<vmem>>, vector<8x512xf32>,
    %c0_35 = arith.constant 0 : index
    %c0_36 = arith.constant 0 : index
    %31 = vector.load %arg8[%c0_35, %c0_36] : memref<10x512xf32, #tpu.memory_space<vmem>>, vector<8x512xf32>
    %c0_37 = arith.constant 0 : index
    %c0_38 = arith.constant 0 : index
    %c0_39 = arith.constant 0 : index
    %32 = vector.load %arg4[%c0_37, %c0_38, %c0_39] : memref<3x512x512xf32, #tpu.memory_space<vmem>>, vector<1x512x512xf32>
    %33 = vector.shape_cast %32 : vector<1x512x512xf32> to vector<512x512xf32>
    %cst_40 = arith.constant dense<0.000000e+00> : vector<8x512xf32>
    %34 = tpu.matmul %31, %33, %cst_40 {dimension_numbers = #tpu.dot_dimension_numbers<[1], [0], [0], [1], [0, 0, 1, 1], [], []>} : vector<8x512xf32>, vector<512x512xf32>, vector<8x512xf32> -> vector<8x512xf32>
    %c1_41 = arith.constant 1 : index
    %c0_42 = arith.constant 0 : index
    %35 = vector.load %arg8[%c1_41, %c0_42] : memref<10x512xf32, #tpu.memory_space<vmem>>, vector<8x512xf32>
    %c1_43 = arith.constant 1 : index
    %c0_44 = arith.constant 0 : index
    %c0_45 = arith.constant 0 : index
    %36 = vector.load %arg4[%c1_43, %c0_44, %c0_45] : memref<3x512x512xf32, #tpu.memory_space<vmem>>, vector<1x512x512xf32>
    %37 = vector.shape_cast %36 : vector<1x512x512xf32> to vector<512x512xf32>
    %cst_46 = arith.constant dense<0.000000e+00> : vector<8x512xf32>
    %38 = tpu.matmul %35, %37, %cst_46 {dimension_numbers = #tpu.dot_dimension_numbers<[1], [0], [0], [1], [0, 0, 1, 1], [], []>} : vector<8x512xf32>, vector<512x512xf32>, vector<8x512xf32> -> vector<8x512xf32>
    %39 = arith.addf %34, %38 : vector<8x512xf32>
    %c2_47 = arith.constant 2 : index
    %c0_48 = arith.constant 0 : index
    %40 = vector.load %arg8[%c2_47, %c0_48] : memref<10x512xf32, #tpu.memory_space<vmem>>, vector<8x512xf32>
    %c2_49 = arith.constant 2 : index
    %c0_50 = arith.constant 0 : index
    %c0_51 = arith.constant 0 : index
    %41 = vector.load %arg4[%c2_49, %c0_50, %c0_51] : memref<3x512x512xf32, #tpu.memory_space<vmem>>, vector<1x512x512xf32>
    %42 = vector.shape_cast %41 : vector<1x512x512xf32> to vector<512x512xf32>
    %cst_52 = arith.constant dense<0.000000e+00> : vector<8x512xf32>
    %43 = tpu.matmul %40, %42, %cst_52 {dimension_numbers = #tpu.dot_dimension_numbers<[1], [0], [0], [1], [0, 0, 1, 1], [], []>} : vector<8x512xf32>, vector<512x512xf32>, vector<8x512xf32> -> vector<8x512xf32>
    %44 = arith.addf %39, %43 : vector<8x512xf32>
    %c0_53 = arith.constant 0 : index
    %c0_54 = arith.constant 0 : index
    %45 = vector.load %arg5[%c0_53, %c0_54] : memref<1x512xf32, #tpu.memory_space<vmem>>, vector<1x512xf32>
    %46 = vector.broadcast %45 : vector<1x512xf32> to vector<8x512xf32>
    %47 = arith.addf %44, %46 : vector<8x512xf32>
    %c0_55 = arith.constant 0 : index
    %c0_56 = arith.constant 0 : index
    %c0_57 = arith.constant 0 : index
    %48 = vector.load %arg1[%c0_55, %c0_56, %c0_57] : memref<1x8x512xf32, #tpu.memory_space<vmem>>, vector<1x8x512xf32>
    %49 = vector.shape_cast %48 : vector<1x8x512xf32> to vector<8x512xf32>
    %50 = arith.addf %47, %49 : vector<8x512xf32>
    %cst_58 = arith.constant 0.000000e+00 : f32
    %51 = vector.broadcast %cst_58 : f32 to vector<8x512xf32>
    %52 = arith.maximumf %50, %51 : vector<8x512xf32>
    %c0_59 = arith.constant 0 : index
    %c0_60 = arith.constant 0 : index
    %c0_61 = arith.constant 0 : index
    %53 = vector.load %arg6[%c0_59, %c0_60, %c0_61] : memref<1x8x512xf32, #tpu.memory_space<vmem>>, vector<1x8x512xf32>
    %54 = vector.shape_cast %53 : vector<1x8x512xf32> to vector<8x512xf32>
    %55 = vector.shape_cast %52 : vector<8x512xf32> to vector<1x8x512xf32>
    tpu.vector_store %arg6[%c0_59, %c0_60, %c0_61], %55 {strides = array<i32>} : memref<1x8x512xf32, #tpu.memory_space<vmem>>, vector<1x8x512xf32>,
    return
  }
  func.func @transform_0(%arg0: i32) -> (i32, i32, i32) {
    %c0_i32 = arith.constant 0 : i32
    %c0_i32_0 = arith.constant 0 : i32
    %c0_i32_1 = arith.constant 0 : i32
    return %arg0, %c0_i32, %c0_i32_0 : i32, i32, i32
  }
  func.func @transform_1(%arg0: i32) -> (i32, i32, i32) {
    %c0_i32 = arith.constant 0 : i32
    %c0_i32_0 = arith.constant 0 : i32
    %c0_i32_1 = arith.constant 0 : i32
    %c0_i32_2 = arith.constant 0 : i32
    return %c0_i32, %c0_i32_0, %c0_i32_1 : i32, i32, i32
  }
  func.func @transform_2(%arg0: i32) -> (i32, i32) {
    %c0_i32 = arith.constant 0 : i32
    %c0_i32_0 = arith.constant 0 : i32
    %c0_i32_1 = arith.constant 0 : i32
    return %c0_i32, %c0_i32_0 : i32, i32
  }
  func.func @transform_3(%arg0: i32) -> (i32, i32, i32) {
    %c0_i32 = arith.constant 0 : i32
    %c0_i32_0 = arith.constant 0 : i32
    %c0_i32_1 = arith.constant 0 : i32
    %c0_i32_2 = arith.constant 0 : i32
    return %c0_i32, %c0_i32_0, %c0_i32_1 : i32, i32, i32
  }
  func.func @transform_4(%arg0: i32) -> (i32, i32) {
    %c0_i32 = arith.constant 0 : i32
    %c0_i32_0 = arith.constant 0 : i32
    %c0_i32_1 = arith.constant 0 : i32
    return %c0_i32, %c0_i32_0 : i32, i32
  }
  func.func @transform_5(%arg0: i32) -> (i32, i32, i32) {
    %c0_i32 = arith.constant 0 : i32
    %c0_i32_0 = arith.constant 0 : i32
    %c0_i32_1 = arith.constant 0 : i32
    return %arg0, %c0_i32, %c0_i32_0 : i32, i32, i32
  }
}

</mosaic_0001>

<llo_original>
// kernel: basic_block_forward.1
$region0: #{basic_block_forward.1}
  #allocation0 [shape = 'u32[]', space=smem, size = 0x4, offset = 0x4, fixed_abs, tag = 'smem constant byte address 0x4 - core index']
  #allocation1 [shape = 'u32[72,128]{1,0:T(1,128)}', space=vmem, size = 0x9000, scoped, tag = 'internal scratch']
  #allocation2 [shape = 'f32[10,512]{1,0:T(8,128)}', space=vmem, size = 0x8000, scoped, tag = 'scratch operand']
  #allocation3 [shape = 'f32[10,512]{1,0:T(8,128)}', space=vmem, size = 0x8000, scoped, tag = 'scratch operand']
  %s0 = inlined_call_operand.vmem [shape: f32[2,8,512], index: 0, kind: input, shape index: {}]
  %s1 = inlined_call_operand.hbm [shape: f32[3,512,512], index: 1, kind: input, shape index: {}]
  %s2 = inlined_call_operand.hbm [shape: f32[1,512], index: 2, kind: input, shape index: {}]
  %s3 = inlined_call_operand.hbm [shape: f32[3,512,512], index: 3, kind: input, shape index: {}]
  %s4 = inlined_call_operand.hbm [shape: f32[1,512], index: 4, kind: input, shape index: {}]
  %s5 = inlined_call_operand.vmem [shape: f32[2,8,512], index: 5, kind: output, shape index: {}]
  %s6 = sld [smem:[#allocation0]]
  $region69: #{basic_block_forward.1} parent=0
    _
  %s8 = ssub.s32 1, %s6
  %s9 = scalar_select 0, %s8, %s6
  $region1: #{basic_block_forward.1} parent=0
    #allocation4 [shape = 'u8[3145728]{0}', space=vmem, size = 0x300000, scoped, tag = 'input window, operand 1, single buffered']
    #allocation5 [shape = 's32[2]{0}', space=sflag, size = 0x8, scoped, tag = 'scoped memory for basic_block_forward.1']
    #allocation6 [shape = 'u8[2048]{0}', space=vmem, size = 0x800, scoped, tag = 'input window, operand 2, single buffered']
    #allocation7 [shape = 's32[1]{0}', space=sflag, size = 0x4, scoped, tag = 'scoped memory for basic_block_forward.1']
    #allocation8 [shape = 'u8[3145728]{0}', space=vmem, size = 0x300000, scoped, tag = 'input window, operand 3, single buffered']
    #allocation9 [shape = 'u8[2048]{0}', space=vmem, size = 0x800, scoped, tag = 'input window, operand 4, single buffered']
    #allocation10 [shape = 's32[1]{0}', space=sflag, size = 0x4, scoped, tag = 'scoped memory for basic_block_forward.1']
    %10 = vsyncpa [#allocation5], 0
    %11 = vsyncpa [#allocation7], 0
    %12 = vsyncpa [#allocation10], 0
    loop: start=0, step=1, limit=4
    $region2: #{basic_block_forward.1} parent=1 // loop_pre_header
      _
    $region3: #{basic_block_forward.1} parent=1 // loop_header
      %s14 = sphi 0, %s18
      %p15 = scmp.ge.s32.totalorder %s14, 4
      %s24 = sphi 0, %s26
      %s27 = sphi 0, %s24
      %s28 = sphi 0, %s27
      %s44 = sphi 0, %s28
      %s48 = sphi 0, %s48
      %s50 = sphi 0, %s48
      %s51 = sphi 0, %s50
      %s65 = sphi 0, %s51
      %s69 = sphi 0, %s69
      %s71 = sphi 0, %s69
      %s72 = sphi 0, %s71
      %s86 = sphi 0, %s72
      %s90 = sphi 0, %s90
      %s92 = sphi 0, %s90
      %s93 = sphi 0, %s92
      %s107 = sphi 0, %s93
      %s111 = sphi 0, %s111
      %s113 = sphi 0, %s111
      %s114 = sphi 0, %s113
      %s128 = sphi 0, %s114
      %s134 = sphi 0, %s136
      %s137 = sphi 0, %s134
      %s138 = sphi 0, %s137
      %s154 = sphi 0, %s138
    $region4: #{basic_block_forward.1} parent=1 // loop_header_branch
      %17 = sbr.rel (%p15) target = $region8
    $region5: #{basic_block_forward.1} parent=1 // loop_body
      %s19 = ssub.s32 %s14, 1
      %s20 = ssub.s32 %s14, 2
      %s21 = sadd.s32 %s14, 1
      %s22 = ssub.s32 %s14, %s21
      %p23 = scmp.eq.s32.totalorder %s22, 0
      %s25 = sadd.s32 %s24, 1
      %s26 = scalar_select %p23, %s24, %s25
      %p29 = pneg %p23
      %p30 = scmp.eq.s32.totalorder %s14, 1
      %p31 = por %p29, %p30
      %p32 = scmp.ne.s32.totalorder %s24, %s27
      %p33 = scmp.eq.s32.totalorder %s14, 0
      %p34 = por %p32, %p33
      %p35 = scmp.ne.s32.totalorder %s24, %s27
      %p36 = scmp.eq.s32.totalorder %s19, 1
      %p37 = por %p35, %p36
      %p38 = scmp.ne.s32.totalorder %s27, %s28
      %p39 = scmp.eq.s32.totalorder %s19, 0
      %p40 = por %p38, %p39
      %p41 = scmp.ne.s32.totalorder %s27, %s28
      %p42 = scmp.eq.s32.totalorder %s20, 1
      %p43 = por %p41, %p42
      %p45 = scmp.ne.s32.totalorder %s28, %s44
      %p46 = scmp.eq.s32.totalorder %s20, 0
      %p47 = por %p45, %p46
      %s49 = sadd.s32 %s48, 1
      %p52 = scmp.eq.s32.totalorder %s14, 1
      %p53 = scmp.ne.s32.totalorder %s48, %s50
      %p54 = scmp.eq.s32.totalorder %s14, 0
      %p55 = por %p53, %p54
      %p56 = scmp.ne.s32.totalorder %s48, %s50
      %p57 = scmp.eq.s32.totalorder %s19, 1
      %p58 = por %p56, %p57
      %p59 = scmp.ne.s32.totalorder %s50, %s51
      %p60 = scmp.eq.s32.totalorder %s19, 0
      %p61 = por %p59, %p60
      %p62 = scmp.ne.s32.totalorder %s50, %s51
      %p63 = scmp.eq.s32.totalorder %s20, 1
      %p64 = por %p62, %p63
      %p66 = scmp.ne.s32.totalorder %s51, %s65
      %p67 = scmp.eq.s32.totalorder %s20, 0
      %p68 = por %p66, %p67
      %s70 = sadd.s32 %s69, 1
      %p73 = scmp.eq.s32.totalorder %s14, 1
      %p74 = scmp.ne.s32.totalorder %s69, %s71
      %p75 = scmp.eq.s32.totalorder %s14, 0
      %p76 = por %p74, %p75
      %p77 = scmp.ne.s32.totalorder %s69, %s71
      %p78 = scmp.eq.s32.totalorder %s19, 1
      %p79 = por %p77, %p78
      %p80 = scmp.ne.s32.totalorder %s71, %s72
      %p81 = scmp.eq.s32.totalorder %s19, 0
      %p82 = por %p80, %p81
      %p83 = scmp.ne.s32.totalorder %s71, %s72
      %p84 = scmp.eq.s32.totalorder %s20, 1
      %p85 = por %p83, %p84
      %p87 = scmp.ne.s32.totalorder %s72, %s86
      %p88 = scmp.eq.s32.totalorder %s20, 0
      %p89 = por %p87, %p88
      %s91 = sadd.s32 %s90, 1
      %p94 = scmp.eq.s32.totalorder %s14, 1
      %p95 = scmp.ne.s32.totalorder %s90, %s92
      %p96 = scmp.eq.s32.totalorder %s14, 0
      %p97 = por %p95, %p96
      %p98 = scmp.ne.s32.totalorder %s90, %s92
      %p99 = scmp.eq.s32.totalorder %s19, 1
      %p100 = por %p98, %p99
      %p101 = scmp.ne.s32.totalorder %s92, %s93
      %p102 = scmp.eq.s32.totalorder %s19, 0
      %p103 = por %p101, %p102
      %p104 = scmp.ne.s32.totalorder %s92, %s93
      %p105 = scmp.eq.s32.totalorder %s20, 1
      %p106 = por %p104, %p105
      %p108 = scmp.ne.s32.totalorder %s93, %s107
      %p109 = scmp.eq.s32.totalorder %s20, 0
      %p110 = por %p108, %p109
      %s112 = sadd.s32 %s111, 1
      %p115 = scmp.eq.s32.totalorder %s14, 1
      %p116 = scmp.ne.s32.totalorder %s111, %s113
      %p117 = scmp.eq.s32.totalorder %s14, 0
      %p118 = por %p116, %p117
      %p119 = scmp.ne.s32.totalorder %s111, %s113
      %p120 = scmp.eq.s32.totalorder %s19, 1
      %p121 = por %p119, %p120
      %p122 = scmp.ne.s32.totalorder %s113, %s114
      %p123 = scmp.eq.s32.totalorder %s19, 0
      %p124 = por %p122, %p123
      %p125 = scmp.ne.s32.totalorder %s113, %s114
      %p126 = scmp.eq.s32.totalorder %s20, 1
      %p127 = por %p125, %p126
      %p129 = scmp.ne.s32.totalorder %s114, %s128
      %p130 = scmp.eq.s32.totalorder %s20, 0
      %p131 = por %p129, %p130
      %s132 = ssub.s32 %s14, %s21
      %p133 = scmp.eq.s32.totalorder %s132, 0
      %s135 = sadd.s32 %s134, 1
      %s136 = scalar_select %p133, %s134, %s135
      %p139 = pneg %p133
      %p140 = scmp.eq.s32.totalorder %s14, 1
      %p141 = por %p139, %p140
      %p142 = scmp.ne.s32.totalorder %s134, %s137
      %p143 = scmp.eq.s32.totalorder %s14, 0
      %p144 = por %p142, %p143
      %p145 = scmp.ne.s32.totalorder %s134, %s137
      %p146 = scmp.eq.s32.totalorder %s19, 1
      %p147 = por %p145, %p146
      %p148 = scmp.ne.s32.totalorder %s137, %s138
      %p149 = scmp.eq.s32.totalorder %s19, 0
      %p150 = por %p148, %p149
      %p151 = scmp.ne.s32.totalorder %s137, %s138
      %p152 = scmp.eq.s32.totalorder %s20, 1
      %p153 = por %p151, %p152
      %p155 = scmp.ne.s32.totalorder %s138, %s154
      %p156 = scmp.eq.s32.totalorder %s20, 0
      %p157 = por %p155, %p156
      %p158 = scmp.le.s32.totalorder 1, %s14
      %p159 = scmp.lt.s32.totalorder %s14, 3
      %p160 = pnand %p158, %p159
      %p161 = pneg %p160
      // Predicated region
      $region9: #{basic_block_forward.1} parent=5 // pred_check
        _
      $region10: #{basic_block_forward.1} parent=5 // pred_check_branch
        %163 = sbr.rel (%p160) target = $region12
      $region11: #{basic_block_forward.1} parent=5 // pred_region
        %s164 = ssub.s32 %s14, 1
        // Predicated region
        $region13: #{basic_block_forward.1} parent=11 // pred_check
          %p165 = pneg %p61
        $region14: #{basic_block_forward.1} parent=11 // pred_check_branch
          %167 = sbr.rel (%p165) target = $region16
        $region15: #{basic_block_forward.1} parent=11 // pred_region
          %169 = vsyncadd [#allocation5], 0
          %s170 = sshll.u32 %s1, 4
          %s171 = int_to_ptr.hbm [resolvable:$true] %s170
          %s172 = sshll.u32 [#allocation4], 4
          %s173 = int_to_ptr.vmem [resolvable:$true] %s172
          %178 = dma.hbm_to_vmem [thread:$0]  %s171, 98304, %s173, [#allocation5], 512, 512, 32
        $region16: #{basic_block_forward.1} parent=11 // pred_fallthru
          _
        // Predicated region
        $region17: #{basic_block_forward.1} parent=11 // pred_check
          %p179 = pneg %p82
        $region18: #{basic_block_forward.1} parent=11 // pred_check_branch
          %181 = sbr.rel (%p179) target = $region20
        $region19: #{basic_block_forward.1} parent=11 // pred_region
          %183 = vsyncadd [#allocation7], 0
          %s185 = sshll.u32 %s2, 4
          %s186 = int_to_ptr.hbm [resolvable:$true] %s185
          %s187 = sshll.u32 [#allocation6], 4
          %s188 = int_to_ptr.vmem [resolvable:$true] %s187
          %190 = dma.hbm_to_vmem [thread:$0]  %s186, 64, %s188, [#allocation7]
        $region20: #{basic_block_forward.1} parent=11 // pred_fallthru
          _
        // Predicated region
        $region21: #{basic_block_forward.1} parent=11 // pred_check
          %p191 = pneg %p103
        $region22: #{basic_block_forward.1} parent=11 // pred_check_branch
          %193 = sbr.rel (%p191) target = $region24
        $region23: #{basic_block_forward.1} parent=11 // pred_region
          %195 = vsyncadd [#allocation7], 0
          %s196 = sshll.u32 %s3, 4
          %s197 = int_to_ptr.hbm [resolvable:$true] %s196
          %s198 = sshll.u32 [#allocation8], 4
          %s199 = int_to_ptr.vmem [resolvable:$true] %s198
          %204 = dma.hbm_to_vmem [thread:$0]  %s197, 98304, %s199, [#allocation7], 512, 512, 32
        $region24: #{basic_block_forward.1} parent=11 // pred_fallthru
          _
        // Predicated region
        $region25: #{basic_block_forward.1} parent=11 // pred_check
          %p205 = pneg %p124
        $region26: #{basic_block_forward.1} parent=11 // pred_check_branch
          %207 = sbr.rel (%p205) target = $region28
        $region27: #{basic_block_forward.1} parent=11 // pred_region
          %209 = vsyncadd [#allocation10], 0
          %s211 = sshll.u32 %s4, 4
          %s212 = int_to_ptr.hbm [resolvable:$true] %s211
          %s213 = sshll.u32 [#allocation9], 4
          %s214 = int_to_ptr.vmem [resolvable:$true] %s213
          %216 = dma.hbm_to_vmem [thread:$0]  %s212, 64, %s214, [#allocation10]
        $region28: #{basic_block_forward.1} parent=11 // pred_fallthru
          _
      $region12: #{basic_block_forward.1} parent=5 // pred_fallthru
        _
      %p217 = scmp.lt.s32.totalorder %s14, 2
      // Predicated region
      $region29: #{basic_block_forward.1} parent=5 // pred_check
        %p218 = pneg %p217
      $region30: #{basic_block_forward.1} parent=5 // pred_check_branch
        %220 = sbr.rel (%p218) target = $region32
      $region31: #{basic_block_forward.1} parent=5 // pred_region
        // Predicated region
        $region33: #{basic_block_forward.1} parent=31 // pred_check
          %p221 = pneg %p34
        $region34: #{basic_block_forward.1} parent=31 // pred_check_branch
          %223 = sbr.rel (%p221) target = $region36
        $region35: #{basic_block_forward.1} parent=31 // pred_region
          %p224 = scmp.lt.s32.totalorder %s14, 1
          %s225 = scalar_select %p224, %s14, 1
          %s226 = smul.addr %s225, 4
          %s227 = smul.addr %s226, 8
          %s228 = scalar_lea.vmem %s0, %s227
        $region36: #{basic_block_forward.1} parent=31 // pred_fallthru
          _
      $region32: #{basic_block_forward.1} parent=5 // pred_fallthru
        _
      %p229 = scmp.le.s32.totalorder 1, %s14
      %p230 = scmp.lt.s32.totalorder %s14, 3
      %p231 = pnand %p229, %p230
      %p232 = pneg %p231
      // Predicated region
      $region37: #{basic_block_forward.1} parent=5 // pred_check
        _
      $region38: #{basic_block_forward.1} parent=5 // pred_check_branch
        %234 = sbr.rel (%p231) target = $region40
      $region39: #{basic_block_forward.1} parent=5 // pred_region
        %s235 = ssub.s32 %s14, 1
        // Predicated region
        $region41: #{basic_block_forward.1} parent=39 // pred_check
          %p236 = pneg %p61
        $region42: #{basic_block_forward.1} parent=39 // pred_check_branch
          %238 = sbr.rel (%p236) target = $region44
        $region43: #{basic_block_forward.1} parent=39 // pred_region
          %240 = dma.done [#allocation5], 98304
        $region44: #{basic_block_forward.1} parent=39 // pred_fallthru
          _
        // Predicated region
        $region45: #{basic_block_forward.1} parent=39 // pred_check
          %p241 = pneg %p82
        $region46: #{basic_block_forward.1} parent=39 // pred_check_branch
          %243 = sbr.rel (%p241) target = $region48
        $region47: #{basic_block_forward.1} parent=39 // pred_region
          %245 = dma.done [#allocation7], 64
        $region48: #{basic_block_forward.1} parent=39 // pred_fallthru
          _
        // Predicated region
        $region49: #{basic_block_forward.1} parent=39 // pred_check
          %p246 = pneg %p103
        $region50: #{basic_block_forward.1} parent=39 // pred_check_branch
          %248 = sbr.rel (%p246) target = $region52
        $region51: #{basic_block_forward.1} parent=39 // pred_region
          %250 = dma.done [#allocation7], 98304
        $region52: #{basic_block_forward.1} parent=39 // pred_fallthru
          _
        // Predicated region
        $region53: #{basic_block_forward.1} parent=39 // pred_check
          %p251 = pneg %p124
        $region54: #{basic_block_forward.1} parent=39 // pred_check_branch
          %253 = sbr.rel (%p251) target = $region56
        $region55: #{basic_block_forward.1} parent=39 // pred_region
          %255 = dma.done [#allocation10], 64
        $region56: #{basic_block_forward.1} parent=39 // pred_fallthru
          _
        %p256 = scmp.lt.s32.totalorder %s19, 1
        %s257 = scalar_select %p256, %s19, 1
        %s258 = smul.addr %s257, 4
        %s259 = smul.addr %s258, 8
        %s260 = scalar_lea.vmem %s0, %s259
        %p261 = pneg %p40
        %p262 = pneg %p37
        %p263 = pneg %p61
        %p264 = pneg %p58
        %p265 = pneg %p82
        %p266 = pneg %p79
        %p267 = pneg %p103
        %p268 = pneg %p100
        %p269 = pneg %p124
        %p270 = pneg %p121
        %p271 = pneg %p150
        %p272 = pneg %p147
        %p273 = scmp.lt.s32.totalorder %s19, 1
        %s274 = scalar_select %p273, %s19, 1
        %s275 = smul.addr %s274, 4
        %s276 = smul.addr %s275, 8
        %s277 = scalar_lea.vmem %s5, %s276
        %p278 = scmp.lt.s32.totalorder %s19, 1
        %s279 = scalar_select %p278, %s19, 1
        %s280 = smul.addr %s279, 4
        %s281 = smul.addr %s280, 8
        %s282 = scalar_lea.vmem %s0, %s281
        %p283 = scmp.lt.s32.totalorder %s19, 1
        %s284 = scalar_select %p283, %s19, 1
        %s285 = smul.addr %s284, 4
        %s286 = smul.addr %s285, 8
        %s287 = scalar_lea.vmem %s5, %s286
        %v288 = vlaneseq
        %vm289 = vcmp.ge.s32.totalorder %v288, 0
        %vm290 = vcmp.lt.s32.totalorder %v288, 512
        %vm291 = vmand %vm289, %vm290
        %292 = vst.msk [vmem:[#allocation2] ss:$8 sm:$0xf] %vm291, 0.0
        %293 = vst.msk [vmem:[#allocation2] ss:$8 sm:$0x0] %vm291, 0.0
        %s294 = scalar_lea.vmem [#allocation2], 33
        %295 = vst.msk [vmem:[%s294] ss:$8 sm:$0xf] %vm291, 0.0
        %296 = vst.msk [vmem:[%s294] ss:$8 sm:$0x0] %vm291, 0.0
        %v297 = vld [vmem:[%s282] sm:$0xff]
        %v298 = vld [vmem:[%s282 + $0x8] sm:$0xff]
        %v299 = vld [vmem:[%s282 + $0x10] sm:$0xff]
        %v300 = vld [vmem:[%s282 + $0x18] sm:$0xff]
        %v305 = vrot.slane %v297, 7
        %v306 = vrot.slane %v298, 7
        %v307 = vrot.slane %v299, 7
        %v308 = vrot.slane %v300, 7
        %313 = vst [vmem:[#allocation2] sm:$0xfe] %v305
        %314 = vst [vmem:[#allocation2 + $0x8] sm:$0xfe] %v306
        %315 = vst [vmem:[#allocation2 + $0x10] sm:$0xfe] %v307
        %316 = vst [vmem:[#allocation2 + $0x18] sm:$0xfe] %v308
        %317 = vst [vmem:[#allocation2 + $0x20] sm:$0x1] %v305
        %318 = vst [vmem:[#allocation2 + $0x28] sm:$0x1] %v306
        %319 = vst [vmem:[#allocation2 + $0x30] sm:$0x1] %v307
        %320 = vst [vmem:[#allocation2 + $0x38] sm:$0x1] %v308
        %v321 = vld [vmem:[#allocation2] sm:$0xff]
        %v322 = vld [vmem:[#allocation2 + $0x8] sm:$0xff]
        %v323 = vld [vmem:[#allocation2 + $0x10] sm:$0xff]
        %v324 = vld [vmem:[#allocation2 + $0x18] sm:$0xff]
        %v325 = vld [vmem:[#allocation4] sm:$0xff]
        %v326 = vld [vmem:[#allocation4 + $0x8] sm:$0xff]
        %v327 = vld [vmem:[#allocation4 + $0x10] sm:$0xff]
        %v328 = vld [vmem:[#allocation4 + $0x18] sm:$0xff]
        %v329 = vld [vmem:[#allocation4 + $0x20] sm:$0xff]
        %v330 = vld [vmem:[#allocation4 + $0x28] sm:$0xff]
        %v331 = vld [vmem:[#allocation4 + $0x30] sm:$0xff]
        %v332 = vld [vmem:[#allocation4 + $0x38] sm:$0xff]
        %v333 = vld [vmem:[#allocation4 + $0x40] sm:$0xff]
        %v334 = vld [vmem:[#allocation4 + $0x48] sm:$0xff]
        %v335 = vld [vmem:[#allocation4 + $0x50] sm:$0xff]
        %v336 = vld [vmem:[#allocation4 + $0x58] sm:$0xff]
        %v337 = vld [vmem:[#allocation4 + $0x60] sm:$0xff]
        %v338 = vld [vmem:[#allocation4 + $0x68] sm:$0xff]
        %v339 = vld [vmem:[#allocation4 + $0x70] sm:$0xff]
        %v340 = vld [vmem:[#allocation4 + $0x78] sm:$0xff]
        %v341 = vld [vmem:[#allocation4 + $0x80] sm:$0xff]
        %v342 = vld [vmem:[#allocation4 + $0x88] sm:$0xff]
        %v343 = vld [vmem:[#allocation4 + $0x90] sm:$0xff]
        %v344 = vld [vmem:[#allocation4 + $0x98] sm:$0xff]
        %v345 = vld [vmem:[#allocation4 + $0xa0] sm:$0xff]
        %v346 = vld [vmem:[#allocation4 + $0xa8] sm:$0xff]
        %v347 = vld [vmem:[#allocation4 + $0xb0] sm:$0xff]
        %v348 = vld [vmem:[#allocation4 + $0xb8] sm:$0xff]
        %v349 = vld [vmem:[#allocation4 + $0xc0] sm:$0xff]
        %v350 = vld [vmem:[#allocation4 + $0xc8] sm:$0xff]
        %v351 = vld [vmem:[#allocation4 + $0xd0] sm:$0xff]
        %v352 = vld [vmem:[#allocation4 + $0xd8] sm:$0xff]
        %v353 = vld [vmem:[#allocation4 + $0xe0] sm:$0xff]
        %v354 = vld [vmem:[#allocation4 + $0xe8] sm:$0xff]
        %v355 = vld [vmem:[#allocation4 + $0xf0] sm:$0xff]
        %v356 = vld [vmem:[#allocation4 + $0xf8] sm:$0xff]
        %v357 = vld [vmem:[#allocation4 + $0x100] sm:$0xff]
        %v358 = vld [vmem:[#allocation4 + $0x108] sm:$0xff]
        %v359 = vld [vmem:[#allocation4 + $0x110] sm:$0xff]
        %v360 = vld [vmem:[#allocation4 + $0x118] sm:$0xff]
        %v361 = vld [vmem:[#allocation4 + $0x120] sm:$0xff]
        %v362 = vld [vmem:[#allocation4 + $0x128] sm:$0xff]
        %v363 = vld [vmem:[#allocation4 + $0x130] sm:$0xff]
        %v364 = vld [vmem:[#allocation4 + $0x138] sm:$0xff]
        %v365 = vld [vmem:[#allocation4 + $0x140] sm:$0xff]
        %v366 = vld [vmem:[#allocation4 + $0x148] sm:$0xff]
        %v367 = vld [vmem:[#allocation4 + $0x150] sm:$0xff]
        %v368 = vld [vmem:[#allocation4 + $0x158] sm:$0xff]
        %v369 = vld [vmem:[#allocation4 + $0x160] sm:$0xff]
        %v370 = vld [vmem:[#allocation4 + $0x168] sm:$0xff]
        %v371 = vld [vmem:[#allocation4 + $0x170] sm:$0xff]
        %v372 = vld [vmem:[#allocation4 + $0x178] sm:$0xff]
        %v373 = vld [vmem:[#allocation4 + $0x180] sm:$0xff]
        %v374 = vld [vmem:[#allocation4 + $0x188] sm:$0xff]
        %v375 = vld [vmem:[#allocation4 + $0x190] sm:$0xff]
        %v376 = vld [vmem:[#allocation4 + $0x198] sm:$0xff]
        %v377 = vld [vmem:[#allocation4 + $0x1a0] sm:$0xff]
        %v378 = vld [vmem:[#allocation4 + $0x1a8] sm:$0xff]
        %v379 = vld [vmem:[#allocation4 + $0x1b0] sm:$0xff]
        %v380 = vld [vmem:[#allocation4 + $0x1b8] sm:$0xff]
        %v381 = vld [vmem:[#allocation4 + $0x1c0] sm:$0xff]
        %v382 = vld [vmem:[#allocation4 + $0x1c8] sm:$0xff]
        %v383 = vld [vmem:[#allocation4 + $0x1d0] sm:$0xff]
        %v384 = vld [vmem:[#allocation4 + $0x1d8] sm:$0xff]
        %v385 = vld [vmem:[#allocation4 + $0x1e0] sm:$0xff]
        %v386 = vld [vmem:[#allocation4 + $0x1e8] sm:$0xff]
        %v387 = vld [vmem:[#allocation4 + $0x1f0] sm:$0xff]
        %v388 = vld [vmem:[#allocation4 + $0x1f8] sm:$0xff]
        %v389 = vld [vmem:[#allocation4 + $0x200] sm:$0xff]
        %v390 = vld [vmem:[#allocation4 + $0x208] sm:$0xff]
        %v391 = vld [vmem:[#allocation4 + $0x210] sm:$0xff]
        %v392 = vld [vmem:[#allocation4 + $0x218] sm:$0xff]
        %v393 = vld [vmem:[#allocation4 + $0x220] sm:$0xff]
        %v394 = vld [vmem:[#allocation4 + $0x228] sm:$0xff]
        %v395 = vld [vmem:[#allocation4 + $0x230] sm:$0xff]
        %v396 = vld [vmem:[#allocation4 + $0x238] sm:$0xff]
        %v397 = vld [vmem:[#allocation4 + $0x240] sm:$0xff]
        %v398 = vld [vmem:[#allocation4 + $0x248] sm:$0xff]
        %v399 = vld [vmem:[#allocation4 + $0x250] sm:$0xff]
        %v400 = vld [vmem:[#allocation4 + $0x258] sm:$0xff]
        %v401 = vld [vmem:[#allocation4 + $0x260] sm:$0xff]
        %v402 = vld [vmem:[#allocation4 + $0x268] sm:$0xff]
        %v403 = vld [vmem:[#allocation4 + $0x270] sm:$0xff]
        %v404 = vld [vmem:[#allocation4 + $0x278] sm:$0xff]
        %v405 = vld [vmem:[#allocation4 + $0x280] sm:$0xff]
        %v406 = vld [vmem:[#allocation4 + $0x288] sm:$0xff]
        %v407 = vld [vmem:[#allocation4 + $0x290] sm:$0xff]
        %v408 = vld [vmem:[#allocation4 + $0x298] sm:$0xff]
        %v409 = vld [vmem:[#allocation4 + $0x2a0] sm:$0xff]
        %v410 = vld [vmem:[#allocation4 + $0x2a8] sm:$0xff]
        %v411 = vld [vmem:[#allocation4 + $0x2b0] sm:$0xff]
        %v412 = vld [vmem:[#allocation4 + $0x2b8] sm:$0xff]
        %v413 = vld [vmem:[#allocation4 + $0x2c0] sm:$0xff]
        %v414 = vld [vmem:[#allocation4 + $0x2c8] sm:$0xff]
        %v415 = vld [vmem:[#allocation4 + $0x2d0] sm:$0xff]
        %v416 = vld [vmem:[#allocation4 + $0x2d8] sm:$0xff]
        %v417 = vld [vmem:[#allocation4 + $0x2e0] sm:$0xff]
        %v418 = vld [vmem:[#allocation4 + $0x2e8] sm:$0xff]
        %v419 = vld [vmem:[#allocation4 + $0x2f0] sm:$0xff]
        %v420 = vld [vmem:[#allocation4 + $0x2f8] sm:$0xff]
        %v421 = vld [vmem:[#allocation4 + $0x300] sm:$0xff]
        %v422 = vld [vmem:[#allocation4 + $0x308] sm:$0xff]
        %v423 = vld [vmem:[#allocation4 + $0x310] sm:$0xff]
        %v424 = vld [vmem:[#allocation4 + $0x318] sm:$0xff]
        %v425 = vld [vmem:[#allocation4 + $0x320] sm:$0xff]
        %v426 = vld [vmem:[#allocation4 + $0x328] sm:$0xff]
        %v427 = vld [vmem:[#allocation4 + $0x330] sm:$0xff]
        %v428 = vld [vmem:[#allocation4 + $0x338] sm:$0xff]
        %v429 = vld [vmem:[#allocation4 + $0x340] sm:$0xff]
        %v430 = vld [vmem:[#allocation4 + $0x348] sm:$0xff]
        %v431 = vld [vmem:[#allocation4 + $0x350] sm:$0xff]
        %v432 = vld [vmem:[#allocation4 + $0x358] sm:$0xff]
        %v433 = vld [vmem:[#allocation4 + $0x360] sm:$0xff]
        %v434 = vld [vmem:[#allocation4 + $0x368] sm:$0xff]
        %v435 = vld [vmem:[#allocation4 + $0x370] sm:$0xff]
        %v436 = vld [vmem:[#allocation4 + $0x378] sm:$0xff]
        %v437 = vld [vmem:[#allocation4 + $0x380] sm:$0xff]
        %v438 = vld [vmem:[#allocation4 + $0x388] sm:$0xff]
        %v439 = vld [vmem:[#allocation4 + $0x390] sm:$0xff]
        %v440 = vld [vmem:[#allocation4 + $0x398] sm:$0xff]
        %v441 = vld [vmem:[#allocation4 + $0x3a0] sm:$0xff]
        %v442 = vld [vmem:[#allocation4 + $0x3a8] sm:$0xff]
        %v443 = vld [vmem:[#allocation4 + $0x3b0] sm:$0xff]
        %v444 = vld [vmem:[#allocation4 + $0x3b8] sm:$0xff]
        %v445 = vld [vmem:[#allocation4 + $0x3c0] sm:$0xff]
        %v446 = vld [vmem:[#allocation4 + $0x3c8] sm:$0xff]
        %v447 = vld [vmem:[#allocation4 + $0x3d0] sm:$0xff]
        %v448 = vld [vmem:[#allocation4 + $0x3d8] sm:$0xff]
        %v449 = vld [vmem:[#allocation4 + $0x3e0] sm:$0xff]
        %v450 = vld [vmem:[#allocation4 + $0x3e8] sm:$0xff]
        %v451 = vld [vmem:[#allocation4 + $0x3f0] sm:$0xff]
        %v452 = vld [vmem:[#allocation4 + $0x3f8] sm:$0xff]
        %v453 = vld [vmem:[#allocation4 + $0x400] sm:$0xff]
        %v454 = vld [vmem:[#allocation4 + $0x408] sm:$0xff]
        %v455 = vld [vmem:[#allocation4 + $0x410] sm:$0xff]
        %v456 = vld [vmem:[#allocation4 + $0x418] sm:$0xff]
        %v457 = vld [vmem:[#allocation4 + $0x420] sm:$0xff]
        %v458 = vld [vmem:[#allocation4 + $0x428] sm:$0xff]
        %v459 = vld [vmem:[#allocation4 + $0x430] sm:$0xff]
        %v460 = vld [vmem:[#allocation4 + $0x438] sm:$0xff]
        %v461 = vld [vmem:[#allocation4 + $0x440] sm:$0xff]
        %v462 = vld [vmem:[#allocation4 + $0x448] sm:$0xff]
        %v463 = vld [vmem:[#allocation4 + $0x450] sm:$0xff]
        %v464 = vld [vmem:[#allocation4 + $0x458] sm:$0xff]
        %v465 = vld [vmem:[#allocation4 + $0x460] sm:$0xff]
        %v466 = vld [vmem:[#allocation4 + $0x468] sm:$0xff]
        %v467 = vld [vmem:[#allocation4 + $0x470] sm:$0xff]
        %v468 = vld [vmem:[#allocation4 + $0x478] sm:$0xff]
        %v469 = vld [vmem:[#allocation4 + $0x480] sm:$0xff]
        %v470 = vld [vmem:[#allocation4 + $0x488] sm:$0xff]
        %v471 = vld [vmem:[#allocation4 + $0x490] sm:$0xff]
        %v472 = vld [vmem:[#allocation4 + $0x498] sm:$0xff]
        %v473 = vld [vmem:[#allocation4 + $0x4a0] sm:$0xff]
        %v474 = vld [vmem:[#allocation4 + $0x4a8] sm:$0xff]
        %v475 = vld [vmem:[#allocation4 + $0x4b0] sm:$0xff]
        %v476 = vld [vmem:[#allocation4 + $0x4b8] sm:$0xff]
        %v477 = vld [vmem:[#allocation4 + $0x4c0] sm:$0xff]
        %v478 = vld [vmem:[#allocation4 + $0x4c8] sm:$0xff]
        %v479 = vld [vmem:[#allocation4 + $0x4d0] sm:$0xff]
        %v480 = vld [vmem:[#allocation4 + $0x4d8] sm:$0xff]
        %v481 = vld [vmem:[#allocation4 + $0x4e0] sm:$0xff]
        %v482 = vld [vmem:[#allocation4 + $0x4e8] sm:$0xff]
        %v483 = vld [vmem:[#allocation4 + $0x4f0] sm:$0xff]
        %v484 = vld [vmem:[#allocation4 + $0x4f8] sm:$0xff]
        %v485 = vld [vmem:[#allocation4 + $0x500] sm:$0xff]
        %v486 = vld [vmem:[#allocation4 + $0x508] sm:$0xff]
        %v487 = vld [vmem:[#allocation4 + $0x510] sm:$0xff]
        %v488 = vld [vmem:[#allocation4 + $0x518] sm:$0xff]
        %v489 = vld [vmem:[#allocation4 + $0x520] sm:$0xff]
        %v490 = vld [vmem:[#allocation4 + $0x528] sm:$0xff]
        %v491 = vld [vmem:[#allocation4 + $0x530] sm:$0xff]
        %v492 = vld [vmem:[#allocation4 + $0x538] sm:$0xff]
        %v493 = vld [vmem:[#allocation4 + $0x540] sm:$0xff]
        %v494 = vld [vmem:[#allocation4 + $0x548] sm:$0xff]
        %v495 = vld [vmem:[#allocation4 + $0x550] sm:$0xff]
        %v496 = vld [vmem:[#allocation4 + $0x558] sm:$0xff]
        %v497 = vld [vmem:[#allocation4 + $0x560] sm:$0xff]
        %v498 = vld [vmem:[#allocation4 + $0x568] sm:$0xff]
        %v499 = vld [vmem:[#allocation4 + $0x570] sm:$0xff]
        %v500 = vld [vmem:[#allocation4 + $0x578] sm:$0xff]
        %v501 = vld [vmem:[#allocation4 + $0x580] sm:$0xff]
        %v502 = vld [vmem:[#allocation4 + $0x588] sm:$0xff]
        %v503 = vld [vmem:[#allocation4 + $0x590] sm:$0xff]
        %v504 = vld [vmem:[#allocation4 + $0x598] sm:$0xff]
        %v505 = vld [vmem:[#allocation4 + $0x5a0] sm:$0xff]
        %v506 = vld [vmem:[#allocation4 + $0x5a8] sm:$0xff]
        %v507 = vld [vmem:[#allocation4 + $0x5b0] sm:$0xff]
        %v508 = vld [vmem:[#allocation4 + $0x5b8] sm:$0xff]
        %v509 = vld [vmem:[#allocation4 + $0x5c0] sm:$0xff]
        %v510 = vld [vmem:[#allocation4 + $0x5c8] sm:$0xff]
        %v511 = vld [vmem:[#allocation4 + $0x5d0] sm:$0xff]
        %v512 = vld [vmem:[#allocation4 + $0x5d8] sm:$0xff]
        %v513 = vld [vmem:[#allocation4 + $0x5e0] sm:$0xff]
        %v514 = vld [vmem:[#allocation4 + $0x5e8] sm:$0xff]
        %v515 = vld [vmem:[#allocation4 + $0x5f0] sm:$0xff]
        %v516 = vld [vmem:[#allocation4 + $0x5f8] sm:$0xff]
        %v517 = vld [vmem:[#allocation4 + $0x600] sm:$0xff]
        %v518 = vld [vmem:[#allocation4 + $0x608] sm:$0xff]
        %v519 = vld [vmem:[#allocation4 + $0x610] sm:$0xff]
        %v520 = vld [vmem:[#allocation4 + $0x618] sm:$0xff]
        %v521 = vld [vmem:[#allocation4 + $0x620] sm:$0xff]
        %v522 = vld [vmem:[#allocation4 + $0x628] sm:$0xff]
        %v523 = vld [vmem:[#allocation4 + $0x630] sm:$0xff]
        %v524 = vld [vmem:[#allocation4 + $0x638] sm:$0xff]
        %v525 = vld [vmem:[#allocation4 + $0x640] sm:$0xff]
        %v526 = vld [vmem:[#allocation4 + $0x648] sm:$0xff]
        %v527 = vld [vmem:[#allocation4 + $0x650] sm:$0xff]
        %v528 = vld [vmem:[#allocation4 + $0x658] sm:$0xff]
        %v529 = vld [vmem:[#allocation4 + $0x660] sm:$0xff]
        %v530 = vld [vmem:[#allocation4 + $0x668] sm:$0xff]
        %v531 = vld [vmem:[#allocation4 + $0x670] sm:$0xff]
        %v532 = vld [vmem:[#allocation4 + $0x678] sm:$0xff]
        %v533 = vld [vmem:[#allocation4 + $0x680] sm:$0xff]
        %v534 = vld [vmem:[#allocation4 + $0x688] sm:$0xff]
        %v535 = vld [vmem:[#allocation4 + $0x690] sm:$0xff]
        %v536 = vld [vmem:[#allocation4 + $0x698] sm:$0xff]
        %v537 = vld [vmem:[#allocation4 + $0x6a0] sm:$0xff]
        %v538 = vld [vmem:[#allocation4 + $0x6a8] sm:$0xff]
        %v539 = vld [vmem:[#allocation4 + $0x6b0] sm:$0xff]
        %v540 = vld [vmem:[#allocation4 + $0x6b8] sm:$0xff]
        %v541 = vld [vmem:[#allocation4 + $0x6c0] sm:$0xff]
        %v542 = vld [vmem:[#allocation4 + $0x6c8] sm:$0xff]
        %v543 = vld [vmem:[#allocation4 + $0x6d0] sm:$0xff]
        %v544 = vld [vmem:[#allocation4 + $0x6d8] sm:$0xff]
        %v545 = vld [vmem:[#allocation4 + $0x6e0] sm:$0xff]
        %v546 = vld [vmem:[#allocation4 + $0x6e8] sm:$0xff]
        %v547 = vld [vmem:[#allocation4 + $0x6f0] sm:$0xff]
        %v548 = vld [vmem:[#allocation4 + $0x6f8] sm:$0xff]
        %v549 = vld [vmem:[#allocation4 + $0x700] sm:$0xff]
        %v550 = vld [vmem:[#allocation4 + $0x708] sm:$0xff]
        %v551 = vld [vmem:[#allocation4 + $0x710] sm:$0xff]
        %v552 = vld [vmem:[#allocation4 + $0x718] sm:$0xff]
        %v553 = vld [vmem:[#allocation4 + $0x720] sm:$0xff]
        %v554 = vld [vmem:[#allocation4 + $0x728] sm:$0xff]
        %v555 = vld [vmem:[#allocation4 + $0x730] sm:$0xff]
        %v556 = vld [vmem:[#allocation4 + $0x738] sm:$0xff]
        %v557 = vld [vmem:[#allocation4 + $0x740] sm:$0xff]
        %v558 = vld [vmem:[#allocation4 + $0x748] sm:$0xff]
        %v559 = vld [vmem:[#allocation4 + $0x750] sm:$0xff]
        %v560 = vld [vmem:[#allocation4 + $0x758] sm:$0xff]
        %v561 = vld [vmem:[#allocation4 + $0x760] sm:$0xff]
        %v562 = vld [vmem:[#allocation4 + $0x768] sm:$0xff]
        %v563 = vld [vmem:[#allocation4 + $0x770] sm:$0xff]
        %v564 = vld [vmem:[#allocation4 + $0x778] sm:$0xff]
        %v565 = vld [vmem:[#allocation4 + $0x780] sm:$0xff]
        %v566 = vld [vmem:[#allocation4 + $0x788] sm:$0xff]
        %v567 = vld [vmem:[#allocation4 + $0x790] sm:$0xff]
        %v568 = vld [vmem:[#allocation4 + $0x798] sm:$0xff]
        %v569 = vld [vmem:[#allocation4 + $0x7a0] sm:$0xff]
        %v570 = vld [vmem:[#allocation4 + $0x7a8] sm:$0xff]
        %v571 = vld [vmem:[#allocation4 + $0x7b0] sm:$0xff]
        %v572 = vld [vmem:[#allocation4 + $0x7b8] sm:$0xff]
        %v573 = vld [vmem:[#allocation4 + $0x7c0] sm:$0xff]
        %v574 = vld [vmem:[#allocation4 + $0x7c8] sm:$0xff]
        %v575 = vld [vmem:[#allocation4 + $0x7d0] sm:$0xff]
        %v576 = vld [vmem:[#allocation4 + $0x7d8] sm:$0xff]
        %v577 = vld [vmem:[#allocation4 + $0x7e0] sm:$0xff]
        %v578 = vld [vmem:[#allocation4 + $0x7e8] sm:$0xff]
        %v579 = vld [vmem:[#allocation4 + $0x7f0] sm:$0xff]
        %v580 = vld [vmem:[#allocation4 + $0x7f8] sm:$0xff]
        %v581 = vld [vmem:[#allocation2] sm:$0xfe]
        %v582 = vld [vmem:[#allocation2 + $0x8] sm:$0xfe]
        %v583 = vld [vmem:[#allocation2 + $0x10] sm:$0xfe]
        %v584 = vld [vmem:[#allocation2 + $0x18] sm:$0xfe]
        %v585 = vld [vmem:[#allocation2 + $0x20] sm:$0x1]
        %v586 = vld [vmem:[#allocation2 + $0x28] sm:$0x1]
        %v587 = vld [vmem:[#allocation2 + $0x30] sm:$0x1]
        %v588 = vld [vmem:[#allocation2 + $0x38] sm:$0x1]
        %s589 = scalar_lea.vmem [#allocation4], 2048
        %v590 = vld [vmem:[%s589] sm:$0xff]
        %v591 = vld [vmem:[%s589 + $0x8] sm:$0xff]
        %v592 = vld [vmem:[%s589 + $0x10] sm:$0xff]
        %v593 = vld [vmem:[%s589 + $0x18] sm:$0xff]
        %v594 = vld [vmem:[%s589 + $0x20] sm:$0xff]
        %v595 = vld [vmem:[%s589 + $0x28] sm:$0xff]
        %v596 = vld [vmem:[%s589 + $0x30] sm:$0xff]
        %v597 = vld [vmem:[%s589 + $0x38] sm:$0xff]
        %v598 = vld [vmem:[%s589 + $0x40] sm:$0xff]
        %v599 = vld [vmem:[%s589 + $0x48] sm:$0xff]
        %v600 = vld [vmem:[%s589 + $0x50] sm:$0xff]
        %v601 = vld [vmem:[%s589 + $0x58] sm:$0xff]
        %v602 = vld [vmem:[%s589 + $0x60] sm:$0xff]
        %v603 = vld [vmem:[%s589 + $0x68] sm:$0xff]
        %v604 = vld [vmem:[%s589 + $0x70] sm:$0xff]
        %v605 = vld [vmem:[%s589 + $0x78] sm:$0xff]
        %v606 = vld [vmem:[%s589 + $0x80] sm:$0xff]
        %v607 = vld [vmem:[%s589 + $0x88] sm:$0xff]
        %v608 = vld [vmem:[%s589 + $0x90] sm:$0xff]
        %v609 = vld [vmem:[%s589 + $0x98] sm:$0xff]
        %v610 = vld [vmem:[%s589 + $0xa0] sm:$0xff]
        %v611 = vld [vmem:[%s589 + $0xa8] sm:$0xff]
        %v612 = vld [vmem:[%s589 + $0xb0] sm:$0xff]
        %v613 = vld [vmem:[%s589 + $0xb8] sm:$0xff]
        %v614 = vld [vmem:[%s589 + $0xc0] sm:$0xff]
        %v615 = vld [vmem:[%s589 + $0xc8] sm:$0xff]
        %v616 = vld [vmem:[%s589 + $0xd0] sm:$0xff]
        %v617 = vld [vmem:[%s589 + $0xd8] sm:$0xff]
        %v618 = vld [vmem:[%s589 + $0xe0] sm:$0xff]
        %v619 = vld [vmem:[%s589 + $0xe8] sm:$0xff]
        %v620 = vld [vmem:[%s589 + $0xf0] sm:$0xff]
        %v621 = vld [vmem:[%s589 + $0xf8] sm:$0xff]
        %v622 = vld [vmem:[%s589 + $0x100] sm:$0xff]
        %v623 = vld [vmem:[%s589 + $0x108] sm:$0xff]
        %v624 = vld [vmem:[%s589 + $0x110] sm:$0xff]
        %v625 = vld [vmem:[%s589 + $0x118] sm:$0xff]
        %v626 = vld [vmem:[%s589 + $0x120] sm:$0xff]
        %v627 = vld [vmem:[%s589 + $0x128] sm:$0xff]
        %v628 = vld [vmem:[%s589 + $0x130] sm:$0xff]
        %v629 = vld [vmem:[%s589 + $0x138] sm:$0xff]
        %v630 = vld [vmem:[%s589 + $0x140] sm:$0xff]
        %v631 = vld [vmem:[%s589 + $0x148] sm:$0xff]
        %v632 = vld [vmem:[%s589 + $0x150] sm:$0xff]
        %v633 = vld [vmem:[%s589 + $0x158] sm:$0xff]
        %v634 = vld [vmem:[%s589 + $0x160] sm:$0xff]
        %v635 = vld [vmem:[%s589 + $0x168] sm:$0xff]
        %v636 = vld [vmem:[%s589 + $0x170] sm:$0xff]
        %v637 = vld [vmem:[%s589 + $0x178] sm:$0xff]
        %v638 = vld [vmem:[%s589 + $0x180] sm:$0xff]
        %v639 = vld [vmem:[%s589 + $0x188] sm:$0xff]
        %v640 = vld [vmem:[%s589 + $0x190] sm:$0xff]
        %v641 = vld [vmem:[%s589 + $0x198] sm:$0xff]
        %v642 = vld [vmem:[%s589 + $0x1a0] sm:$0xff]
        %v643 = vld [vmem:[%s589 + $0x1a8] sm:$0xff]
        %v644 = vld [vmem:[%s589 + $0x1b0] sm:$0xff]
        %v645 = vld [vmem:[%s589 + $0x1b8] sm:$0xff]
        %v646 = vld [vmem:[%s589 + $0x1c0] sm:$0xff]
        %v647 = vld [vmem:[%s589 + $0x1c8] sm:$0xff]
        %v648 = vld [vmem:[%s589 + $0x1d0] sm:$0xff]
        %v649 = vld [vmem:[%s589 + $0x1d8] sm:$0xff]
        %v650 = vld [vmem:[%s589 + $0x1e0] sm:$0xff]
        %v651 = vld [vmem:[%s589 + $0x1e8] sm:$0xff]
        %v652 = vld [vmem:[%s589 + $0x1f0] sm:$0xff]
        %v653 = vld [vmem:[%s589 + $0x1f8] sm:$0xff]
        %v654 = vld [vmem:[%s589 + $0x200] sm:$0xff]
        %v655 = vld [vmem:[%s589 + $0x208] sm:$0xff]
        %v656 = vld [vmem:[%s589 + $0x210] sm:$0xff]
        %v657 = vld [vmem:[%s589 + $0x218] sm:$0xff]
        %v658 = vld [vmem:[%s589 + $0x220] sm:$0xff]
        %v659 = vld [vmem:[%s589 + $0x228] sm:$0xff]
        %v660 = vld [vmem:[%s589 + $0x230] sm:$0xff]
        %v661 = vld [vmem:[%s589 + $0x238] sm:$0xff]
        %v662 = vld [vmem:[%s589 + $0x240] sm:$0xff]
        %v663 = vld [vmem:[%s589 + $0x248] sm:$0xff]
        %v664 = vld [vmem:[%s589 + $0x250] sm:$0xff]
        %v665 = vld [vmem:[%s589 + $0x258] sm:$0xff]
        %v666 = vld [vmem:[%s589 + $0x260] sm:$0xff]
        %v667 = vld [vmem:[%s589 + $0x268] sm:$0xff]
        %v668 = vld [vmem:[%s589 + $0x270] sm:$0xff]
        %v669 = vld [vmem:[%s589 + $0x278] sm:$0xff]
        %v670 = vld [vmem:[%s589 + $0x280] sm:$0xff]
        %v671 = vld [vmem:[%s589 + $0x288] sm:$0xff]
        %v672 = vld [vmem:[%s589 + $0x290] sm:$0xff]
        %v673 = vld [vmem:[%s589 + $0x298] sm:$0xff]
        %v674 = vld [vmem:[%s589 + $0x2a0] sm:$0xff]
        %v675 = vld [vmem:[%s589 + $0x2a8] sm:$0xff]
        %v676 = vld [vmem:[%s589 + $0x2b0] sm:$0xff]
        %v677 = vld [vmem:[%s589 + $0x2b8] sm:$0xff]
        %v678 = vld [vmem:[%s589 + $0x2c0] sm:$0xff]
        %v679 = vld [vmem:[%s589 + $0x2c8] sm:$0xff]
        %v680 = vld [vmem:[%s589 + $0x2d0] sm:$0xff]
        %v681 = vld [vmem:[%s589 + $0x2d8] sm:$0xff]
        %v682 = vld [vmem:[%s589 + $0x2e0] sm:$0xff]
        %v683 = vld [vmem:[%s589 + $0x2e8] sm:$0xff]
        %v684 = vld [vmem:[%s589 + $0x2f0] sm:$0xff]
        %v685 = vld [vmem:[%s589 + $0x2f8] sm:$0xff]
        %v686 = vld [vmem:[%s589 + $0x300] sm:$0xff]
        %v687 = vld [vmem:[%s589 + $0x308] sm:$0xff]
        %v688 = vld [vmem:[%s589 + $0x310] sm:$0xff]
        %v689 = vld [vmem:[%s589 + $0x318] sm:$0xff]
        %v690 = vld [vmem:[%s589 + $0x320] sm:$0xff]
        %v691 = vld [vmem:[%s589 + $0x328] sm:$0xff]
        %v692 = vld [vmem:[%s589 + $0x330] sm:$0xff]
        %v693 = vld [vmem:[%s589 + $0x338] sm:$0xff]
        %v694 = vld [vmem:[%s589 + $0x340] sm:$0xff]
        %v695 = vld [vmem:[%s589 + $0x348] sm:$0xff]
        %v696 = vld [vmem:[%s589 + $0x350] sm:$0xff]
        %v697 = vld [vmem:[%s589 + $0x358] sm:$0xff]
        %v698 = vld [vmem:[%s589 + $0x360] sm:$0xff]
        %v699 = vld [vmem:[%s589 + $0x368] sm:$0xff]
        %v700 = vld [vmem:[%s589 + $0x370] sm:$0xff]
        %v701 = vld [vmem:[%s589 + $0x378] sm:$0xff]
        %v702 = vld [vmem:[%s589 + $0x380] sm:$0xff]
        %v703 = vld [vmem:[%s589 + $0x388] sm:$0xff]
        %v704 = vld [vmem:[%s589 + $0x390] sm:$0xff]
        %v705 = vld [vmem:[%s589 + $0x398] sm:$0xff]
        %v706 = vld [vmem:[%s589 + $0x3a0] sm:$0xff]
        %v707 = vld [vmem:[%s589 + $0x3a8] sm:$0xff]
        %v708 = vld [vmem:[%s589 + $0x3b0] sm:$0xff]
        %v709 = vld [vmem:[%s589 + $0x3b8] sm:$0xff]
        %v710 = vld [vmem:[%s589 + $0x3c0] sm:$0xff]
        %v711 = vld [vmem:[%s589 + $0x3c8] sm:$0xff]
        %v712 = vld [vmem:[%s589 + $0x3d0] sm:$0xff]
        %v713 = vld [vmem:[%s589 + $0x3d8] sm:$0xff]
        %v714 = vld [vmem:[%s589 + $0x3e0] sm:$0xff]
        %v715 = vld [vmem:[%s589 + $0x3e8] sm:$0xff]
        %v716 = vld [vmem:[%s589 + $0x3f0] sm:$0xff]
        %v717 = vld [vmem:[%s589 + $0x3f8] sm:$0xff]
        %v718 = vld [vmem:[%s589 + $0x400] sm:$0xff]
        %v719 = vld [vmem:[%s589 + $0x408] sm:$0xff]
        %v720 = vld [vmem:[%s589 + $0x410] sm:$0xff]
        %v721 = vld [vmem:[%s589 + $0x418] sm:$0xff]
        %v722 = vld [vmem:[%s589 + $0x420] sm:$0xff]
        %v723 = vld [vmem:[%s589 + $0x428] sm:$0xff]
        %v724 = vld [vmem:[%s589 + $0x430] sm:$0xff]
        %v725 = vld [vmem:[%s589 + $0x438] sm:$0xff]
        %v726 = vld [vmem:[%s589 + $0x440] sm:$0xff]
        %v727 = vld [vmem:[%s589 + $0x448] sm:$0xff]
        %v728 = vld [vmem:[%s589 + $0x450] sm:$0xff]
        %v729 = vld [vmem:[%s589 + $0x458] sm:$0xff]
        %v730 = vld [vmem:[%s589 + $0x460] sm:$0xff]
        %v731 = vld [vmem:[%s589 + $0x468] sm:$0xff]
        %v732 = vld [vmem:[%s589 + $0x470] sm:$0xff]
        %v733 = vld [vmem:[%s589 + $0x478] sm:$0xff]
        %v734 = vld [vmem:[%s589 + $0x480] sm:$0xff]
        %v735 = vld [vmem:[%s589 + $0x488] sm:$0xff]
        %v736 = vld [vmem:[%s589 + $0x490] sm:$0xff]
        %v737 = vld [vmem:[%s589 + $0x498] sm:$0xff]
        %v738 = vld [vmem:[%s589 + $0x4a0] sm:$0xff]
        %v739 = vld [vmem:[%s589 + $0x4a8] sm:$0xff]
        %v740 = vld [vmem:[%s589 + $0x4b0] sm:$0xff]
        %v741 = vld [vmem:[%s589 + $0x4b8] sm:$0xff]
        %v742 = vld [vmem:[%s589 + $0x4c0] sm:$0xff]
        %v743 = vld [vmem:[%s589 + $0x4c8] sm:$0xff]
        %v744 = vld [vmem:[%s589 + $0x4d0] sm:$0xff]
        %v745 = vld [vmem:[%s589 + $0x4d8] sm:$0xff]
        %v746 = vld [vmem:[%s589 + $0x4e0] sm:$0xff]
        %v747 = vld [vmem:[%s589 + $0x4e8] sm:$0xff]
        %v748 = vld [vmem:[%s589 + $0x4f0] sm:$0xff]
        %v749 = vld [vmem:[%s589 + $0x4f8] sm:$0xff]
        %v750 = vld [vmem:[%s589 + $0x500] sm:$0xff]
        %v751 = vld [vmem:[%s589 + $0x508] sm:$0xff]
        %v752 = vld [vmem:[%s589 + $0x510] sm:$0xff]
        %v753 = vld [vmem:[%s589 + $0x518] sm:$0xff]
        %v754 = vld [vmem:[%s589 + $0x520] sm:$0xff]
        %v755 = vld [vmem:[%s589 + $0x528] sm:$0xff]
        %v756 = vld [vmem:[%s589 + $0x530] sm:$0xff]
        %v757 = vld [vmem:[%s589 + $0x538] sm:$0xff]
        %v758 = vld [vmem:[%s589 + $0x540] sm:$0xff]
        %v759 = vld [vmem:[%s589 + $0x548] sm:$0xff]
        %v760 = vld [vmem:[%s589 + $0x550] sm:$0xff]
        %v761 = vld [vmem:[%s589 + $0x558] sm:$0xff]
        %v762 = vld [vmem:[%s589 + $0x560] sm:$0xff]
        %v763 = vld [vmem:[%s589 + $0x568] sm:$0xff]
        %v764 = vld [vmem:[%s589 + $0x570] sm:$0xff]
        %v765 = vld [vmem:[%s589 + $0x578] sm:$0xff]
        %v766 = vld [vmem:[%s589 + $0x580] sm:$0xff]
        %v767 = vld [vmem:[%s589 + $0x588] sm:$0xff]
        %v768 = vld [vmem:[%s589 + $0x590] sm:$0xff]
        %v769 = vld [vmem:[%s589 + $0x598] sm:$0xff]
        %v770 = vld [vmem:[%s589 + $0x5a0] sm:$0xff]
        %v771 = vld [vmem:[%s589 + $0x5a8] sm:$0xff]
        %v772 = vld [vmem:[%s589 + $0x5b0] sm:$0xff]
        %v773 = vld [vmem:[%s589 + $0x5b8] sm:$0xff]
        %v774 = vld [vmem:[%s589 + $0x5c0] sm:$0xff]
        %v775 = vld [vmem:[%s589 + $0x5c8] sm:$0xff]
        %v776 = vld [vmem:[%s589 + $0x5d0] sm:$0xff]
        %v777 = vld [vmem:[%s589 + $0x5d8] sm:$0xff]
        %v778 = vld [vmem:[%s589 + $0x5e0] sm:$0xff]
        %v779 = vld [vmem:[%s589 + $0x5e8] sm:$0xff]
        %v780 = vld [vmem:[%s589 + $0x5f0] sm:$0xff]
        %v781 = vld [vmem:[%s589 + $0x5f8] sm:$0xff]
        %v782 = vld [vmem:[%s589 + $0x600] sm:$0xff]
        %v783 = vld [vmem:[%s589 + $0x608] sm:$0xff]
        %v784 = vld [vmem:[%s589 + $0x610] sm:$0xff]
        %v785 = vld [vmem:[%s589 + $0x618] sm:$0xff]
        %v786 = vld [vmem:[%s589 + $0x620] sm:$0xff]
        %v787 = vld [vmem:[%s589 + $0x628] sm:$0xff]
        %v788 = vld [vmem:[%s589 + $0x630] sm:$0xff]
        %v789 = vld [vmem:[%s589 + $0x638] sm:$0xff]
        %v790 = vld [vmem:[%s589 + $0x640] sm:$0xff]
        %v791 = vld [vmem:[%s589 + $0x648] sm:$0xff]
        %v792 = vld [vmem:[%s589 + $0x650] sm:$0xff]
        %v793 = vld [vmem:[%s589 + $0x658] sm:$0xff]
        %v794 = vld [vmem:[%s589 + $0x660] sm:$0xff]
        %v795 = vld [vmem:[%s589 + $0x668] sm:$0xff]
        %v796 = vld [vmem:[%s589 + $0x670] sm:$0xff]
        %v797 = vld [vmem:[%s589 + $0x678] sm:$0xff]
        %v798 = vld [vmem:[%s589 + $0x680] sm:$0xff]
        %v799 = vld [vmem:[%s589 + $0x688] sm:$0xff]
        %v800 = vld [vmem:[%s589 + $0x690] sm:$0xff]
        %v801 = vld [vmem:[%s589 + $0x698] sm:$0xff]
        %v802 = vld [vmem:[%s589 + $0x6a0] sm:$0xff]
        %v803 = vld [vmem:[%s589 + $0x6a8] sm:$0xff]
        %v804 = vld [vmem:[%s589 + $0x6b0] sm:$0xff]
        %v805 = vld [vmem:[%s589 + $0x6b8] sm:$0xff]
        %v806 = vld [vmem:[%s589 + $0x6c0] sm:$0xff]
        %v807 = vld [vmem:[%s589 + $0x6c8] sm:$0xff]
        %v808 = vld [vmem:[%s589 + $0x6d0] sm:$0xff]
        %v809 = vld [vmem:[%s589 + $0x6d8] sm:$0xff]
        %v810 = vld [vmem:[%s589 + $0x6e0] sm:$0xff]
        %v811 = vld [vmem:[%s589 + $0x6e8] sm:$0xff]
        %v812 = vld [vmem:[%s589 + $0x6f0] sm:$0xff]
        %v813 = vld [vmem:[%s589 + $0x6f8] sm:$0xff]
        %v814 = vld [vmem:[%s589 + $0x700] sm:$0xff]
        %v815 = vld [vmem:[%s589 + $0x708] sm:$0xff]
        %v816 = vld [vmem:[%s589 + $0x710] sm:$0xff]
        %v817 = vld [vmem:[%s589 + $0x718] sm:$0xff]
        %v818 = vld [vmem:[%s589 + $0x720] sm:$0xff]
        %v819 = vld [vmem:[%s589 + $0x728] sm:$0xff]
        %v820 = vld [vmem:[%s589 + $0x730] sm:$0xff]
        %v821 = vld [vmem:[%s589 + $0x738] sm:$0xff]
        %v822 = vld [vmem:[%s589 + $0x740] sm:$0xff]
        %v823 = vld [vmem:[%s589 + $0x748] sm:$0xff]
        %v824 = vld [vmem:[%s589 + $0x750] sm:$0xff]
        %v825 = vld [vmem:[%s589 + $0x758] sm:$0xff]
        %v826 = vld [vmem:[%s589 + $0x760] sm:$0xff]
        %v827 = vld [vmem:[%s589 + $0x768] sm:$0xff]
        %v828 = vld [vmem:[%s589 + $0x770] sm:$0xff]
        %v829 = vld [vmem:[%s589 + $0x778] sm:$0xff]
        %v830 = vld [vmem:[%s589 + $0x780] sm:$0xff]
        %v831 = vld [vmem:[%s589 + $0x788] sm:$0xff]
        %v832 = vld [vmem:[%s589 + $0x790] sm:$0xff]
        %v833 = vld [vmem:[%s589 + $0x798] sm:$0xff]
        %v834 = vld [vmem:[%s589 + $0x7a0] sm:$0xff]
        %v835 = vld [vmem:[%s589 + $0x7a8] sm:$0xff]
        %v836 = vld [vmem:[%s589 + $0x7b0] sm:$0xff]
        %v837 = vld [vmem:[%s589 + $0x7b8] sm:$0xff]
        %v838 = vld [vmem:[%s589 + $0x7c0] sm:$0xff]
        %v839 = vld [vmem:[%s589 + $0x7c8] sm:$0xff]
        %v840 = vld [vmem:[%s589 + $0x7d0] sm:$0xff]
        %v841 = vld [vmem:[%s589 + $0x7d8] sm:$0xff]
        %v842 = vld [vmem:[%s589 + $0x7e0] sm:$0xff]
        %v843 = vld [vmem:[%s589 + $0x7e8] sm:$0xff]
        %v844 = vld [vmem:[%s589 + $0x7f0] sm:$0xff]
        %v845 = vld [vmem:[%s589 + $0x7f8] sm:$0xff]
        %vm854 = vcmask 1046528
        %v855 = vrot.slane %v581, 1
        %v856 = vrot.slane %v585, 1
        %v857 = vsel %vm854, %v855, %v856
        %v858 = vrot.slane %v582, 1
        %v859 = vrot.slane %v586, 1
        %v860 = vsel %vm854, %v858, %v859
        %v861 = vrot.slane %v583, 1
        %v862 = vrot.slane %v587, 1
        %v863 = vsel %vm854, %v861, %v862
        %v864 = vrot.slane %v584, 1
        %v865 = vrot.slane %v588, 1
        %v866 = vsel %vm854, %v864, %v865
        %871 = vmatpush.msra.mxu0 %v650
        %872 = vmatpush.msra.mxu0 %v646
        %873 = vmatpush.msra.mxu0 %v642
        %874 = vmatpush.msra.mxu0 %v638
        %875 = vmatpush.msra.mxu0 %v634
        %876 = vmatpush.msra.mxu0 %v630
        %877 = vmatpush.msra.mxu0 %v626
        %878 = vmatpush.msra.mxu0 %v622
        %879 = vmatpush.msra.mxu0 %v618
        %880 = vmatpush.msra.mxu0 %v614
        %881 = vmatpush.msra.mxu0 %v610
        %882 = vmatpush.msra.mxu0 %v606
        %883 = vmatpush.msra.mxu0 %v602
        %884 = vmatpush.msra.mxu0 %v598
        %885 = vmatpush.msra.mxu0 %v594
        %886 = vmatpush.msra.mxu0 %v590
        %887 = vmatmul.f32.gmra.mxu0 %v857
        %v888 = vpop.f32.mrf.mxu0
        %v889 = vadd.f32 0.0, %v888
        %890 = vdwg.mxu0
        %891 = vmatpush.msra.mxu0 %v714
        %892 = vmatpush.msra.mxu0 %v710
        %893 = vmatpush.msra.mxu0 %v706
        %894 = vmatpush.msra.mxu0 %v702
        %895 = vmatpush.msra.mxu0 %v698
        %896 = vmatpush.msra.mxu0 %v694
        %897 = vmatpush.msra.mxu0 %v690
        %898 = vmatpush.msra.mxu0 %v686
        %899 = vmatpush.msra.mxu0 %v682
        %900 = vmatpush.msra.mxu0 %v678
        %901 = vmatpush.msra.mxu0 %v674
        %902 = vmatpush.msra.mxu0 %v670
        %903 = vmatpush.msra.mxu0 %v666
        %904 = vmatpush.msra.mxu0 %v662
        %905 = vmatpush.msra.mxu0 %v658
        %906 = vmatpush.msra.mxu0 %v654
        %907 = vmatmul.f32.gmra.mxu0 %v860
        %v908 = vpop.f32.mrf.mxu0
        %v909 = vadd.f32 %v889, %v908
        %910 = vdwg.mxu0
        %911 = vmatpush.msra.mxu0 %v778
        %912 = vmatpush.msra.mxu0 %v774
        %913 = vmatpush.msra.mxu0 %v770
        %914 = vmatpush.msra.mxu0 %v766
        %915 = vmatpush.msra.mxu0 %v762
        %916 = vmatpush.msra.mxu0 %v758
        %917 = vmatpush.msra.mxu0 %v754
        %918 = vmatpush.msra.mxu0 %v750
        %919 = vmatpush.msra.mxu0 %v746
        %920 = vmatpush.msra.mxu0 %v742
        %921 = vmatpush.msra.mxu0 %v738
        %922 = vmatpush.msra.mxu0 %v734
        %923 = vmatpush.msra.mxu0 %v730
        %924 = vmatpush.msra.mxu0 %v726
        %925 = vmatpush.msra.mxu0 %v722
        %926 = vmatpush.msra.mxu0 %v718
        %927 = vmatmul.f32.gmra.mxu0 %v863
        %v928 = vpop.f32.mrf.mxu0
        %v929 = vadd.f32 %v909, %v928
        %930 = vdwg.mxu0
        %931 = vmatpush.msra.mxu0 %v842
        %932 = vmatpush.msra.mxu0 %v838
        %933 = vmatpush.msra.mxu0 %v834
        %934 = vmatpush.msra.mxu0 %v830
        %935 = vmatpush.msra.mxu0 %v826
        %936 = vmatpush.msra.mxu0 %v822
        %937 = vmatpush.msra.mxu0 %v818
        %938 = vmatpush.msra.mxu0 %v814
        %939 = vmatpush.msra.mxu0 %v810
        %940 = vmatpush.msra.mxu0 %v806
        %941 = vmatpush.msra.mxu0 %v802
        %942 = vmatpush.msra.mxu0 %v798
        %943 = vmatpush.msra.mxu0 %v794
        %944 = vmatpush.msra.mxu0 %v790
        %945 = vmatpush.msra.mxu0 %v786
        %946 = vmatpush.msra.mxu0 %v782
        %947 = vmatmul.f32.gmra.mxu0 %v866
        %v948 = vpop.f32.mrf.mxu0
        %v949 = vadd.f32 %v929, %v948
        %950 = vdwg.mxu0
        %951 = vmatpush.msra.mxu0 %v651
        %952 = vmatpush.msra.mxu0 %v647
        %953 = vmatpush.msra.mxu0 %v643
        %954 = vmatpush.msra.mxu0 %v639
        %955 = vmatpush.msra.mxu0 %v635
        %956 = vmatpush.msra.mxu0 %v631
        %957 = vmatpush.msra.mxu0 %v627
        %958 = vmatpush.msra.mxu0 %v623
        %959 = vmatpush.msra.mxu0 %v619
        %960 = vmatpush.msra.mxu0 %v615
        %961 = vmatpush.msra.mxu0 %v611
        %962 = vmatpush.msra.mxu0 %v607
        %963 = vmatpush.msra.mxu0 %v603
        %964 = vmatpush.msra.mxu0 %v599
        %965 = vmatpush.msra.mxu0 %v595
        %966 = vmatpush.msra.mxu0 %v591
        %967 = vmatmul.f32.gmra.mxu0 %v857
        %v968 = vpop.f32.mrf.mxu0
        %v969 = vadd.f32 0.0, %v968
        %970 = vdwg.mxu0
        %971 = vmatpush.msra.mxu0 %v715
        %972 = vmatpush.msra.mxu0 %v711
        %973 = vmatpush.msra.mxu0 %v707
        %974 = vmatpush.msra.mxu0 %v703
        %975 = vmatpush.msra.mxu0 %v699
        %976 = vmatpush.msra.mxu0 %v695
        %977 = vmatpush.msra.mxu0 %v691
        %978 = vmatpush.msra.mxu0 %v687
        %979 = vmatpush.msra.mxu0 %v683
        %980 = vmatpush.msra.mxu0 %v679
        %981 = vmatpush.msra.mxu0 %v675
        %982 = vmatpush.msra.mxu0 %v671
        %983 = vmatpush.msra.mxu0 %v667
        %984 = vmatpush.msra.mxu0 %v663
        %985 = vmatpush.msra.mxu0 %v659
        %986 = vmatpush.msra.mxu0 %v655
        %987 = vmatmul.f32.gmra.mxu0 %v860
        %v988 = vpop.f32.mrf.mxu0
        %v989 = vadd.f32 %v969, %v988
        %990 = vdwg.mxu0
        %991 = vmatpush.msra.mxu0 %v779
        %992 = vmatpush.msra.mxu0 %v775
        %993 = vmatpush.msra.mxu0 %v771
        %994 = vmatpush.msra.mxu0 %v767
        %995 = vmatpush.msra.mxu0 %v763
        %996 = vmatpush.msra.mxu0 %v759
        %997 = vmatpush.msra.mxu0 %v755
        %998 = vmatpush.msra.mxu0 %v751
        %999 = vmatpush.msra.mxu0 %v747
        %1000 = vmatpush.msra.mxu0 %v743
        %1001 = vmatpush.msra.mxu0 %v739
        %1002 = vmatpush.msra.mxu0 %v735
        %1003 = vmatpush.msra.mxu0 %v731
        %1004 = vmatpush.msra.mxu0 %v727
        %1005 = vmatpush.msra.mxu0 %v723
        %1006 = vmatpush.msra.mxu0 %v719
        %1007 = vmatmul.f32.gmra.mxu0 %v863
        %v1008 = vpop.f32.mrf.mxu0
        %v1009 = vadd.f32 %v989, %v1008
        %1010 = vdwg.mxu0
        %1011 = vmatpush.msra.mxu0 %v843
        %1012 = vmatpush.msra.mxu0 %v839
        %1013 = vmatpush.msra.mxu0 %v835
        %1014 = vmatpush.msra.mxu0 %v831
        %1015 = vmatpush.msra.mxu0 %v827
        %1016 = vmatpush.msra.mxu0 %v823
        %1017 = vmatpush.msra.mxu0 %v819
        %1018 = vmatpush.msra.mxu0 %v815
        %1019 = vmatpush.msra.mxu0 %v811
        %1020 = vmatpush.msra.mxu0 %v807
        %1021 = vmatpush.msra.mxu0 %v803
        %1022 = vmatpush.msra.mxu0 %v799
        %1023 = vmatpush.msra.mxu0 %v795
        %1024 = vmatpush.msra.mxu0 %v791
        %1025 = vmatpush.msra.mxu0 %v787
        %1026 = vmatpush.msra.mxu0 %v783
        %1027 = vmatmul.f32.gmra.mxu0 %v866
        %v1028 = vpop.f32.mrf.mxu0
        %v1029 = vadd.f32 %v1009, %v1028
        %1030 = vdwg.mxu0
        %1031 = vmatpush.msra.mxu0 %v652
        %1032 = vmatpush.msra.mxu0 %v648
        %1033 = vmatpush.msra.mxu0 %v644
        %1034 = vmatpush.msra.mxu0 %v640
        %1035 = vmatpush.msra.mxu0 %v636
        %1036 = vmatpush.msra.mxu0 %v632
        %1037 = vmatpush.msra.mxu0 %v628
        %1038 = vmatpush.msra.mxu0 %v624
        %1039 = vmatpush.msra.mxu0 %v620
        %1040 = vmatpush.msra.mxu0 %v616
        %1041 = vmatpush.msra.mxu0 %v612
        %1042 = vmatpush.msra.mxu0 %v608
        %1043 = vmatpush.msra.mxu0 %v604
        %1044 = vmatpush.msra.mxu0 %v600
        %1045 = vmatpush.msra.mxu0 %v596
        %1046 = vmatpush.msra.mxu0 %v592
        %1047 = vmatmul.f32.gmra.mxu0 %v857
        %v1048 = vpop.f32.mrf.mxu0
        %v1049 = vadd.f32 0.0, %v1048
        %1050 = vdwg.mxu0
        %1051 = vmatpush.msra.mxu0 %v716
        %1052 = vmatpush.msra.mxu0 %v712
        %1053 = vmatpush.msra.mxu0 %v708
        %1054 = vmatpush.msra.mxu0 %v704
        %1055 = vmatpush.msra.mxu0 %v700
        %1056 = vmatpush.msra.mxu0 %v696
        %1057 = vmatpush.msra.mxu0 %v692
        %1058 = vmatpush.msra.mxu0 %v688
        %1059 = vmatpush.msra.mxu0 %v684
        %1060 = vmatpush.msra.mxu0 %v680
        %1061 = vmatpush.msra.mxu0 %v676
        %1062 = vmatpush.msra.mxu0 %v672
        %1063 = vmatpush.msra.mxu0 %v668
        %1064 = vmatpush.msra.mxu0 %v664
        %1065 = vmatpush.msra.mxu0 %v660
        %1066 = vmatpush.msra.mxu0 %v656
        %1067 = vmatmul.f32.gmra.mxu0 %v860
        %v1068 = vpop.f32.mrf.mxu0
        %v1069 = vadd.f32 %v1049, %v1068
        %1070 = vdwg.mxu0
        %1071 = vmatpush.msra.mxu0 %v780
        %1072 = vmatpush.msra.mxu0 %v776
        %1073 = vmatpush.msra.mxu0 %v772
        %1074 = vmatpush.msra.mxu0 %v768
        %1075 = vmatpush.msra.mxu0 %v764
        %1076 = vmatpush.msra.mxu0 %v760
        %1077 = vmatpush.msra.mxu0 %v756
        %1078 = vmatpush.msra.mxu0 %v752
        %1079 = vmatpush.msra.mxu0 %v748
        %1080 = vmatpush.msra.mxu0 %v744
        %1081 = vmatpush.msra.mxu0 %v740
        %1082 = vmatpush.msra.mxu0 %v736
        %1083 = vmatpush.msra.mxu0 %v732
        %1084 = vmatpush.msra.mxu0 %v728
        %1085 = vmatpush.msra.mxu0 %v724
        %1086 = vmatpush.msra.mxu0 %v720
        %1087 = vmatmul.f32.gmra.mxu0 %v863
        %v1088 = vpop.f32.mrf.mxu0
        %v1089 = vadd.f32 %v1069, %v1088
        %1090 = vdwg.mxu0
        %1091 = vmatpush.msra.mxu0 %v844
        %1092 = vmatpush.msra.mxu0 %v840
        %1093 = vmatpush.msra.mxu0 %v836
        %1094 = vmatpush.msra.mxu0 %v832
        %1095 = vmatpush.msra.mxu0 %v828
        %1096 = vmatpush.msra.mxu0 %v824
        %1097 = vmatpush.msra.mxu0 %v820
        %1098 = vmatpush.msra.mxu0 %v816
        %1099 = vmatpush.msra.mxu0 %v812
        %1100 = vmatpush.msra.mxu0 %v808
        %1101 = vmatpush.msra.mxu0 %v804
        %1102 = vmatpush.msra.mxu0 %v800
        %1103 = vmatpush.msra.mxu0 %v796
        %1104 = vmatpush.msra.mxu0 %v792
        %1105 = vmatpush.msra.mxu0 %v788
        %1106 = vmatpush.msra.mxu0 %v784
        %1107 = vmatmul.f32.gmra.mxu0 %v866
        %v1108 = vpop.f32.mrf.mxu0
        %v1109 = vadd.f32 %v1089, %v1108
        %1110 = vdwg.mxu0
        %1111 = vmatpush.msra.mxu0 %v653
        %1112 = vmatpush.msra.mxu0 %v649
        %1113 = vmatpush.msra.mxu0 %v645
        %1114 = vmatpush.msra.mxu0 %v641
        %1115 = vmatpush.msra.mxu0 %v637
        %1116 = vmatpush.msra.mxu0 %v633
        %1117 = vmatpush.msra.mxu0 %v629
        %1118 = vmatpush.msra.mxu0 %v625
        %1119 = vmatpush.msra.mxu0 %v621
        %1120 = vmatpush.msra.mxu0 %v617
        %1121 = vmatpush.msra.mxu0 %v613
        %1122 = vmatpush.msra.mxu0 %v609
        %1123 = vmatpush.msra.mxu0 %v605
        %1124 = vmatpush.msra.mxu0 %v601
        %1125 = vmatpush.msra.mxu0 %v597
        %1126 = vmatpush.msra.mxu0 %v593
        %1127 = vmatmul.f32.gmra.mxu0 %v857
        %v1128 = vpop.f32.mrf.mxu0
        %v1129 = vadd.f32 0.0, %v1128
        %1130 = vdwg.mxu0
        %1131 = vmatpush.msra.mxu0 %v717
        %1132 = vmatpush.msra.mxu0 %v713
        %1133 = vmatpush.msra.mxu0 %v709
        %1134 = vmatpush.msra.mxu0 %v705
        %1135 = vmatpush.msra.mxu0 %v701
        %1136 = vmatpush.msra.mxu0 %v697
        %1137 = vmatpush.msra.mxu0 %v693
        %1138 = vmatpush.msra.mxu0 %v689
        %1139 = vmatpush.msra.mxu0 %v685
        %1140 = vmatpush.msra.mxu0 %v681
        %1141 = vmatpush.msra.mxu0 %v677
        %1142 = vmatpush.msra.mxu0 %v673
        %1143 = vmatpush.msra.mxu0 %v669
        %1144 = vmatpush.msra.mxu0 %v665
        %1145 = vmatpush.msra.mxu0 %v661
        %1146 = vmatpush.msra.mxu0 %v657
        %1147 = vmatmul.f32.gmra.mxu0 %v860
        %v1148 = vpop.f32.mrf.mxu0
        %v1149 = vadd.f32 %v1129, %v1148
        %1150 = vdwg.mxu0
        %1151 = vmatpush.msra.mxu0 %v781
        %1152 = vmatpush.msra.mxu0 %v777
        %1153 = vmatpush.msra.mxu0 %v773
        %1154 = vmatpush.msra.mxu0 %v769
        %1155 = vmatpush.msra.mxu0 %v765
        %1156 = vmatpush.msra.mxu0 %v761
        %1157 = vmatpush.msra.mxu0 %v757
        %1158 = vmatpush.msra.mxu0 %v753
        %1159 = vmatpush.msra.mxu0 %v749
        %1160 = vmatpush.msra.mxu0 %v745
        %1161 = vmatpush.msra.mxu0 %v741
        %1162 = vmatpush.msra.mxu0 %v737
        %1163 = vmatpush.msra.mxu0 %v733
        %1164 = vmatpush.msra.mxu0 %v729
        %1165 = vmatpush.msra.mxu0 %v725
        %1166 = vmatpush.msra.mxu0 %v721
        %1167 = vmatmul.f32.gmra.mxu0 %v863
        %v1168 = vpop.f32.mrf.mxu0
        %v1169 = vadd.f32 %v1149, %v1168
        %1170 = vdwg.mxu0
        %1171 = vmatpush.msra.mxu0 %v845
        %1172 = vmatpush.msra.mxu0 %v841
        %1173 = vmatpush.msra.mxu0 %v837
        %1174 = vmatpush.msra.mxu0 %v833
        %1175 = vmatpush.msra.mxu0 %v829
        %1176 = vmatpush.msra.mxu0 %v825
        %1177 = vmatpush.msra.mxu0 %v821
        %1178 = vmatpush.msra.mxu0 %v817
        %1179 = vmatpush.msra.mxu0 %v813
        %1180 = vmatpush.msra.mxu0 %v809
        %1181 = vmatpush.msra.mxu0 %v805
        %1182 = vmatpush.msra.mxu0 %v801
        %1183 = vmatpush.msra.mxu0 %v797
        %1184 = vmatpush.msra.mxu0 %v793
        %1185 = vmatpush.msra.mxu0 %v789
        %1186 = vmatpush.msra.mxu0 %v785
        %1187 = vmatmul.f32.gmra.mxu0 %v866
        %v1188 = vpop.f32.mrf.mxu0
        %v1189 = vadd.f32 %v1169, %v1188
        %1190 = vdwg.mxu0
        %1191 = vmatpush.msra.mxu0 %v385
        %1192 = vmatpush.msra.mxu0 %v381
        %1193 = vmatpush.msra.mxu0 %v377
        %1194 = vmatpush.msra.mxu0 %v373
        %1195 = vmatpush.msra.mxu0 %v369
        %1196 = vmatpush.msra.mxu0 %v365
        %1197 = vmatpush.msra.mxu0 %v361
        %1198 = vmatpush.msra.mxu0 %v357
        %1199 = vmatpush.msra.mxu0 %v353
        %1200 = vmatpush.msra.mxu0 %v349
        %1201 = vmatpush.msra.mxu0 %v345
        %1202 = vmatpush.msra.mxu0 %v341
        %1203 = vmatpush.msra.mxu0 %v337
        %1204 = vmatpush.msra.mxu0 %v333
        %1205 = vmatpush.msra.mxu0 %v329
        %1206 = vmatpush.msra.mxu0 %v325
        %1207 = vmatmul.f32.gmra.mxu0 %v321
        %v1208 = vpop.f32.mrf.mxu0
        %v1209 = vadd.f32 %v949, %v1208
        %1210 = vdwg.mxu0
        %1211 = vmatpush.msra.mxu0 %v449
        %1212 = vmatpush.msra.mxu0 %v445
        %1213 = vmatpush.msra.mxu0 %v441
        %1214 = vmatpush.msra.mxu0 %v437
        %1215 = vmatpush.msra.mxu0 %v433
        %1216 = vmatpush.msra.mxu0 %v429
        %1217 = vmatpush.msra.mxu0 %v425
        %1218 = vmatpush.msra.mxu0 %v421
        %1219 = vmatpush.msra.mxu0 %v417
        %1220 = vmatpush.msra.mxu0 %v413
        %1221 = vmatpush.msra.mxu0 %v409
        %1222 = vmatpush.msra.mxu0 %v405
        %1223 = vmatpush.msra.mxu0 %v401
        %1224 = vmatpush.msra.mxu0 %v397
        %1225 = vmatpush.msra.mxu0 %v393
        %1226 = vmatpush.msra.mxu0 %v389
        %1227 = vmatmul.f32.gmra.mxu0 %v322
        %v1228 = vpop.f32.mrf.mxu0
        %v1229 = vadd.f32 %v1209, %v1228
        %1230 = vdwg.mxu0
        %1231 = vmatpush.msra.mxu0 %v513
        %1232 = vmatpush.msra.mxu0 %v509
        %1233 = vmatpush.msra.mxu0 %v505
        %1234 = vmatpush.msra.mxu0 %v501
        %1235 = vmatpush.msra.mxu0 %v497
        %1236 = vmatpush.msra.mxu0 %v493
        %1237 = vmatpush.msra.mxu0 %v489
        %1238 = vmatpush.msra.mxu0 %v485
        %1239 = vmatpush.msra.mxu0 %v481
        %1240 = vmatpush.msra.mxu0 %v477
        %1241 = vmatpush.msra.mxu0 %v473
        %1242 = vmatpush.msra.mxu0 %v469
        %1243 = vmatpush.msra.mxu0 %v465
        %1244 = vmatpush.msra.mxu0 %v461
        %1245 = vmatpush.msra.mxu0 %v457
        %1246 = vmatpush.msra.mxu0 %v453
        %1247 = vmatmul.f32.gmra.mxu0 %v323
        %v1248 = vpop.f32.mrf.mxu0
        %v1249 = vadd.f32 %v1229, %v1248
        %1250 = vdwg.mxu0
        %1251 = vmatpush.msra.mxu0 %v577
        %1252 = vmatpush.msra.mxu0 %v573
        %1253 = vmatpush.msra.mxu0 %v569
        %1254 = vmatpush.msra.mxu0 %v565
        %1255 = vmatpush.msra.mxu0 %v561
        %1256 = vmatpush.msra.mxu0 %v557
        %1257 = vmatpush.msra.mxu0 %v553
        %1258 = vmatpush.msra.mxu0 %v549
        %1259 = vmatpush.msra.mxu0 %v545
        %1260 = vmatpush.msra.mxu0 %v541
        %1261 = vmatpush.msra.mxu0 %v537
        %1262 = vmatpush.msra.mxu0 %v533
        %1263 = vmatpush.msra.mxu0 %v529
        %1264 = vmatpush.msra.mxu0 %v525
        %1265 = vmatpush.msra.mxu0 %v521
        %1266 = vmatpush.msra.mxu0 %v517
        %1267 = vmatmul.f32.gmra.mxu0 %v324
        %v1268 = vpop.f32.mrf.mxu0
        %v1269 = vadd.f32 %v1249, %v1268
        %1270 = vdwg.mxu0
        %1271 = vmatpush.msra.mxu0 %v386
        %1272 = vmatpush.msra.mxu0 %v382
        %1273 = vmatpush.msra.mxu0 %v378
        %1274 = vmatpush.msra.mxu0 %v374
        %1275 = vmatpush.msra.mxu0 %v370
        %1276 = vmatpush.msra.mxu0 %v366
        %1277 = vmatpush.msra.mxu0 %v362
        %1278 = vmatpush.msra.mxu0 %v358
        %1279 = vmatpush.msra.mxu0 %v354
        %1280 = vmatpush.msra.mxu0 %v350
        %1281 = vmatpush.msra.mxu0 %v346
        %1282 = vmatpush.msra.mxu0 %v342
        %1283 = vmatpush.msra.mxu0 %v338
        %1284 = vmatpush.msra.mxu0 %v334
        %1285 = vmatpush.msra.mxu0 %v330
        %1286 = vmatpush.msra.mxu0 %v326
        %1287 = vmatmul.f32.gmra.mxu0 %v321
        %v1288 = vpop.f32.mrf.mxu0
        %v1289 = vadd.f32 %v1029, %v1288
        %1290 = vdwg.mxu0
        %1291 = vmatpush.msra.mxu0 %v450
        %1292 = vmatpush.msra.mxu0 %v446
        %1293 = vmatpush.msra.mxu0 %v442
        %1294 = vmatpush.msra.mxu0 %v438
        %1295 = vmatpush.msra.mxu0 %v434
        %1296 = vmatpush.msra.mxu0 %v430
        %1297 = vmatpush.msra.mxu0 %v426
        %1298 = vmatpush.msra.mxu0 %v422
        %1299 = vmatpush.msra.mxu0 %v418
        %1300 = vmatpush.msra.mxu0 %v414
        %1301 = vmatpush.msra.mxu0 %v410
        %1302 = vmatpush.msra.mxu0 %v406
        %1303 = vmatpush.msra.mxu0 %v402
        %1304 = vmatpush.msra.mxu0 %v398
        %1305 = vmatpush.msra.mxu0 %v394
        %1306 = vmatpush.msra.mxu0 %v390
        %1307 = vmatmul.f32.gmra.mxu0 %v322
        %v1308 = vpop.f32.mrf.mxu0
        %v1309 = vadd.f32 %v1289, %v1308
        %1310 = vdwg.mxu0
        %1311 = vmatpush.msra.mxu0 %v514
        %1312 = vmatpush.msra.mxu0 %v510
        %1313 = vmatpush.msra.mxu0 %v506
        %1314 = vmatpush.msra.mxu0 %v502
        %1315 = vmatpush.msra.mxu0 %v498
        %1316 = vmatpush.msra.mxu0 %v494
        %1317 = vmatpush.msra.mxu0 %v490
        %1318 = vmatpush.msra.mxu0 %v486
        %1319 = vmatpush.msra.mxu0 %v482
        %1320 = vmatpush.msra.mxu0 %v478
        %1321 = vmatpush.msra.mxu0 %v474
        %1322 = vmatpush.msra.mxu0 %v470
        %1323 = vmatpush.msra.mxu0 %v466
        %1324 = vmatpush.msra.mxu0 %v462
        %1325 = vmatpush.msra.mxu0 %v458
        %1326 = vmatpush.msra.mxu0 %v454
        %1327 = vmatmul.f32.gmra.mxu0 %v323
        %v1328 = vpop.f32.mrf.mxu0
        %v1329 = vadd.f32 %v1309, %v1328
        %1330 = vdwg.mxu0
        %1331 = vmatpush.msra.mxu0 %v578
        %1332 = vmatpush.msra.mxu0 %v574
        %1333 = vmatpush.msra.mxu0 %v570
        %1334 = vmatpush.msra.mxu0 %v566
        %1335 = vmatpush.msra.mxu0 %v562
        %1336 = vmatpush.msra.mxu0 %v558
        %1337 = vmatpush.msra.mxu0 %v554
        %1338 = vmatpush.msra.mxu0 %v550
        %1339 = vmatpush.msra.mxu0 %v546
        %1340 = vmatpush.msra.mxu0 %v542
        %1341 = vmatpush.msra.mxu0 %v538
        %1342 = vmatpush.msra.mxu0 %v534
        %1343 = vmatpush.msra.mxu0 %v530
        %1344 = vmatpush.msra.mxu0 %v526
        %1345 = vmatpush.msra.mxu0 %v522
        %1346 = vmatpush.msra.mxu0 %v518
        %1347 = vmatmul.f32.gmra.mxu0 %v324
        %v1348 = vpop.f32.mrf.mxu0
        %v1349 = vadd.f32 %v1329, %v1348
        %1350 = vdwg.mxu0
        %1351 = vmatpush.msra.mxu0 %v387
        %1352 = vmatpush.msra.mxu0 %v383
        %1353 = vmatpush.msra.mxu0 %v379
        %1354 = vmatpush.msra.mxu0 %v375
        %1355 = vmatpush.msra.mxu0 %v371
        %1356 = vmatpush.msra.mxu0 %v367
        %1357 = vmatpush.msra.mxu0 %v363
        %1358 = vmatpush.msra.mxu0 %v359
        %1359 = vmatpush.msra.mxu0 %v355
        %1360 = vmatpush.msra.mxu0 %v351
        %1361 = vmatpush.msra.mxu0 %v347
        %1362 = vmatpush.msra.mxu0 %v343
        %1363 = vmatpush.msra.mxu0 %v339
        %1364 = vmatpush.msra.mxu0 %v335
        %1365 = vmatpush.msra.mxu0 %v331
        %1366 = vmatpush.msra.mxu0 %v327
        %1367 = vmatmul.f32.gmra.mxu0 %v321
        %v1368 = vpop.f32.mrf.mxu0
        %v1369 = vadd.f32 %v1109, %v1368
        %1370 = vdwg.mxu0
        %1371 = vmatpush.msra.mxu0 %v451
        %1372 = vmatpush.msra.mxu0 %v447
        %1373 = vmatpush.msra.mxu0 %v443
        %1374 = vmatpush.msra.mxu0 %v439
        %1375 = vmatpush.msra.mxu0 %v435
        %1376 = vmatpush.msra.mxu0 %v431
        %1377 = vmatpush.msra.mxu0 %v427
        %1378 = vmatpush.msra.mxu0 %v423
        %1379 = vmatpush.msra.mxu0 %v419
        %1380 = vmatpush.msra.mxu0 %v415
        %1381 = vmatpush.msra.mxu0 %v411
        %1382 = vmatpush.msra.mxu0 %v407
        %1383 = vmatpush.msra.mxu0 %v403
        %1384 = vmatpush.msra.mxu0 %v399
        %1385 = vmatpush.msra.mxu0 %v395
        %1386 = vmatpush.msra.mxu0 %v391
        %1387 = vmatmul.f32.gmra.mxu0 %v322
        %v1388 = vpop.f32.mrf.mxu0
        %v1389 = vadd.f32 %v1369, %v1388
        %1390 = vdwg.mxu0
        %1391 = vmatpush.msra.mxu0 %v515
        %1392 = vmatpush.msra.mxu0 %v511
        %1393 = vmatpush.msra.mxu0 %v507
        %1394 = vmatpush.msra.mxu0 %v503
        %1395 = vmatpush.msra.mxu0 %v499
        %1396 = vmatpush.msra.mxu0 %v495
        %1397 = vmatpush.msra.mxu0 %v491
        %1398 = vmatpush.msra.mxu0 %v487
        %1399 = vmatpush.msra.mxu0 %v483
        %1400 = vmatpush.msra.mxu0 %v479
        %1401 = vmatpush.msra.mxu0 %v475
        %1402 = vmatpush.msra.mxu0 %v471
        %1403 = vmatpush.msra.mxu0 %v467
        %1404 = vmatpush.msra.mxu0 %v463
        %1405 = vmatpush.msra.mxu0 %v459
        %1406 = vmatpush.msra.mxu0 %v455
        %1407 = vmatmul.f32.gmra.mxu0 %v323
        %v1408 = vpop.f32.mrf.mxu0
        %v1409 = vadd.f32 %v1389, %v1408
        %1410 = vdwg.mxu0
        %1411 = vmatpush.msra.mxu0 %v579
        %1412 = vmatpush.msra.mxu0 %v575
        %1413 = vmatpush.msra.mxu0 %v571
        %1414 = vmatpush.msra.mxu0 %v567
        %1415 = vmatpush.msra.mxu0 %v563
        %1416 = vmatpush.msra.mxu0 %v559
        %1417 = vmatpush.msra.mxu0 %v555
        %1418 = vmatpush.msra.mxu0 %v551
        %1419 = vmatpush.msra.mxu0 %v547
        %1420 = vmatpush.msra.mxu0 %v543
        %1421 = vmatpush.msra.mxu0 %v539
        %1422 = vmatpush.msra.mxu0 %v535
        %1423 = vmatpush.msra.mxu0 %v531
        %1424 = vmatpush.msra.mxu0 %v527
        %1425 = vmatpush.msra.mxu0 %v523
        %1426 = vmatpush.msra.mxu0 %v519
        %1427 = vmatmul.f32.gmra.mxu0 %v324
        %v1428 = vpop.f32.mrf.mxu0
        %v1429 = vadd.f32 %v1409, %v1428
        %1430 = vdwg.mxu0
        %1431 = vmatpush.msra.mxu0 %v388
        %1432 = vmatpush.msra.mxu0 %v384
        %1433 = vmatpush.msra.mxu0 %v380
        %1434 = vmatpush.msra.mxu0 %v376
        %1435 = vmatpush.msra.mxu0 %v372
        %1436 = vmatpush.msra.mxu0 %v368
        %1437 = vmatpush.msra.mxu0 %v364
        %1438 = vmatpush.msra.mxu0 %v360
        %1439 = vmatpush.msra.mxu0 %v356
        %1440 = vmatpush.msra.mxu0 %v352
        %1441 = vmatpush.msra.mxu0 %v348
        %1442 = vmatpush.msra.mxu0 %v344
        %1443 = vmatpush.msra.mxu0 %v340
        %1444 = vmatpush.msra.mxu0 %v336
        %1445 = vmatpush.msra.mxu0 %v332
        %1446 = vmatpush.msra.mxu0 %v328
        %1447 = vmatmul.f32.gmra.mxu0 %v321
        %v1448 = vpop.f32.mrf.mxu0
        %v1449 = vadd.f32 %v1189, %v1448
        %1450 = vdwg.mxu0
        %1451 = vmatpush.msra.mxu0 %v452
        %1452 = vmatpush.msra.mxu0 %v448
        %1453 = vmatpush.msra.mxu0 %v444
        %1454 = vmatpush.msra.mxu0 %v440
        %1455 = vmatpush.msra.mxu0 %v436
        %1456 = vmatpush.msra.mxu0 %v432
        %1457 = vmatpush.msra.mxu0 %v428
        %1458 = vmatpush.msra.mxu0 %v424
        %1459 = vmatpush.msra.mxu0 %v420
        %1460 = vmatpush.msra.mxu0 %v416
        %1461 = vmatpush.msra.mxu0 %v412
        %1462 = vmatpush.msra.mxu0 %v408
        %1463 = vmatpush.msra.mxu0 %v404
        %1464 = vmatpush.msra.mxu0 %v400
        %1465 = vmatpush.msra.mxu0 %v396
        %1466 = vmatpush.msra.mxu0 %v392
        %1467 = vmatmul.f32.gmra.mxu0 %v322
        %v1468 = vpop.f32.mrf.mxu0
        %v1469 = vadd.f32 %v1449, %v1468
        %1470 = vdwg.mxu0
        %1471 = vmatpush.msra.mxu0 %v516
        %1472 = vmatpush.msra.mxu0 %v512
        %1473 = vmatpush.msra.mxu0 %v508
        %1474 = vmatpush.msra.mxu0 %v504
        %1475 = vmatpush.msra.mxu0 %v500
        %1476 = vmatpush.msra.mxu0 %v496
        %1477 = vmatpush.msra.mxu0 %v492
        %1478 = vmatpush.msra.mxu0 %v488
        %1479 = vmatpush.msra.mxu0 %v484
        %1480 = vmatpush.msra.mxu0 %v480
        %1481 = vmatpush.msra.mxu0 %v476
        %1482 = vmatpush.msra.mxu0 %v472
        %1483 = vmatpush.msra.mxu0 %v468
        %1484 = vmatpush.msra.mxu0 %v464
        %1485 = vmatpush.msra.mxu0 %v460
        %1486 = vmatpush.msra.mxu0 %v456
        %1487 = vmatmul.f32.gmra.mxu0 %v323
        %v1488 = vpop.f32.mrf.mxu0
        %v1489 = vadd.f32 %v1469, %v1488
        %1490 = vdwg.mxu0
        %1491 = vmatpush.msra.mxu0 %v580
        %1492 = vmatpush.msra.mxu0 %v576
        %1493 = vmatpush.msra.mxu0 %v572
        %1494 = vmatpush.msra.mxu0 %v568
        %1495 = vmatpush.msra.mxu0 %v564
        %1496 = vmatpush.msra.mxu0 %v560
        %1497 = vmatpush.msra.mxu0 %v556
        %1498 = vmatpush.msra.mxu0 %v552
        %1499 = vmatpush.msra.mxu0 %v548
        %1500 = vmatpush.msra.mxu0 %v544
        %1501 = vmatpush.msra.mxu0 %v540
        %1502 = vmatpush.msra.mxu0 %v536
        %1503 = vmatpush.msra.mxu0 %v532
        %1504 = vmatpush.msra.mxu0 %v528
        %1505 = vmatpush.msra.mxu0 %v524
        %1506 = vmatpush.msra.mxu0 %v520
        %1507 = vmatmul.f32.gmra.mxu0 %v324
        %v1508 = vpop.f32.mrf.mxu0
        %v1509 = vadd.f32 %v1489, %v1508
        %1510 = vdwg.mxu0
        %v1511 = vld [vmem:[#allocation2] sm:$0xfc]
        %v1512 = vld [vmem:[#allocation2 + $0x8] sm:$0xfc]
        %v1513 = vld [vmem:[#allocation2 + $0x10] sm:$0xfc]
        %v1514 = vld [vmem:[#allocation2 + $0x18] sm:$0xfc]
        %v1515 = vld [vmem:[#allocation2 + $0x20] sm:$0x3]
        %v1516 = vld [vmem:[#allocation2 + $0x28] sm:$0x3]
        %v1517 = vld [vmem:[#allocation2 + $0x30] sm:$0x3]
        %v1518 = vld [vmem:[#allocation2 + $0x38] sm:$0x3]
        %s1519 = scalar_lea.vmem [#allocation4], 4096
        %v1520 = vld [vmem:[%s1519] sm:$0xff]
        %v1521 = vld [vmem:[%s1519 + $0x8] sm:$0xff]
        %v1522 = vld [vmem:[%s1519 + $0x10] sm:$0xff]
        %v1523 = vld [vmem:[%s1519 + $0x18] sm:$0xff]
        %v1524 = vld [vmem:[%s1519 + $0x20] sm:$0xff]
        %v1525 = vld [vmem:[%s1519 + $0x28] sm:$0xff]
        %v1526 = vld [vmem:[%s1519 + $0x30] sm:$0xff]
        %v1527 = vld [vmem:[%s1519 + $0x38] sm:$0xff]
        %v1528 = vld [vmem:[%s1519 + $0x40] sm:$0xff]
        %v1529 = vld [vmem:[%s1519 + $0x48] sm:$0xff]
        %v1530 = vld [vmem:[%s1519 + $0x50] sm:$0xff]
        %v1531 = vld [vmem:[%s1519 + $0x58] sm:$0xff]
        %v1532 = vld [vmem:[%s1519 + $0x60] sm:$0xff]
        %v1533 = vld [vmem:[%s1519 + $0x68] sm:$0xff]
        %v1534 = vld [vmem:[%s1519 + $0x70] sm:$0xff]
        %v1535 = vld [vmem:[%s1519 + $0x78] sm:$0xff]
        %v1536 = vld [vmem:[%s1519 + $0x80] sm:$0xff]
        %v1537 = vld [vmem:[%s1519 + $0x88] sm:$0xff]
        %v1538 = vld [vmem:[%s1519 + $0x90] sm:$0xff]
        %v1539 = vld [vmem:[%s1519 + $0x98] sm:$0xff]
        %v1540 = vld [vmem:[%s1519 + $0xa0] sm:$0xff]
        %v1541 = vld [vmem:[%s1519 + $0xa8] sm:$0xff]
        %v1542 = vld [vmem:[%s1519 + $0xb0] sm:$0xff]
        %v1543 = vld [vmem:[%s1519 + $0xb8] sm:$0xff]
        %v1544 = vld [vmem:[%s1519 + $0xc0] sm:$0xff]
        %v1545 = vld [vmem:[%s1519 + $0xc8] sm:$0xff]
        %v1546 = vld [vmem:[%s1519 + $0xd0] sm:$0xff]
        %v1547 = vld [vmem:[%s1519 + $0xd8] sm:$0xff]
        %v1548 = vld [vmem:[%s1519 + $0xe0] sm:$0xff]
        %v1549 = vld [vmem:[%s1519 + $0xe8] sm:$0xff]
        %v1550 = vld [vmem:[%s1519 + $0xf0] sm:$0xff]
        %v1551 = vld [vmem:[%s1519 + $0xf8] sm:$0xff]
        %v1552 = vld [vmem:[%s1519 + $0x100] sm:$0xff]
        %v1553 = vld [vmem:[%s1519 + $0x108] sm:$0xff]
        %v1554 = vld [vmem:[%s1519 + $0x110] sm:$0xff]
        %v1555 = vld [vmem:[%s1519 + $0x118] sm:$0xff]
        %v1556 = vld [vmem:[%s1519 + $0x120] sm:$0xff]
        %v1557 = vld [vmem:[%s1519 + $0x128] sm:$0xff]
        %v1558 = vld [vmem:[%s1519 + $0x130] sm:$0xff]
        %v1559 = vld [vmem:[%s1519 + $0x138] sm:$0xff]
        %v1560 = vld [vmem:[%s1519 + $0x140] sm:$0xff]
        %v1561 = vld [vmem:[%s1519 + $0x148] sm:$0xff]
        %v1562 = vld [vmem:[%s1519 + $0x150] sm:$0xff]
        %v1563 = vld [vmem:[%s1519 + $0x158] sm:$0xff]
        %v1564 = vld [vmem:[%s1519 + $0x160] sm:$0xff]
        %v1565 = vld [vmem:[%s1519 + $0x168] sm:$0xff]
        %v1566 = vld [vmem:[%s1519 + $0x170] sm:$0xff]
        %v1567 = vld [vmem:[%s1519 + $0x178] sm:$0xff]
        %v1568 = vld [vmem:[%s1519 + $0x180] sm:$0xff]
        %v1569 = vld [vmem:[%s1519 + $0x188] sm:$0xff]
        %v1570 = vld [vmem:[%s1519 + $0x190] sm:$0xff]
        %v1571 = vld [vmem:[%s1519 + $0x198] sm:$0xff]
        %v1572 = vld [vmem:[%s1519 + $0x1a0] sm:$0xff]
        %v1573 = vld [vmem:[%s1519 + $0x1a8] sm:$0xff]
        %v1574 = vld [vmem:[%s1519 + $0x1b0] sm:$0xff]
        %v1575 = vld [vmem:[%s1519 + $0x1b8] sm:$0xff]
        %v1576 = vld [vmem:[%s1519 + $0x1c0] sm:$0xff]
        %v1577 = vld [vmem:[%s1519 + $0x1c8] sm:$0xff]
        %v1578 = vld [vmem:[%s1519 + $0x1d0] sm:$0xff]
        %v1579 = vld [vmem:[%s1519 + $0x1d8] sm:$0xff]
        %v1580 = vld [vmem:[%s1519 + $0x1e0] sm:$0xff]
        %v1581 = vld [vmem:[%s1519 + $0x1e8] sm:$0xff]
        %v1582 = vld [vmem:[%s1519 + $0x1f0] sm:$0xff]
        %v1583 = vld [vmem:[%s1519 + $0x1f8] sm:$0xff]
        %v1584 = vld [vmem:[%s1519 + $0x200] sm:$0xff]
        %v1585 = vld [vmem:[%s1519 + $0x208] sm:$0xff]
        %v1586 = vld [vmem:[%s1519 + $0x210] sm:$0xff]
        %v1587 = vld [vmem:[%s1519 + $0x218] sm:$0xff]
        %v1588 = vld [vmem:[%s1519 + $0x220] sm:$0xff]
        %v1589 = vld [vmem:[%s1519 + $0x228] sm:$0xff]
        %v1590 = vld [vmem:[%s1519 + $0x230] sm:$0xff]
        %v1591 = vld [vmem:[%s1519 + $0x238] sm:$0xff]
        %v1592 = vld [vmem:[%s1519 + $0x240] sm:$0xff]
        %v1593 = vld [vmem:[%s1519 + $0x248] sm:$0xff]
        %v1594 = vld [vmem:[%s1519 + $0x250] sm:$0xff]
        %v1595 = vld [vmem:[%s1519 + $0x258] sm:$0xff]
        %v1596 = vld [vmem:[%s1519 + $0x260] sm:$0xff]
        %v1597 = vld [vmem:[%s1519 + $0x268] sm:$0xff]
        %v1598 = vld [vmem:[%s1519 + $0x270] sm:$0xff]
        %v1599 = vld [vmem:[%s1519 + $0x278] sm:$0xff]
        %v1600 = vld [vmem:[%s1519 + $0x280] sm:$0xff]
        %v1601 = vld [vmem:[%s1519 + $0x288] sm:$0xff]
        %v1602 = vld [vmem:[%s1519 + $0x290] sm:$0xff]
        %v1603 = vld [vmem:[%s1519 + $0x298] sm:$0xff]
        %v1604 = vld [vmem:[%s1519 + $0x2a0] sm:$0xff]
        %v1605 = vld [vmem:[%s1519 + $0x2a8] sm:$0xff]
        %v1606 = vld [vmem:[%s1519 + $0x2b0] sm:$0xff]
        %v1607 = vld [vmem:[%s1519 + $0x2b8] sm:$0xff]
        %v1608 = vld [vmem:[%s1519 + $0x2c0] sm:$0xff]
        %v1609 = vld [vmem:[%s1519 + $0x2c8] sm:$0xff]
        %v1610 = vld [vmem:[%s1519 + $0x2d0] sm:$0xff]
        %v1611 = vld [vmem:[%s1519 + $0x2d8] sm:$0xff]
        %v1612 = vld [vmem:[%s1519 + $0x2e0] sm:$0xff]
        %v1613 = vld [vmem:[%s1519 + $0x2e8] sm:$0xff]
        %v1614 = vld [vmem:[%s1519 + $0x2f0] sm:$0xff]
        %v1615 = vld [vmem:[%s1519 + $0x2f8] sm:$0xff]
        %v1616 = vld [vmem:[%s1519 + $0x300] sm:$0xff]
        %v1617 = vld [vmem:[%s1519 + $0x308] sm:$0xff]
        %v1618 = vld [vmem:[%s1519 + $0x310] sm:$0xff]
        %v1619 = vld [vmem:[%s1519 + $0x318] sm:$0xff]
        %v1620 = vld [vmem:[%s1519 + $0x320] sm:$0xff]
        %v1621 = vld [vmem:[%s1519 + $0x328] sm:$0xff]
        %v1622 = vld [vmem:[%s1519 + $0x330] sm:$0xff]
        %v1623 = vld [vmem:[%s1519 + $0x338] sm:$0xff]
        %v1624 = vld [vmem:[%s1519 + $0x340] sm:$0xff]
        %v1625 = vld [vmem:[%s1519 + $0x348] sm:$0xff]
        %v1626 = vld [vmem:[%s1519 + $0x350] sm:$0xff]
        %v1627 = vld [vmem:[%s1519 + $0x358] sm:$0xff]
        %v1628 = vld [vmem:[%s1519 + $0x360] sm:$0xff]
        %v1629 = vld [vmem:[%s1519 + $0x368] sm:$0xff]
        %v1630 = vld [vmem:[%s1519 + $0x370] sm:$0xff]
        %v1631 = vld [vmem:[%s1519 + $0x378] sm:$0xff]
        %v1632 = vld [vmem:[%s1519 + $0x380] sm:$0xff]
        %v1633 = vld [vmem:[%s1519 + $0x388] sm:$0xff]
        %v1634 = vld [vmem:[%s1519 + $0x390] sm:$0xff]
        %v1635 = vld [vmem:[%s1519 + $0x398] sm:$0xff]
        %v1636 = vld [vmem:[%s1519 + $0x3a0] sm:$0xff]
        %v1637 = vld [vmem:[%s1519 + $0x3a8] sm:$0xff]
        %v1638 = vld [vmem:[%s1519 + $0x3b0] sm:$0xff]
        %v1639 = vld [vmem:[%s1519 + $0x3b8] sm:$0xff]
        %v1640 = vld [vmem:[%s1519 + $0x3c0] sm:$0xff]
        %v1641 = vld [vmem:[%s1519 + $0x3c8] sm:$0xff]
        %v1642 = vld [vmem:[%s1519 + $0x3d0] sm:$0xff]
        %v1643 = vld [vmem:[%s1519 + $0x3d8] sm:$0xff]
        %v1644 = vld [vmem:[%s1519 + $0x3e0] sm:$0xff]
        %v1645 = vld [vmem:[%s1519 + $0x3e8] sm:$0xff]
        %v1646 = vld [vmem:[%s1519 + $0x3f0] sm:$0xff]
        %v1647 = vld [vmem:[%s1519 + $0x3f8] sm:$0xff]
        %v1648 = vld [vmem:[%s1519 + $0x400] sm:$0xff]
        %v1649 = vld [vmem:[%s1519 + $0x408] sm:$0xff]
        %v1650 = vld [vmem:[%s1519 + $0x410] sm:$0xff]
        %v1651 = vld [vmem:[%s1519 + $0x418] sm:$0xff]
        %v1652 = vld [vmem:[%s1519 + $0x420] sm:$0xff]
        %v1653 = vld [vmem:[%s1519 + $0x428] sm:$0xff]
        %v1654 = vld [vmem:[%s1519 + $0x430] sm:$0xff]
        %v1655 = vld [vmem:[%s1519 + $0x438] sm:$0xff]
        %v1656 = vld [vmem:[%s1519 + $0x440] sm:$0xff]
        %v1657 = vld [vmem:[%s1519 + $0x448] sm:$0xff]
        %v1658 = vld [vmem:[%s1519 + $0x450] sm:$0xff]
        %v1659 = vld [vmem:[%s1519 + $0x458] sm:$0xff]
        %v1660 = vld [vmem:[%s1519 + $0x460] sm:$0xff]
        %v1661 = vld [vmem:[%s1519 + $0x468] sm:$0xff]
        %v1662 = vld [vmem:[%s1519 + $0x470] sm:$0xff]
        %v1663 = vld [vmem:[%s1519 + $0x478] sm:$0xff]
        %v1664 = vld [vmem:[%s1519 + $0x480] sm:$0xff]
        %v1665 = vld [vmem:[%s1519 + $0x488] sm:$0xff]
        %v1666 = vld [vmem:[%s1519 + $0x490] sm:$0xff]
        %v1667 = vld [vmem:[%s1519 + $0x498] sm:$0xff]
        %v1668 = vld [vmem:[%s1519 + $0x4a0] sm:$0xff]
        %v1669 = vld [vmem:[%s1519 + $0x4a8] sm:$0xff]
        %v1670 = vld [vmem:[%s1519 + $0x4b0] sm:$0xff]
        %v1671 = vld [vmem:[%s1519 + $0x4b8] sm:$0xff]
        %v1672 = vld [vmem:[%s1519 + $0x4c0] sm:$0xff]
        %v1673 = vld [vmem:[%s1519 + $0x4c8] sm:$0xff]
        %v1674 = vld [vmem:[%s1519 + $0x4d0] sm:$0xff]
        %v1675 = vld [vmem:[%s1519 + $0x4d8] sm:$0xff]
        %v1676 = vld [vmem:[%s1519 + $0x4e0] sm:$0xff]
        %v1677 = vld [vmem:[%s1519 + $0x4e8] sm:$0xff]
        %v1678 = vld [vmem:[%s1519 + $0x4f0] sm:$0xff]
        %v1679 = vld [vmem:[%s1519 + $0x4f8] sm:$0xff]
        %v1680 = vld [vmem:[%s1519 + $0x500] sm:$0xff]
        %v1681 = vld [vmem:[%s1519 + $0x508] sm:$0xff]
        %v1682 = vld [vmem:[%s1519 + $0x510] sm:$0xff]
        %v1683 = vld [vmem:[%s1519 + $0x518] sm:$0xff]
        %v1684 = vld [vmem:[%s1519 + $0x520] sm:$0xff]
        %v1685 = vld [vmem:[%s1519 + $0x528] sm:$0xff]
        %v1686 = vld [vmem:[%s1519 + $0x530] sm:$0xff]
        %v1687 = vld [vmem:[%s1519 + $0x538] sm:$0xff]
        %v1688 = vld [vmem:[%s1519 + $0x540] sm:$0xff]
        %v1689 = vld [vmem:[%s1519 + $0x548] sm:$0xff]
        %v1690 = vld [vmem:[%s1519 + $0x550] sm:$0xff]
        %v1691 = vld [vmem:[%s1519 + $0x558] sm:$0xff]
        %v1692 = vld [vmem:[%s1519 + $0x560] sm:$0xff]
        %v1693 = vld [vmem:[%s1519 + $0x568] sm:$0xff]
        %v1694 = vld [vmem:[%s1519 + $0x570] sm:$0xff]
        %v1695 = vld [vmem:[%s1519 + $0x578] sm:$0xff]
        %v1696 = vld [vmem:[%s1519 + $0x580] sm:$0xff]
        %v1697 = vld [vmem:[%s1519 + $0x588] sm:$0xff]
        %v1698 = vld [vmem:[%s1519 + $0x590] sm:$0xff]
        %v1699 = vld [vmem:[%s1519 + $0x598] sm:$0xff]
        %v1700 = vld [vmem:[%s1519 + $0x5a0] sm:$0xff]
        %v1701 = vld [vmem:[%s1519 + $0x5a8] sm:$0xff]
        %v1702 = vld [vmem:[%s1519 + $0x5b0] sm:$0xff]
        %v1703 = vld [vmem:[%s1519 + $0x5b8] sm:$0xff]
        %v1704 = vld [vmem:[%s1519 + $0x5c0] sm:$0xff]
        %v1705 = vld [vmem:[%s1519 + $0x5c8] sm:$0xff]
        %v1706 = vld [vmem:[%s1519 + $0x5d0] sm:$0xff]
        %v1707 = vld [vmem:[%s1519 + $0x5d8] sm:$0xff]
        %v1708 = vld [vmem:[%s1519 + $0x5e0] sm:$0xff]
        %v1709 = vld [vmem:[%s1519 + $0x5e8] sm:$0xff]
        %v1710 = vld [vmem:[%s1519 + $0x5f0] sm:$0xff]
        %v1711 = vld [vmem:[%s1519 + $0x5f8] sm:$0xff]
        %v1712 = vld [vmem:[%s1519 + $0x600] sm:$0xff]
        %v1713 = vld [vmem:[%s1519 + $0x608] sm:$0xff]
        %v1714 = vld [vmem:[%s1519 + $0x610] sm:$0xff]
        %v1715 = vld [vmem:[%s1519 + $0x618] sm:$0xff]
        %v1716 = vld [vmem:[%s1519 + $0x620] sm:$0xff]
        %v1717 = vld [vmem:[%s1519 + $0x628] sm:$0xff]
        %v1718 = vld [vmem:[%s1519 + $0x630] sm:$0xff]
        %v1719 = vld [vmem:[%s1519 + $0x638] sm:$0xff]
        %v1720 = vld [vmem:[%s1519 + $0x640] sm:$0xff]
        %v1721 = vld [vmem:[%s1519 + $0x648] sm:$0xff]
        %v1722 = vld [vmem:[%s1519 + $0x650] sm:$0xff]
        %v1723 = vld [vmem:[%s1519 + $0x658] sm:$0xff]
        %v1724 = vld [vmem:[%s1519 + $0x660] sm:$0xff]
        %v1725 = vld [vmem:[%s1519 + $0x668] sm:$0xff]
        %v1726 = vld [vmem:[%s1519 + $0x670] sm:$0xff]
        %v1727 = vld [vmem:[%s1519 + $0x678] sm:$0xff]
        %v1728 = vld [vmem:[%s1519 + $0x680] sm:$0xff]
        %v1729 = vld [vmem:[%s1519 + $0x688] sm:$0xff]
        %v1730 = vld [vmem:[%s1519 + $0x690] sm:$0xff]
        %v1731 = vld [vmem:[%s1519 + $0x698] sm:$0xff]
        %v1732 = vld [vmem:[%s1519 + $0x6a0] sm:$0xff]
        %v1733 = vld [vmem:[%s1519 + $0x6a8] sm:$0xff]
        %v1734 = vld [vmem:[%s1519 + $0x6b0] sm:$0xff]
        %v1735 = vld [vmem:[%s1519 + $0x6b8] sm:$0xff]
        %v1736 = vld [vmem:[%s1519 + $0x6c0] sm:$0xff]
        %v1737 = vld [vmem:[%s1519 + $0x6c8] sm:$0xff]
        %v1738 = vld [vmem:[%s1519 + $0x6d0] sm:$0xff]
        %v1739 = vld [vmem:[%s1519 + $0x6d8] sm:$0xff]
        %v1740 = vld [vmem:[%s1519 + $0x6e0] sm:$0xff]
        %v1741 = vld [vmem:[%s1519 + $0x6e8] sm:$0xff]
        %v1742 = vld [vmem:[%s1519 + $0x6f0] sm:$0xff]
        %v1743 = vld [vmem:[%s1519 + $0x6f8] sm:$0xff]
        %v1744 = vld [vmem:[%s1519 + $0x700] sm:$0xff]
        %v1745 = vld [vmem:[%s1519 + $0x708] sm:$0xff]
        %v1746 = vld [vmem:[%s1519 + $0x710] sm:$0xff]
        %v1747 = vld [vmem:[%s1519 + $0x718] sm:$0xff]
        %v1748 = vld [vmem:[%s1519 + $0x720] sm:$0xff]
        %v1749 = vld [vmem:[%s1519 + $0x728] sm:$0xff]
        %v1750 = vld [vmem:[%s1519 + $0x730] sm:$0xff]
        %v1751 = vld [vmem:[%s1519 + $0x738] sm:$0xff]
        %v1752 = vld [vmem:[%s1519 + $0x740] sm:$0xff]
        %v1753 = vld [vmem:[%s1519 + $0x748] sm:$0xff]
        %v1754 = vld [vmem:[%s1519 + $0x750] sm:$0xff]
        %v1755 = vld [vmem:[%s1519 + $0x758] sm:$0xff]
        %v1756 = vld [vmem:[%s1519 + $0x760] sm:$0xff]
        %v1757 = vld [vmem:[%s1519 + $0x768] sm:$0xff]
        %v1758 = vld [vmem:[%s1519 + $0x770] sm:$0xff]
        %v1759 = vld [vmem:[%s1519 + $0x778] sm:$0xff]
        %v1760 = vld [vmem:[%s1519 + $0x780] sm:$0xff]
        %v1761 = vld [vmem:[%s1519 + $0x788] sm:$0xff]
        %v1762 = vld [vmem:[%s1519 + $0x790] sm:$0xff]
        %v1763 = vld [vmem:[%s1519 + $0x798] sm:$0xff]
        %v1764 = vld [vmem:[%s1519 + $0x7a0] sm:$0xff]
        %v1765 = vld [vmem:[%s1519 + $0x7a8] sm:$0xff]
        %v1766 = vld [vmem:[%s1519 + $0x7b0] sm:$0xff]
        %v1767 = vld [vmem:[%s1519 + $0x7b8] sm:$0xff]
        %v1768 = vld [vmem:[%s1519 + $0x7c0] sm:$0xff]
        %v1769 = vld [vmem:[%s1519 + $0x7c8] sm:$0xff]
        %v1770 = vld [vmem:[%s1519 + $0x7d0] sm:$0xff]
        %v1771 = vld [vmem:[%s1519 + $0x7d8] sm:$0xff]
        %v1772 = vld [vmem:[%s1519 + $0x7e0] sm:$0xff]
        %v1773 = vld [vmem:[%s1519 + $0x7e8] sm:$0xff]
        %v1774 = vld [vmem:[%s1519 + $0x7f0] sm:$0xff]
        %v1775 = vld [vmem:[%s1519 + $0x7f8] sm:$0xff]
        %vm1784 = vcmask 1045504
        %v1785 = vrot.slane %v1511, 2
        %v1786 = vrot.slane %v1515, 2
        %v1787 = vsel %vm1784, %v1785, %v1786
        %v1788 = vrot.slane %v1512, 2
        %v1789 = vrot.slane %v1516, 2
        %v1790 = vsel %vm1784, %v1788, %v1789
        %v1791 = vrot.slane %v1513, 2
        %v1792 = vrot.slane %v1517, 2
        %v1793 = vsel %vm1784, %v1791, %v1792
        %v1794 = vrot.slane %v1514, 2
        %v1795 = vrot.slane %v1518, 2
        %v1796 = vsel %vm1784, %v1794, %v1795
        %1801 = vmatpush.msra.mxu0 %v1580
        %1802 = vmatpush.msra.mxu0 %v1576
        %1803 = vmatpush.msra.mxu0 %v1572
        %1804 = vmatpush.msra.mxu0 %v1568
        %1805 = vmatpush.msra.mxu0 %v1564
        %1806 = vmatpush.msra.mxu0 %v1560
        %1807 = vmatpush.msra.mxu0 %v1556
        %1808 = vmatpush.msra.mxu0 %v1552
        %1809 = vmatpush.msra.mxu0 %v1548
        %1810 = vmatpush.msra.mxu0 %v1544
        %1811 = vmatpush.msra.mxu0 %v1540
        %1812 = vmatpush.msra.mxu0 %v1536
        %1813 = vmatpush.msra.mxu0 %v1532
        %1814 = vmatpush.msra.mxu0 %v1528
        %1815 = vmatpush.msra.mxu0 %v1524
        %1816 = vmatpush.msra.mxu0 %v1520
        %1817 = vmatmul.f32.gmra.mxu0 %v1787
        %v1818 = vpop.f32.mrf.mxu0
        %v1819 = vadd.f32 0.0, %v1818
        %1820 = vdwg.mxu0
        %1821 = vmatpush.msra.mxu0 %v1644
        %1822 = vmatpush.msra.mxu0 %v1640
        %1823 = vmatpush.msra.mxu0 %v1636
        %1824 = vmatpush.msra.mxu0 %v1632
        %1825 = vmatpush.msra.mxu0 %v1628
        %1826 = vmatpush.msra.mxu0 %v1624
        %1827 = vmatpush.msra.mxu0 %v1620
        %1828 = vmatpush.msra.mxu0 %v1616
        %1829 = vmatpush.msra.mxu0 %v1612
        %1830 = vmatpush.msra.mxu0 %v1608
        %1831 = vmatpush.msra.mxu0 %v1604
        %1832 = vmatpush.msra.mxu0 %v1600
        %1833 = vmatpush.msra.mxu0 %v1596
        %1834 = vmatpush.msra.mxu0 %v1592
        %1835 = vmatpush.msra.mxu0 %v1588
        %1836 = vmatpush.msra.mxu0 %v1584
        %1837 = vmatmul.f32.gmra.mxu0 %v1790
        %v1838 = vpop.f32.mrf.mxu0
        %v1839 = vadd.f32 %v1819, %v1838
        %1840 = vdwg.mxu0
        %1841 = vmatpush.msra.mxu0 %v1708
        %1842 = vmatpush.msra.mxu0 %v1704
        %1843 = vmatpush.msra.mxu0 %v1700
        %1844 = vmatpush.msra.mxu0 %v1696
        %1845 = vmatpush.msra.mxu0 %v1692
        %1846 = vmatpush.msra.mxu0 %v1688
        %1847 = vmatpush.msra.mxu0 %v1684
        %1848 = vmatpush.msra.mxu0 %v1680
        %1849 = vmatpush.msra.mxu0 %v1676
        %1850 = vmatpush.msra.mxu0 %v1672
        %1851 = vmatpush.msra.mxu0 %v1668
        %1852 = vmatpush.msra.mxu0 %v1664
        %1853 = vmatpush.msra.mxu0 %v1660
        %1854 = vmatpush.msra.mxu0 %v1656
        %1855 = vmatpush.msra.mxu0 %v1652
        %1856 = vmatpush.msra.mxu0 %v1648
        %1857 = vmatmul.f32.gmra.mxu0 %v1793
        %v1858 = vpop.f32.mrf.mxu0
        %v1859 = vadd.f32 %v1839, %v1858
        %1860 = vdwg.mxu0
        %1861 = vmatpush.msra.mxu0 %v1772
        %1862 = vmatpush.msra.mxu0 %v1768
        %1863 = vmatpush.msra.mxu0 %v1764
        %1864 = vmatpush.msra.mxu0 %v1760
        %1865 = vmatpush.msra.mxu0 %v1756
        %1866 = vmatpush.msra.mxu0 %v1752
        %1867 = vmatpush.msra.mxu0 %v1748
        %1868 = vmatpush.msra.mxu0 %v1744
        %1869 = vmatpush.msra.mxu0 %v1740
        %1870 = vmatpush.msra.mxu0 %v1736
        %1871 = vmatpush.msra.mxu0 %v1732
        %1872 = vmatpush.msra.mxu0 %v1728
        %1873 = vmatpush.msra.mxu0 %v1724
        %1874 = vmatpush.msra.mxu0 %v1720
        %1875 = vmatpush.msra.mxu0 %v1716
        %1876 = vmatpush.msra.mxu0 %v1712
        %1877 = vmatmul.f32.gmra.mxu0 %v1796
        %v1878 = vpop.f32.mrf.mxu0
        %v1879 = vadd.f32 %v1859, %v1878
        %1880 = vdwg.mxu0
        %1881 = vmatpush.msra.mxu0 %v1581
        %1882 = vmatpush.msra.mxu0 %v1577
        %1883 = vmatpush.msra.mxu0 %v1573
        %1884 = vmatpush.msra.mxu0 %v1569
        %1885 = vmatpush.msra.mxu0 %v1565
        %1886 = vmatpush.msra.mxu0 %v1561
        %1887 = vmatpush.msra.mxu0 %v1557
        %1888 = vmatpush.msra.mxu0 %v1553
        %1889 = vmatpush.msra.mxu0 %v1549
        %1890 = vmatpush.msra.mxu0 %v1545
        %1891 = vmatpush.msra.mxu0 %v1541
        %1892 = vmatpush.msra.mxu0 %v1537
        %1893 = vmatpush.msra.mxu0 %v1533
        %1894 = vmatpush.msra.mxu0 %v1529
        %1895 = vmatpush.msra.mxu0 %v1525
        %1896 = vmatpush.msra.mxu0 %v1521
        %1897 = vmatmul.f32.gmra.mxu0 %v1787
        %v1898 = vpop.f32.mrf.mxu0
        %v1899 = vadd.f32 0.0, %v1898
        %1900 = vdwg.mxu0
        %1901 = vmatpush.msra.mxu0 %v1645
        %1902 = vmatpush.msra.mxu0 %v1641
        %1903 = vmatpush.msra.mxu0 %v1637
        %1904 = vmatpush.msra.mxu0 %v1633
        %1905 = vmatpush.msra.mxu0 %v1629
        %1906 = vmatpush.msra.mxu0 %v1625
        %1907 = vmatpush.msra.mxu0 %v1621
        %1908 = vmatpush.msra.mxu0 %v1617
        %1909 = vmatpush.msra.mxu0 %v1613
        %1910 = vmatpush.msra.mxu0 %v1609
        %1911 = vmatpush.msra.mxu0 %v1605
        %1912 = vmatpush.msra.mxu0 %v1601
        %1913 = vmatpush.msra.mxu0 %v1597
        %1914 = vmatpush.msra.mxu0 %v1593
        %1915 = vmatpush.msra.mxu0 %v1589
        %1916 = vmatpush.msra.mxu0 %v1585
        %1917 = vmatmul.f32.gmra.mxu0 %v1790
        %v1918 = vpop.f32.mrf.mxu0
        %v1919 = vadd.f32 %v1899, %v1918
        %1920 = vdwg.mxu0
        %1921 = vmatpush.msra.mxu0 %v1709
        %1922 = vmatpush.msra.mxu0 %v1705
        %1923 = vmatpush.msra.mxu0 %v1701
        %1924 = vmatpush.msra.mxu0 %v1697
        %1925 = vmatpush.msra.mxu0 %v1693
        %1926 = vmatpush.msra.mxu0 %v1689
        %1927 = vmatpush.msra.mxu0 %v1685
        %1928 = vmatpush.msra.mxu0 %v1681
        %1929 = vmatpush.msra.mxu0 %v1677
        %1930 = vmatpush.msra.mxu0 %v1673
        %1931 = vmatpush.msra.mxu0 %v1669
        %1932 = vmatpush.msra.mxu0 %v1665
        %1933 = vmatpush.msra.mxu0 %v1661
        %1934 = vmatpush.msra.mxu0 %v1657
        %1935 = vmatpush.msra.mxu0 %v1653
        %1936 = vmatpush.msra.mxu0 %v1649
        %1937 = vmatmul.f32.gmra.mxu0 %v1793
        %v1938 = vpop.f32.mrf.mxu0
        %v1939 = vadd.f32 %v1919, %v1938
        %1940 = vdwg.mxu0
        %1941 = vmatpush.msra.mxu0 %v1773
        %1942 = vmatpush.msra.mxu0 %v1769
        %1943 = vmatpush.msra.mxu0 %v1765
        %1944 = vmatpush.msra.mxu0 %v1761
        %1945 = vmatpush.msra.mxu0 %v1757
        %1946 = vmatpush.msra.mxu0 %v1753
        %1947 = vmatpush.msra.mxu0 %v1749
        %1948 = vmatpush.msra.mxu0 %v1745
        %1949 = vmatpush.msra.mxu0 %v1741
        %1950 = vmatpush.msra.mxu0 %v1737
        %1951 = vmatpush.msra.mxu0 %v1733
        %1952 = vmatpush.msra.mxu0 %v1729
        %1953 = vmatpush.msra.mxu0 %v1725
        %1954 = vmatpush.msra.mxu0 %v1721
        %1955 = vmatpush.msra.mxu0 %v1717
        %1956 = vmatpush.msra.mxu0 %v1713
        %1957 = vmatmul.f32.gmra.mxu0 %v1796
        %v1958 = vpop.f32.mrf.mxu0
        %v1959 = vadd.f32 %v1939, %v1958
        %1960 = vdwg.mxu0
        %1961 = vmatpush.msra.mxu0 %v1582
        %1962 = vmatpush.msra.mxu0 %v1578
        %1963 = vmatpush.msra.mxu0 %v1574
        %1964 = vmatpush.msra.mxu0 %v1570
        %1965 = vmatpush.msra.mxu0 %v1566
        %1966 = vmatpush.msra.mxu0 %v1562
        %1967 = vmatpush.msra.mxu0 %v1558
        %1968 = vmatpush.msra.mxu0 %v1554
        %1969 = vmatpush.msra.mxu0 %v1550
        %1970 = vmatpush.msra.mxu0 %v1546
        %1971 = vmatpush.msra.mxu0 %v1542
        %1972 = vmatpush.msra.mxu0 %v1538
        %1973 = vmatpush.msra.mxu0 %v1534
        %1974 = vmatpush.msra.mxu0 %v1530
        %1975 = vmatpush.msra.mxu0 %v1526
        %1976 = vmatpush.msra.mxu0 %v1522
        %1977 = vmatmul.f32.gmra.mxu0 %v1787
        %v1978 = vpop.f32.mrf.mxu0
        %v1979 = vadd.f32 0.0, %v1978
        %1980 = vdwg.mxu0
        %1981 = vmatpush.msra.mxu0 %v1646
        %1982 = vmatpush.msra.mxu0 %v1642
        %1983 = vmatpush.msra.mxu0 %v1638
        %1984 = vmatpush.msra.mxu0 %v1634
        %1985 = vmatpush.msra.mxu0 %v1630
        %1986 = vmatpush.msra.mxu0 %v1626
        %1987 = vmatpush.msra.mxu0 %v1622
        %1988 = vmatpush.msra.mxu0 %v1618
        %1989 = vmatpush.msra.mxu0 %v1614
        %1990 = vmatpush.msra.mxu0 %v1610
        %1991 = vmatpush.msra.mxu0 %v1606
        %1992 = vmatpush.msra.mxu0 %v1602
        %1993 = vmatpush.msra.mxu0 %v1598
        %1994 = vmatpush.msra.mxu0 %v1594
        %1995 = vmatpush.msra.mxu0 %v1590
        %1996 = vmatpush.msra.mxu0 %v1586
        %1997 = vmatmul.f32.gmra.mxu0 %v1790
        %v1998 = vpop.f32.mrf.mxu0
        %v1999 = vadd.f32 %v1979, %v1998
        %2000 = vdwg.mxu0
        %2001 = vmatpush.msra.mxu0 %v1710
        %2002 = vmatpush.msra.mxu0 %v1706
        %2003 = vmatpush.msra.mxu0 %v1702
        %2004 = vmatpush.msra.mxu0 %v1698
        %2005 = vmatpush.msra.mxu0 %v1694
        %2006 = vmatpush.msra.mxu0 %v1690
        %2007 = vmatpush.msra.mxu0 %v1686
        %2008 = vmatpush.msra.mxu0 %v1682
        %2009 = vmatpush.msra.mxu0 %v1678
        %2010 = vmatpush.msra.mxu0 %v1674
        %2011 = vmatpush.msra.mxu0 %v1670
        %2012 = vmatpush.msra.mxu0 %v1666
        %2013 = vmatpush.msra.mxu0 %v1662
        %2014 = vmatpush.msra.mxu0 %v1658
        %2015 = vmatpush.msra.mxu0 %v1654
        %2016 = vmatpush.msra.mxu0 %v1650
        %2017 = vmatmul.f32.gmra.mxu0 %v1793
        %v2018 = vpop.f32.mrf.mxu0
        %v2019 = vadd.f32 %v1999, %v2018
        %2020 = vdwg.mxu0
        %2021 = vmatpush.msra.mxu0 %v1774
        %2022 = vmatpush.msra.mxu0 %v1770
        %2023 = vmatpush.msra.mxu0 %v1766
        %2024 = vmatpush.msra.mxu0 %v1762
        %2025 = vmatpush.msra.mxu0 %v1758
        %2026 = vmatpush.msra.mxu0 %v1754
        %2027 = vmatpush.msra.mxu0 %v1750
        %2028 = vmatpush.msra.mxu0 %v1746
        %2029 = vmatpush.msra.mxu0 %v1742
        %2030 = vmatpush.msra.mxu0 %v1738
        %2031 = vmatpush.msra.mxu0 %v1734
        %2032 = vmatpush.msra.mxu0 %v1730
        %2033 = vmatpush.msra.mxu0 %v1726
        %2034 = vmatpush.msra.mxu0 %v1722
        %2035 = vmatpush.msra.mxu0 %v1718
        %2036 = vmatpush.msra.mxu0 %v1714
        %2037 = vmatmul.f32.gmra.mxu0 %v1796
        %v2038 = vpop.f32.mrf.mxu0
        %v2039 = vadd.f32 %v2019, %v2038
        %2040 = vdwg.mxu0
        %2041 = vmatpush.msra.mxu0 %v1583
        %2042 = vmatpush.msra.mxu0 %v1579
        %2043 = vmatpush.msra.mxu0 %v1575
        %2044 = vmatpush.msra.mxu0 %v1571
        %2045 = vmatpush.msra.mxu0 %v1567
        %2046 = vmatpush.msra.mxu0 %v1563
        %2047 = vmatpush.msra.mxu0 %v1559
        %2048 = vmatpush.msra.mxu0 %v1555
        %2049 = vmatpush.msra.mxu0 %v1551
        %2050 = vmatpush.msra.mxu0 %v1547
        %2051 = vmatpush.msra.mxu0 %v1543
        %2052 = vmatpush.msra.mxu0 %v1539
        %2053 = vmatpush.msra.mxu0 %v1535
        %2054 = vmatpush.msra.mxu0 %v1531
        %2055 = vmatpush.msra.mxu0 %v1527
        %2056 = vmatpush.msra.mxu0 %v1523
        %2057 = vmatmul.f32.gmra.mxu0 %v1787
        %v2058 = vpop.f32.mrf.mxu0
        %v2059 = vadd.f32 0.0, %v2058
        %2060 = vdwg.mxu0
        %2061 = vmatpush.msra.mxu0 %v1647
        %2062 = vmatpush.msra.mxu0 %v1643
        %2063 = vmatpush.msra.mxu0 %v1639
        %2064 = vmatpush.msra.mxu0 %v1635
        %2065 = vmatpush.msra.mxu0 %v1631
        %2066 = vmatpush.msra.mxu0 %v1627
        %2067 = vmatpush.msra.mxu0 %v1623
        %2068 = vmatpush.msra.mxu0 %v1619
        %2069 = vmatpush.msra.mxu0 %v1615
        %2070 = vmatpush.msra.mxu0 %v1611
        %2071 = vmatpush.msra.mxu0 %v1607
        %2072 = vmatpush.msra.mxu0 %v1603
        %2073 = vmatpush.msra.mxu0 %v1599
        %2074 = vmatpush.msra.mxu0 %v1595
        %2075 = vmatpush.msra.mxu0 %v1591
        %2076 = vmatpush.msra.mxu0 %v1587
        %2077 = vmatmul.f32.gmra.mxu0 %v1790
        %v2078 = vpop.f32.mrf.mxu0
        %v2079 = vadd.f32 %v2059, %v2078
        %2080 = vdwg.mxu0
        %2081 = vmatpush.msra.mxu0 %v1711
        %2082 = vmatpush.msra.mxu0 %v1707
        %2083 = vmatpush.msra.mxu0 %v1703
        %2084 = vmatpush.msra.mxu0 %v1699
        %2085 = vmatpush.msra.mxu0 %v1695
        %2086 = vmatpush.msra.mxu0 %v1691
        %2087 = vmatpush.msra.mxu0 %v1687
        %2088 = vmatpush.msra.mxu0 %v1683
        %2089 = vmatpush.msra.mxu0 %v1679
        %2090 = vmatpush.msra.mxu0 %v1675
        %2091 = vmatpush.msra.mxu0 %v1671
        %2092 = vmatpush.msra.mxu0 %v1667
        %2093 = vmatpush.msra.mxu0 %v1663
        %2094 = vmatpush.msra.mxu0 %v1659
        %2095 = vmatpush.msra.mxu0 %v1655
        %2096 = vmatpush.msra.mxu0 %v1651
        %2097 = vmatmul.f32.gmra.mxu0 %v1793
        %v2098 = vpop.f32.mrf.mxu0
        %v2099 = vadd.f32 %v2079, %v2098
        %2100 = vdwg.mxu0
        %2101 = vmatpush.msra.mxu0 %v1775
        %2102 = vmatpush.msra.mxu0 %v1771
        %2103 = vmatpush.msra.mxu0 %v1767
        %2104 = vmatpush.msra.mxu0 %v1763
        %2105 = vmatpush.msra.mxu0 %v1759
        %2106 = vmatpush.msra.mxu0 %v1755
        %2107 = vmatpush.msra.mxu0 %v1751
        %2108 = vmatpush.msra.mxu0 %v1747
        %2109 = vmatpush.msra.mxu0 %v1743
        %2110 = vmatpush.msra.mxu0 %v1739
        %2111 = vmatpush.msra.mxu0 %v1735
        %2112 = vmatpush.msra.mxu0 %v1731
        %2113 = vmatpush.msra.mxu0 %v1727
        %2114 = vmatpush.msra.mxu0 %v1723
        %2115 = vmatpush.msra.mxu0 %v1719
        %2116 = vmatpush.msra.mxu0 %v1715
        %2117 = vmatmul.f32.gmra.mxu0 %v1796
        %v2118 = vpop.f32.mrf.mxu0
        %v2119 = vadd.f32 %v2099, %v2118
        %2120 = vdwg.mxu0
        %v2121 = vadd.f32 %v1269, %v1879
        %v2122 = vadd.f32 %v1349, %v1959
        %v2123 = vadd.f32 %v1429, %v2039
        %v2124 = vadd.f32 %v1509, %v2119
        %v2125 = vld [vmem:[#allocation6] sm:$0xf]
        %v2127 = vperm.slane %v2125, 0
        %v2128 = vperm.slane %v2125, 1
        %v2129 = vperm.slane %v2125, 2
        %v2130 = vperm.slane %v2125, 3
        %v2135 = vadd.f32 %v2121, %v2127
        %v2136 = vadd.f32 %v2122, %v2128
        %v2137 = vadd.f32 %v2123, %v2129
        %v2138 = vadd.f32 %v2124, %v2130
        %v2139 = vmax.f32 %v2135, 0.0
        %v2140 = vmax.f32 %v2136, 0.0
        %v2141 = vmax.f32 %v2137, 0.0
        %v2142 = vmax.f32 %v2138, 0.0
        %2143 = vst.msk [vmem:[#allocation3] ss:$8 sm:$0xf] %vm291, 0.0
        %2144 = vst.msk [vmem:[#allocation3] ss:$8 sm:$0x0] %vm291, 0.0
        %s2145 = scalar_lea.vmem [#allocation3], 33
        %2146 = vst.msk [vmem:[%s2145] ss:$8 sm:$0xf] %vm291, 0.0
        %2147 = vst.msk [vmem:[%s2145] ss:$8 sm:$0x0] %vm291, 0.0
        %v2152 = vrot.slane %v2139, 7
        %v2153 = vrot.slane %v2140, 7
        %v2154 = vrot.slane %v2141, 7
        %v2155 = vrot.slane %v2142, 7
        %2160 = vst [vmem:[#allocation3] sm:$0xfe] %v2152
        %2161 = vst [vmem:[#allocation3 + $0x8] sm:$0xfe] %v2153
        %2162 = vst [vmem:[#allocation3 + $0x10] sm:$0xfe] %v2154
        %2163 = vst [vmem:[#allocation3 + $0x18] sm:$0xfe] %v2155
        %2164 = vst [vmem:[#allocation3 + $0x20] sm:$0x1] %v2152
        %2165 = vst [vmem:[#allocation3 + $0x28] sm:$0x1] %v2153
        %2166 = vst [vmem:[#allocation3 + $0x30] sm:$0x1] %v2154
        %2167 = vst [vmem:[#allocation3 + $0x38] sm:$0x1] %v2155
        %v2168 = vld [vmem:[#allocation3] sm:$0xff]
        %v2169 = vld [vmem:[#allocation3 + $0x8] sm:$0xff]
        %v2170 = vld [vmem:[#allocation3 + $0x10] sm:$0xff]
        %v2171 = vld [vmem:[#allocation3 + $0x18] sm:$0xff]
        %v2172 = vld [vmem:[#allocation8] sm:$0xff]
        %v2173 = vld [vmem:[#allocation8 + $0x8] sm:$0xff]
        %v2174 = vld [vmem:[#allocation8 + $0x10] sm:$0xff]
        %v2175 = vld [vmem:[#allocation8 + $0x18] sm:$0xff]
        %v2176 = vld [vmem:[#allocation8 + $0x20] sm:$0xff]
        %v2177 = vld [vmem:[#allocation8 + $0x28] sm:$0xff]
        %v2178 = vld [vmem:[#allocation8 + $0x30] sm:$0xff]
        %v2179 = vld [vmem:[#allocation8 + $0x38] sm:$0xff]
        %v2180 = vld [vmem:[#allocation8 + $0x40] sm:$0xff]
        %v2181 = vld [vmem:[#allocation8 + $0x48] sm:$0xff]
        %v2182 = vld [vmem:[#allocation8 + $0x50] sm:$0xff]
        %v2183 = vld [vmem:[#allocation8 + $0x58] sm:$0xff]
        %v2184 = vld [vmem:[#allocation8 + $0x60] sm:$0xff]
        %v2185 = vld [vmem:[#allocation8 + $0x68] sm:$0xff]
        %v2186 = vld [vmem:[#allocation8 + $0x70] sm:$0xff]
        %v2187 = vld [vmem:[#allocation8 + $0x78] sm:$0xff]
        %v2188 = vld [vmem:[#allocation8 + $0x80] sm:$0xff]
        %v2189 = vld [vmem:[#allocation8 + $0x88] sm:$0xff]
        %v2190 = vld [vmem:[#allocation8 + $0x90] sm:$0xff]
        %v2191 = vld [vmem:[#allocation8 + $0x98] sm:$0xff]
        %v2192 = vld [vmem:[#allocation8 + $0xa0] sm:$0xff]
        %v2193 = vld [vmem:[#allocation8 + $0xa8] sm:$0xff]
        %v2194 = vld [vmem:[#allocation8 + $0xb0] sm:$0xff]
        %v2195 = vld [vmem:[#allocation8 + $0xb8] sm:$0xff]
        %v2196 = vld [vmem:[#allocation8 + $0xc0] sm:$0xff]
        %v2197 = vld [vmem:[#allocation8 + $0xc8] sm:$0xff]
        %v2198 = vld [vmem:[#allocation8 + $0xd0] sm:$0xff]
        %v2199 = vld [vmem:[#allocation8 + $0xd8] sm:$0xff]
        %v2200 = vld [vmem:[#allocation8 + $0xe0] sm:$0xff]
        %v2201 = vld [vmem:[#allocation8 + $0xe8] sm:$0xff]
        %v2202 = vld [vmem:[#allocation8 + $0xf0] sm:$0xff]
        %v2203 = vld [vmem:[#allocation8 + $0xf8] sm:$0xff]
        %v2204 = vld [vmem:[#allocation8 + $0x100] sm:$0xff]
        %v2205 = vld [vmem:[#allocation8 + $0x108] sm:$0xff]
        %v2206 = vld [vmem:[#allocation8 + $0x110] sm:$0xff]
        %v2207 = vld [vmem:[#allocation8 + $0x118] sm:$0xff]
        %v2208 = vld [vmem:[#allocation8 + $0x120] sm:$0xff]
        %v2209 = vld [vmem:[#allocation8 + $0x128] sm:$0xff]
        %v2210 = vld [vmem:[#allocation8 + $0x130] sm:$0xff]
        %v2211 = vld [vmem:[#allocation8 + $0x138] sm:$0xff]
        %v2212 = vld [vmem:[#allocation8 + $0x140] sm:$0xff]
        %v2213 = vld [vmem:[#allocation8 + $0x148] sm:$0xff]
        %v2214 = vld [vmem:[#allocation8 + $0x150] sm:$0xff]
        %v2215 = vld [vmem:[#allocation8 + $0x158] sm:$0xff]
        %v2216 = vld [vmem:[#allocation8 + $0x160] sm:$0xff]
        %v2217 = vld [vmem:[#allocation8 + $0x168] sm:$0xff]
        %v2218 = vld [vmem:[#allocation8 + $0x170] sm:$0xff]
        %v2219 = vld [vmem:[#allocation8 + $0x178] sm:$0xff]
        %v2220 = vld [vmem:[#allocation8 + $0x180] sm:$0xff]
        %v2221 = vld [vmem:[#allocation8 + $0x188] sm:$0xff]
        %v2222 = vld [vmem:[#allocation8 + $0x190] sm:$0xff]
        %v2223 = vld [vmem:[#allocation8 + $0x198] sm:$0xff]
        %v2224 = vld [vmem:[#allocation8 + $0x1a0] sm:$0xff]
        %v2225 = vld [vmem:[#allocation8 + $0x1a8] sm:$0xff]
        %v2226 = vld [vmem:[#allocation8 + $0x1b0] sm:$0xff]
        %v2227 = vld [vmem:[#allocation8 + $0x1b8] sm:$0xff]
        %v2228 = vld [vmem:[#allocation8 + $0x1c0] sm:$0xff]
        %v2229 = vld [vmem:[#allocation8 + $0x1c8] sm:$0xff]
        %v2230 = vld [vmem:[#allocation8 + $0x1d0] sm:$0xff]
        %v2231 = vld [vmem:[#allocation8 + $0x1d8] sm:$0xff]
        %v2232 = vld [vmem:[#allocation8 + $0x1e0] sm:$0xff]
        %v2233 = vld [vmem:[#allocation8 + $0x1e8] sm:$0xff]
        %v2234 = vld [vmem:[#allocation8 + $0x1f0] sm:$0xff]
        %v2235 = vld [vmem:[#allocation8 + $0x1f8] sm:$0xff]
        %v2236 = vld [vmem:[#allocation8 + $0x200] sm:$0xff]
        %v2237 = vld [vmem:[#allocation8 + $0x208] sm:$0xff]
        %v2238 = vld [vmem:[#allocation8 + $0x210] sm:$0xff]
        %v2239 = vld [vmem:[#allocation8 + $0x218] sm:$0xff]
        %v2240 = vld [vmem:[#allocation8 + $0x220] sm:$0xff]
        %v2241 = vld [vmem:[#allocation8 + $0x228] sm:$0xff]
        %v2242 = vld [vmem:[#allocation8 + $0x230] sm:$0xff]
        %v2243 = vld [vmem:[#allocation8 + $0x238] sm:$0xff]
        %v2244 = vld [vmem:[#allocation8 + $0x240] sm:$0xff]
        %v2245 = vld [vmem:[#allocation8 + $0x248] sm:$0xff]
        %v2246 = vld [vmem:[#allocation8 + $0x250] sm:$0xff]
        %v2247 = vld [vmem:[#allocation8 + $0x258] sm:$0xff]
        %v2248 = vld [vmem:[#allocation8 + $0x260] sm:$0xff]
        %v2249 = vld [vmem:[#allocation8 + $0x268] sm:$0xff]
        %v2250 = vld [vmem:[#allocation8 + $0x270] sm:$0xff]
        %v2251 = vld [vmem:[#allocation8 + $0x278] sm:$0xff]
        %v2252 = vld [vmem:[#allocation8 + $0x280] sm:$0xff]
        %v2253 = vld [vmem:[#allocation8 + $0x288] sm:$0xff]
        %v2254 = vld [vmem:[#allocation8 + $0x290] sm:$0xff]
        %v2255 = vld [vmem:[#allocation8 + $0x298] sm:$0xff]
        %v2256 = vld [vmem:[#allocation8 + $0x2a0] sm:$0xff]
        %v2257 = vld [vmem:[#allocation8 + $0x2a8] sm:$0xff]
        %v2258 = vld [vmem:[#allocation8 + $0x2b0] sm:$0xff]
        %v2259 = vld [vmem:[#allocation8 + $0x2b8] sm:$0xff]
        %v2260 = vld [vmem:[#allocation8 + $0x2c0] sm:$0xff]
        %v2261 = vld [vmem:[#allocation8 + $0x2c8] sm:$0xff]
        %v2262 = vld [vmem:[#allocation8 + $0x2d0] sm:$0xff]
        %v2263 = vld [vmem:[#allocation8 + $0x2d8] sm:$0xff]
        %v2264 = vld [vmem:[#allocation8 + $0x2e0] sm:$0xff]
        %v2265 = vld [vmem:[#allocation8 + $0x2e8] sm:$0xff]
        %v2266 = vld [vmem:[#allocation8 + $0x2f0] sm:$0xff]
        %v2267 = vld [vmem:[#allocation8 + $0x2f8] sm:$0xff]
        %v2268 = vld [vmem:[#allocation8 + $0x300] sm:$0xff]
        %v2269 = vld [vmem:[#allocation8 + $0x308] sm:$0xff]
        %v2270 = vld [vmem:[#allocation8 + $0x310] sm:$0xff]
        %v2271 = vld [vmem:[#allocation8 + $0x318] sm:$0xff]
        %v2272 = vld [vmem:[#allocation8 + $0x320] sm:$0xff]
        %v2273 = vld [vmem:[#allocation8 + $0x328] sm:$0xff]
        %v2274 = vld [vmem:[#allocation8 + $0x330] sm:$0xff]
        %v2275 = vld [vmem:[#allocation8 + $0x338] sm:$0xff]
        %v2276 = vld [vmem:[#allocation8 + $0x340] sm:$0xff]
        %v2277 = vld [vmem:[#allocation8 + $0x348] sm:$0xff]
        %v2278 = vld [vmem:[#allocation8 + $0x350] sm:$0xff]
        %v2279 = vld [vmem:[#allocation8 + $0x358] sm:$0xff]
        %v2280 = vld [vmem:[#allocation8 + $0x360] sm:$0xff]
        %v2281 = vld [vmem:[#allocation8 + $0x368] sm:$0xff]
        %v2282 = vld [vmem:[#allocation8 + $0x370] sm:$0xff]
        %v2283 = vld [vmem:[#allocation8 + $0x378] sm:$0xff]
        %v2284 = vld [vmem:[#allocation8 + $0x380] sm:$0xff]
        %v2285 = vld [vmem:[#allocation8 + $0x388] sm:$0xff]
        %v2286 = vld [vmem:[#allocation8 + $0x390] sm:$0xff]
        %v2287 = vld [vmem:[#allocation8 + $0x398] sm:$0xff]
        %v2288 = vld [vmem:[#allocation8 + $0x3a0] sm:$0xff]
        %v2289 = vld [vmem:[#allocation8 + $0x3a8] sm:$0xff]
        %v2290 = vld [vmem:[#allocation8 + $0x3b0] sm:$0xff]
        %v2291 = vld [vmem:[#allocation8 + $0x3b8] sm:$0xff]
        %v2292 = vld [vmem:[#allocation8 + $0x3c0] sm:$0xff]
        %v2293 = vld [vmem:[#allocation8 + $0x3c8] sm:$0xff]
        %v2294 = vld [vmem:[#allocation8 + $0x3d0] sm:$0xff]
        %v2295 = vld [vmem:[#allocation8 + $0x3d8] sm:$0xff]
        %v2296 = vld [vmem:[#allocation8 + $0x3e0] sm:$0xff]
        %v2297 = vld [vmem:[#allocation8 + $0x3e8] sm:$0xff]
        %v2298 = vld [vmem:[#allocation8 + $0x3f0] sm:$0xff]
        %v2299 = vld [vmem:[#allocation8 + $0x3f8] sm:$0xff]
        %v2300 = vld [vmem:[#allocation8 + $0x400] sm:$0xff]
        %v2301 = vld [vmem:[#allocation8 + $0x408] sm:$0xff]
        %v2302 = vld [vmem:[#allocation8 + $0x410] sm:$0xff]
        %v2303 = vld [vmem:[#allocation8 + $0x418] sm:$0xff]
        %v2304 = vld [vmem:[#allocation8 + $0x420] sm:$0xff]
        %v2305 = vld [vmem:[#allocation8 + $0x428] sm:$0xff]
        %v2306 = vld [vmem:[#allocation8 + $0x430] sm:$0xff]
        %v2307 = vld [vmem:[#allocation8 + $0x438] sm:$0xff]
        %v2308 = vld [vmem:[#allocation8 + $0x440] sm:$0xff]
        %v2309 = vld [vmem:[#allocation8 + $0x448] sm:$0xff]
        %v2310 = vld [vmem:[#allocation8 + $0x450] sm:$0xff]
        %v2311 = vld [vmem:[#allocation8 + $0x458] sm:$0xff]
        %v2312 = vld [vmem:[#allocation8 + $0x460] sm:$0xff]
        %v2313 = vld [vmem:[#allocation8 + $0x468] sm:$0xff]
        %v2314 = vld [vmem:[#allocation8 + $0x470] sm:$0xff]
        %v2315 = vld [vmem:[#allocation8 + $0x478] sm:$0xff]
        %v2316 = vld [vmem:[#allocation8 + $0x480] sm:$0xff]
        %v2317 = vld [vmem:[#allocation8 + $0x488] sm:$0xff]
        %v2318 = vld [vmem:[#allocation8 + $0x490] sm:$0xff]
        %v2319 = vld [vmem:[#allocation8 + $0x498] sm:$0xff]
        %v2320 = vld [vmem:[#allocation8 + $0x4a0] sm:$0xff]
        %v2321 = vld [vmem:[#allocation8 + $0x4a8] sm:$0xff]
        %v2322 = vld [vmem:[#allocation8 + $0x4b0] sm:$0xff]
        %v2323 = vld [vmem:[#allocation8 + $0x4b8] sm:$0xff]
        %v2324 = vld [vmem:[#allocation8 + $0x4c0] sm:$0xff]
        %v2325 = vld [vmem:[#allocation8 + $0x4c8] sm:$0xff]
        %v2326 = vld [vmem:[#allocation8 + $0x4d0] sm:$0xff]
        %v2327 = vld [vmem:[#allocation8 + $0x4d8] sm:$0xff]
        %v2328 = vld [vmem:[#allocation8 + $0x4e0] sm:$0xff]
        %v2329 = vld [vmem:[#allocation8 + $0x4e8] sm:$0xff]
        %v2330 = vld [vmem:[#allocation8 + $0x4f0] sm:$0xff]
        %v2331 = vld [vmem:[#allocation8 + $0x4f8] sm:$0xff]
        %v2332 = vld [vmem:[#allocation8 + $0x500] sm:$0xff]
        %v2333 = vld [vmem:[#allocation8 + $0x508] sm:$0xff]
        %v2334 = vld [vmem:[#allocation8 + $0x510] sm:$0xff]
        %v2335 = vld [vmem:[#allocation8 + $0x518] sm:$0xff]
        %v2336 = vld [vmem:[#allocation8 + $0x520] sm:$0xff]
        %v2337 = vld [vmem:[#allocation8 + $0x528] sm:$0xff]
        %v2338 = vld [vmem:[#allocation8 + $0x530] sm:$0xff]
        %v2339 = vld [vmem:[#allocation8 + $0x538] sm:$0xff]
        %v2340 = vld [vmem:[#allocation8 + $0x540] sm:$0xff]
        %v2341 = vld [vmem:[#allocation8 + $0x548] sm:$0xff]
        %v2342 = vld [vmem:[#allocation8 + $0x550] sm:$0xff]
        %v2343 = vld [vmem:[#allocation8 + $0x558] sm:$0xff]
        %v2344 = vld [vmem:[#allocation8 + $0x560] sm:$0xff]
        %v2345 = vld [vmem:[#allocation8 + $0x568] sm:$0xff]
        %v2346 = vld [vmem:[#allocation8 + $0x570] sm:$0xff]
        %v2347 = vld [vmem:[#allocation8 + $0x578] sm:$0xff]
        %v2348 = vld [vmem:[#allocation8 + $0x580] sm:$0xff]
        %v2349 = vld [vmem:[#allocation8 + $0x588] sm:$0xff]
        %v2350 = vld [vmem:[#allocation8 + $0x590] sm:$0xff]
        %v2351 = vld [vmem:[#allocation8 + $0x598] sm:$0xff]
        %v2352 = vld [vmem:[#allocation8 + $0x5a0] sm:$0xff]
        %v2353 = vld [vmem:[#allocation8 + $0x5a8] sm:$0xff]
        %v2354 = vld [vmem:[#allocation8 + $0x5b0] sm:$0xff]
        %v2355 = vld [vmem:[#allocation8 + $0x5b8] sm:$0xff]
        %v2356 = vld [vmem:[#allocation8 + $0x5c0] sm:$0xff]
        %v2357 = vld [vmem:[#allocation8 + $0x5c8] sm:$0xff]
        %v2358 = vld [vmem:[#allocation8 + $0x5d0] sm:$0xff]
        %v2359 = vld [vmem:[#allocation8 + $0x5d8] sm:$0xff]
        %v2360 = vld [vmem:[#allocation8 + $0x5e0] sm:$0xff]
        %v2361 = vld [vmem:[#allocation8 + $0x5e8] sm:$0xff]
        %v2362 = vld [vmem:[#allocation8 + $0x5f0] sm:$0xff]
        %v2363 = vld [vmem:[#allocation8 + $0x5f8] sm:$0xff]
        %v2364 = vld [vmem:[#allocation8 + $0x600] sm:$0xff]
        %v2365 = vld [vmem:[#allocation8 + $0x608] sm:$0xff]
        %v2366 = vld [vmem:[#allocation8 + $0x610] sm:$0xff]
        %v2367 = vld [vmem:[#allocation8 + $0x618] sm:$0xff]
        %v2368 = vld [vmem:[#allocation8 + $0x620] sm:$0xff]
        %v2369 = vld [vmem:[#allocation8 + $0x628] sm:$0xff]
        %v2370 = vld [vmem:[#allocation8 + $0x630] sm:$0xff]
        %v2371 = vld [vmem:[#allocation8 + $0x638] sm:$0xff]
        %v2372 = vld [vmem:[#allocation8 + $0x640] sm:$0xff]
        %v2373 = vld [vmem:[#allocation8 + $0x648] sm:$0xff]
        %v2374 = vld [vmem:[#allocation8 + $0x650] sm:$0xff]
        %v2375 = vld [vmem:[#allocation8 + $0x658] sm:$0xff]
        %v2376 = vld [vmem:[#allocation8 + $0x660] sm:$0xff]
        %v2377 = vld [vmem:[#allocation8 + $0x668] sm:$0xff]
        %v2378 = vld [vmem:[#allocation8 + $0x670] sm:$0xff]
        %v2379 = vld [vmem:[#allocation8 + $0x678] sm:$0xff]
        %v2380 = vld [vmem:[#allocation8 + $0x680] sm:$0xff]
        %v2381 = vld [vmem:[#allocation8 + $0x688] sm:$0xff]
        %v2382 = vld [vmem:[#allocation8 + $0x690] sm:$0xff]
        %v2383 = vld [vmem:[#allocation8 + $0x698] sm:$0xff]
        %v2384 = vld [vmem:[#allocation8 + $0x6a0] sm:$0xff]
        %v2385 = vld [vmem:[#allocation8 + $0x6a8] sm:$0xff]
        %v2386 = vld [vmem:[#allocation8 + $0x6b0] sm:$0xff]
        %v2387 = vld [vmem:[#allocation8 + $0x6b8] sm:$0xff]
        %v2388 = vld [vmem:[#allocation8 + $0x6c0] sm:$0xff]
        %v2389 = vld [vmem:[#allocation8 + $0x6c8] sm:$0xff]
        %v2390 = vld [vmem:[#allocation8 + $0x6d0] sm:$0xff]
        %v2391 = vld [vmem:[#allocation8 + $0x6d8] sm:$0xff]
        %v2392 = vld [vmem:[#allocation8 + $0x6e0] sm:$0xff]
        %v2393 = vld [vmem:[#allocation8 + $0x6e8] sm:$0xff]
        %v2394 = vld [vmem:[#allocation8 + $0x6f0] sm:$0xff]
        %v2395 = vld [vmem:[#allocation8 + $0x6f8] sm:$0xff]
        %v2396 = vld [vmem:[#allocation8 + $0x700] sm:$0xff]
        %v2397 = vld [vmem:[#allocation8 + $0x708] sm:$0xff]
        %v2398 = vld [vmem:[#allocation8 + $0x710] sm:$0xff]
        %v2399 = vld [vmem:[#allocation8 + $0x718] sm:$0xff]
        %v2400 = vld [vmem:[#allocation8 + $0x720] sm:$0xff]
        %v2401 = vld [vmem:[#allocation8 + $0x728] sm:$0xff]
        %v2402 = vld [vmem:[#allocation8 + $0x730] sm:$0xff]
        %v2403 = vld [vmem:[#allocation8 + $0x738] sm:$0xff]
        %v2404 = vld [vmem:[#allocation8 + $0x740] sm:$0xff]
        %v2405 = vld [vmem:[#allocation8 + $0x748] sm:$0xff]
        %v2406 = vld [vmem:[#allocation8 + $0x750] sm:$0xff]
        %v2407 = vld [vmem:[#allocation8 + $0x758] sm:$0xff]
        %v2408 = vld [vmem:[#allocation8 + $0x760] sm:$0xff]
        %v2409 = vld [vmem:[#allocation8 + $0x768] sm:$0xff]
        %v2410 = vld [vmem:[#allocation8 + $0x770] sm:$0xff]
        %v2411 = vld [vmem:[#allocation8 + $0x778] sm:$0xff]
        %v2412 = vld [vmem:[#allocation8 + $0x780] sm:$0xff]
        %v2413 = vld [vmem:[#allocation8 + $0x788] sm:$0xff]
        %v2414 = vld [vmem:[#allocation8 + $0x790] sm:$0xff]
        %v2415 = vld [vmem:[#allocation8 + $0x798] sm:$0xff]
        %v2416 = vld [vmem:[#allocation8 + $0x7a0] sm:$0xff]
        %v2417 = vld [vmem:[#allocation8 + $0x7a8] sm:$0xff]
        %v2418 = vld [vmem:[#allocation8 + $0x7b0] sm:$0xff]
        %v2419 = vld [vmem:[#allocation8 + $0x7b8] sm:$0xff]
        %v2420 = vld [vmem:[#allocation8 + $0x7c0] sm:$0xff]
        %v2421 = vld [vmem:[#allocation8 + $0x7c8] sm:$0xff]
        %v2422 = vld [vmem:[#allocation8 + $0x7d0] sm:$0xff]
        %v2423 = vld [vmem:[#allocation8 + $0x7d8] sm:$0xff]
        %v2424 = vld [vmem:[#allocation8 + $0x7e0] sm:$0xff]
        %v2425 = vld [vmem:[#allocation8 + $0x7e8] sm:$0xff]
        %v2426 = vld [vmem:[#allocation8 + $0x7f0] sm:$0xff]
        %v2427 = vld [vmem:[#allocation8 + $0x7f8] sm:$0xff]
        %v2428 = vld [vmem:[#allocation3] sm:$0xfe]
        %v2429 = vld [vmem:[#allocation3 + $0x8] sm:$0xfe]
        %v2430 = vld [vmem:[#allocation3 + $0x10] sm:$0xfe]
        %v2431 = vld [vmem:[#allocation3 + $0x18] sm:$0xfe]
        %v2432 = vld [vmem:[#allocation3 + $0x20] sm:$0x1]
        %v2433 = vld [vmem:[#allocation3 + $0x28] sm:$0x1]
        %v2434 = vld [vmem:[#allocation3 + $0x30] sm:$0x1]
        %v2435 = vld [vmem:[#allocation3 + $0x38] sm:$0x1]
        %s2436 = scalar_lea.vmem [#allocation8], 2048
        %v2437 = vld [vmem:[%s2436] sm:$0xff]
        %v2438 = vld [vmem:[%s2436 + $0x8] sm:$0xff]
        %v2439 = vld [vmem:[%s2436 + $0x10] sm:$0xff]
        %v2440 = vld [vmem:[%s2436 + $0x18] sm:$0xff]
        %v2441 = vld [vmem:[%s2436 + $0x20] sm:$0xff]
        %v2442 = vld [vmem:[%s2436 + $0x28] sm:$0xff]
        %v2443 = vld [vmem:[%s2436 + $0x30] sm:$0xff]
        %v2444 = vld [vmem:[%s2436 + $0x38] sm:$0xff]
        %v2445 = vld [vmem:[%s2436 + $0x40] sm:$0xff]
        %v2446 = vld [vmem:[%s2436 + $0x48] sm:$0xff]
        %v2447 = vld [vmem:[%s2436 + $0x50] sm:$0xff]
        %v2448 = vld [vmem:[%s2436 + $0x58] sm:$0xff]
        %v2449 = vld [vmem:[%s2436 + $0x60] sm:$0xff]
        %v2450 = vld [vmem:[%s2436 + $0x68] sm:$0xff]
        %v2451 = vld [vmem:[%s2436 + $0x70] sm:$0xff]
        %v2452 = vld [vmem:[%s2436 + $0x78] sm:$0xff]
        %v2453 = vld [vmem:[%s2436 + $0x80] sm:$0xff]
        %v2454 = vld [vmem:[%s2436 + $0x88] sm:$0xff]
        %v2455 = vld [vmem:[%s2436 + $0x90] sm:$0xff]
        %v2456 = vld [vmem:[%s2436 + $0x98] sm:$0xff]
        %v2457 = vld [vmem:[%s2436 + $0xa0] sm:$0xff]
        %v2458 = vld [vmem:[%s2436 + $0xa8] sm:$0xff]
        %v2459 = vld [vmem:[%s2436 + $0xb0] sm:$0xff]
        %v2460 = vld [vmem:[%s2436 + $0xb8] sm:$0xff]
        %v2461 = vld [vmem:[%s2436 + $0xc0] sm:$0xff]
        %v2462 = vld [vmem:[%s2436 + $0xc8] sm:$0xff]
        %v2463 = vld [vmem:[%s2436 + $0xd0] sm:$0xff]
        %v2464 = vld [vmem:[%s2436 + $0xd8] sm:$0xff]
        %v2465 = vld [vmem:[%s2436 + $0xe0] sm:$0xff]
        %v2466 = vld [vmem:[%s2436 + $0xe8] sm:$0xff]
        %v2467 = vld [vmem:[%s2436 + $0xf0] sm:$0xff]
        %v2468 = vld [vmem:[%s2436 + $0xf8] sm:$0xff]
        %v2469 = vld [vmem:[%s2436 + $0x100] sm:$0xff]
        %v2470 = vld [vmem:[%s2436 + $0x108] sm:$0xff]
        %v2471 = vld [vmem:[%s2436 + $0x110] sm:$0xff]
        %v2472 = vld [vmem:[%s2436 + $0x118] sm:$0xff]
        %v2473 = vld [vmem:[%s2436 + $0x120] sm:$0xff]
        %v2474 = vld [vmem:[%s2436 + $0x128] sm:$0xff]
        %v2475 = vld [vmem:[%s2436 + $0x130] sm:$0xff]
        %v2476 = vld [vmem:[%s2436 + $0x138] sm:$0xff]
        %v2477 = vld [vmem:[%s2436 + $0x140] sm:$0xff]
        %v2478 = vld [vmem:[%s2436 + $0x148] sm:$0xff]
        %v2479 = vld [vmem:[%s2436 + $0x150] sm:$0xff]
        %v2480 = vld [vmem:[%s2436 + $0x158] sm:$0xff]
        %v2481 = vld [vmem:[%s2436 + $0x160] sm:$0xff]
        %v2482 = vld [vmem:[%s2436 + $0x168] sm:$0xff]
        %v2483 = vld [vmem:[%s2436 + $0x170] sm:$0xff]
        %v2484 = vld [vmem:[%s2436 + $0x178] sm:$0xff]
        %v2485 = vld [vmem:[%s2436 + $0x180] sm:$0xff]
        %v2486 = vld [vmem:[%s2436 + $0x188] sm:$0xff]
        %v2487 = vld [vmem:[%s2436 + $0x190] sm:$0xff]
        %v2488 = vld [vmem:[%s2436 + $0x198] sm:$0xff]
        %v2489 = vld [vmem:[%s2436 + $0x1a0] sm:$0xff]
        %v2490 = vld [vmem:[%s2436 + $0x1a8] sm:$0xff]
        %v2491 = vld [vmem:[%s2436 + $0x1b0] sm:$0xff]
        %v2492 = vld [vmem:[%s2436 + $0x1b8] sm:$0xff]
        %v2493 = vld [vmem:[%s2436 + $0x1c0] sm:$0xff]
        %v2494 = vld [vmem:[%s2436 + $0x1c8] sm:$0xff]
        %v2495 = vld [vmem:[%s2436 + $0x1d0] sm:$0xff]
        %v2496 = vld [vmem:[%s2436 + $0x1d8] sm:$0xff]
        %v2497 = vld [vmem:[%s2436 + $0x1e0] sm:$0xff]
        %v2498 = vld [vmem:[%s2436 + $0x1e8] sm:$0xff]
        %v2499 = vld [vmem:[%s2436 + $0x1f0] sm:$0xff]
        %v2500 = vld [vmem:[%s2436 + $0x1f8] sm:$0xff]
        %v2501 = vld [vmem:[%s2436 + $0x200] sm:$0xff]
        %v2502 = vld [vmem:[%s2436 + $0x208] sm:$0xff]
        %v2503 = vld [vmem:[%s2436 + $0x210] sm:$0xff]
        %v2504 = vld [vmem:[%s2436 + $0x218] sm:$0xff]
        %v2505 = vld [vmem:[%s2436 + $0x220] sm:$0xff]
        %v2506 = vld [vmem:[%s2436 + $0x228] sm:$0xff]
        %v2507 = vld [vmem:[%s2436 + $0x230] sm:$0xff]
        %v2508 = vld [vmem:[%s2436 + $0x238] sm:$0xff]
        %v2509 = vld [vmem:[%s2436 + $0x240] sm:$0xff]
        %v2510 = vld [vmem:[%s2436 + $0x248] sm:$0xff]
        %v2511 = vld [vmem:[%s2436 + $0x250] sm:$0xff]
        %v2512 = vld [vmem:[%s2436 + $0x258] sm:$0xff]
        %v2513 = vld [vmem:[%s2436 + $0x260] sm:$0xff]
        %v2514 = vld [vmem:[%s2436 + $0x268] sm:$0xff]
        %v2515 = vld [vmem:[%s2436 + $0x270] sm:$0xff]
        %v2516 = vld [vmem:[%s2436 + $0x278] sm:$0xff]
        %v2517 = vld [vmem:[%s2436 + $0x280] sm:$0xff]
        %v2518 = vld [vmem:[%s2436 + $0x288] sm:$0xff]
        %v2519 = vld [vmem:[%s2436 + $0x290] sm:$0xff]
        %v2520 = vld [vmem:[%s2436 + $0x298] sm:$0xff]
        %v2521 = vld [vmem:[%s2436 + $0x2a0] sm:$0xff]
        %v2522 = vld [vmem:[%s2436 + $0x2a8] sm:$0xff]
        %v2523 = vld [vmem:[%s2436 + $0x2b0] sm:$0xff]
        %v2524 = vld [vmem:[%s2436 + $0x2b8] sm:$0xff]
        %v2525 = vld [vmem:[%s2436 + $0x2c0] sm:$0xff]
        %v2526 = vld [vmem:[%s2436 + $0x2c8] sm:$0xff]
        %v2527 = vld [vmem:[%s2436 + $0x2d0] sm:$0xff]
        %v2528 = vld [vmem:[%s2436 + $0x2d8] sm:$0xff]
        %v2529 = vld [vmem:[%s2436 + $0x2e0] sm:$0xff]
        %v2530 = vld [vmem:[%s2436 + $0x2e8] sm:$0xff]
        %v2531 = vld [vmem:[%s2436 + $0x2f0] sm:$0xff]
        %v2532 = vld [vmem:[%s2436 + $0x2f8] sm:$0xff]
        %v2533 = vld [vmem:[%s2436 + $0x300] sm:$0xff]
        %v2534 = vld [vmem:[%s2436 + $0x308] sm:$0xff]
        %v2535 = vld [vmem:[%s2436 + $0x310] sm:$0xff]
        %v2536 = vld [vmem:[%s2436 + $0x318] sm:$0xff]
        %v2537 = vld [vmem:[%s2436 + $0x320] sm:$0xff]
        %v2538 = vld [vmem:[%s2436 + $0x328] sm:$0xff]
        %v2539 = vld [vmem:[%s2436 + $0x330] sm:$0xff]
        %v2540 = vld [vmem:[%s2436 + $0x338] sm:$0xff]
        %v2541 = vld [vmem:[%s2436 + $0x340] sm:$0xff]
        %v2542 = vld [vmem:[%s2436 + $0x348] sm:$0xff]
        %v2543 = vld [vmem:[%s2436 + $0x350] sm:$0xff]
        %v2544 = vld [vmem:[%s2436 + $0x358] sm:$0xff]
        %v2545 = vld [vmem:[%s2436 + $0x360] sm:$0xff]
        %v2546 = vld [vmem:[%s2436 + $0x368] sm:$0xff]
        %v2547 = vld [vmem:[%s2436 + $0x370] sm:$0xff]
        %v2548 = vld [vmem:[%s2436 + $0x378] sm:$0xff]
        %v2549 = vld [vmem:[%s2436 + $0x380] sm:$0xff]
        %v2550 = vld [vmem:[%s2436 + $0x388] sm:$0xff]
        %v2551 = vld [vmem:[%s2436 + $0x390] sm:$0xff]
        %v2552 = vld [vmem:[%s2436 + $0x398] sm:$0xff]
        %v2553 = vld [vmem:[%s2436 + $0x3a0] sm:$0xff]
        %v2554 = vld [vmem:[%s2436 + $0x3a8] sm:$0xff]
        %v2555 = vld [vmem:[%s2436 + $0x3b0] sm:$0xff]
        %v2556 = vld [vmem:[%s2436 + $0x3b8] sm:$0xff]
        %v2557 = vld [vmem:[%s2436 + $0x3c0] sm:$0xff]
        %v2558 = vld [vmem:[%s2436 + $0x3c8] sm:$0xff]
        %v2559 = vld [vmem:[%s2436 + $0x3d0] sm:$0xff]
        %v2560 = vld [vmem:[%s2436 + $0x3d8] sm:$0xff]
        %v2561 = vld [vmem:[%s2436 + $0x3e0] sm:$0xff]
        %v2562 = vld [vmem:[%s2436 + $0x3e8] sm:$0xff]
        %v2563 = vld [vmem:[%s2436 + $0x3f0] sm:$0xff]
        %v2564 = vld [vmem:[%s2436 + $0x3f8] sm:$0xff]
        %v2565 = vld [vmem:[%s2436 + $0x400] sm:$0xff]
        %v2566 = vld [vmem:[%s2436 + $0x408] sm:$0xff]
        %v2567 = vld [vmem:[%s2436 + $0x410] sm:$0xff]
        %v2568 = vld [vmem:[%s2436 + $0x418] sm:$0xff]
        %v2569 = vld [vmem:[%s2436 + $0x420] sm:$0xff]
        %v2570 = vld [vmem:[%s2436 + $0x428] sm:$0xff]
        %v2571 = vld [vmem:[%s2436 + $0x430] sm:$0xff]
        %v2572 = vld [vmem:[%s2436 + $0x438] sm:$0xff]
        %v2573 = vld [vmem:[%s2436 + $0x440] sm:$0xff]
        %v2574 = vld [vmem:[%s2436 + $0x448] sm:$0xff]
        %v2575 = vld [vmem:[%s2436 + $0x450] sm:$0xff]
        %v2576 = vld [vmem:[%s2436 + $0x458] sm:$0xff]
        %v2577 = vld [vmem:[%s2436 + $0x460] sm:$0xff]
        %v2578 = vld [vmem:[%s2436 + $0x468] sm:$0xff]
        %v2579 = vld [vmem:[%s2436 + $0x470] sm:$0xff]
        %v2580 = vld [vmem:[%s2436 + $0x478] sm:$0xff]
        %v2581 = vld [vmem:[%s2436 + $0x480] sm:$0xff]
        %v2582 = vld [vmem:[%s2436 + $0x488] sm:$0xff]
        %v2583 = vld [vmem:[%s2436 + $0x490] sm:$0xff]
        %v2584 = vld [vmem:[%s2436 + $0x498] sm:$0xff]
        %v2585 = vld [vmem:[%s2436 + $0x4a0] sm:$0xff]
        %v2586 = vld [vmem:[%s2436 + $0x4a8] sm:$0xff]
        %v2587 = vld [vmem:[%s2436 + $0x4b0] sm:$0xff]
        %v2588 = vld [vmem:[%s2436 + $0x4b8] sm:$0xff]
        %v2589 = vld [vmem:[%s2436 + $0x4c0] sm:$0xff]
        %v2590 = vld [vmem:[%s2436 + $0x4c8] sm:$0xff]
        %v2591 = vld [vmem:[%s2436 + $0x4d0] sm:$0xff]
        %v2592 = vld [vmem:[%s2436 + $0x4d8] sm:$0xff]
        %v2593 = vld [vmem:[%s2436 + $0x4e0] sm:$0xff]
        %v2594 = vld [vmem:[%s2436 + $0x4e8] sm:$0xff]
        %v2595 = vld [vmem:[%s2436 + $0x4f0] sm:$0xff]
        %v2596 = vld [vmem:[%s2436 + $0x4f8] sm:$0xff]
        %v2597 = vld [vmem:[%s2436 + $0x500] sm:$0xff]
        %v2598 = vld [vmem:[%s2436 + $0x508] sm:$0xff]
        %v2599 = vld [vmem:[%s2436 + $0x510] sm:$0xff]
        %v2600 = vld [vmem:[%s2436 + $0x518] sm:$0xff]
        %v2601 = vld [vmem:[%s2436 + $0x520] sm:$0xff]
        %v2602 = vld [vmem:[%s2436 + $0x528] sm:$0xff]
        %v2603 = vld [vmem:[%s2436 + $0x530] sm:$0xff]
        %v2604 = vld [vmem:[%s2436 + $0x538] sm:$0xff]
        %v2605 = vld [vmem:[%s2436 + $0x540] sm:$0xff]
        %v2606 = vld [vmem:[%s2436 + $0x548] sm:$0xff]
        %v2607 = vld [vmem:[%s2436 + $0x550] sm:$0xff]
        %v2608 = vld [vmem:[%s2436 + $0x558] sm:$0xff]
        %v2609 = vld [vmem:[%s2436 + $0x560] sm:$0xff]
        %v2610 = vld [vmem:[%s2436 + $0x568] sm:$0xff]
        %v2611 = vld [vmem:[%s2436 + $0x570] sm:$0xff]
        %v2612 = vld [vmem:[%s2436 + $0x578] sm:$0xff]
        %v2613 = vld [vmem:[%s2436 + $0x580] sm:$0xff]
        %v2614 = vld [vmem:[%s2436 + $0x588] sm:$0xff]
        %v2615 = vld [vmem:[%s2436 + $0x590] sm:$0xff]
        %v2616 = vld [vmem:[%s2436 + $0x598] sm:$0xff]
        %v2617 = vld [vmem:[%s2436 + $0x5a0] sm:$0xff]
        %v2618 = vld [vmem:[%s2436 + $0x5a8] sm:$0xff]
        %v2619 = vld [vmem:[%s2436 + $0x5b0] sm:$0xff]
        %v2620 = vld [vmem:[%s2436 + $0x5b8] sm:$0xff]
        %v2621 = vld [vmem:[%s2436 + $0x5c0] sm:$0xff]
        %v2622 = vld [vmem:[%s2436 + $0x5c8] sm:$0xff]
        %v2623 = vld [vmem:[%s2436 + $0x5d0] sm:$0xff]
        %v2624 = vld [vmem:[%s2436 + $0x5d8] sm:$0xff]
        %v2625 = vld [vmem:[%s2436 + $0x5e0] sm:$0xff]
        %v2626 = vld [vmem:[%s2436 + $0x5e8] sm:$0xff]
        %v2627 = vld [vmem:[%s2436 + $0x5f0] sm:$0xff]
        %v2628 = vld [vmem:[%s2436 + $0x5f8] sm:$0xff]
        %v2629 = vld [vmem:[%s2436 + $0x600] sm:$0xff]
        %v2630 = vld [vmem:[%s2436 + $0x608] sm:$0xff]
        %v2631 = vld [vmem:[%s2436 + $0x610] sm:$0xff]
        %v2632 = vld [vmem:[%s2436 + $0x618] sm:$0xff]
        %v2633 = vld [vmem:[%s2436 + $0x620] sm:$0xff]
        %v2634 = vld [vmem:[%s2436 + $0x628] sm:$0xff]
        %v2635 = vld [vmem:[%s2436 + $0x630] sm:$0xff]
        %v2636 = vld [vmem:[%s2436 + $0x638] sm:$0xff]
        %v2637 = vld [vmem:[%s2436 + $0x640] sm:$0xff]
        %v2638 = vld [vmem:[%s2436 + $0x648] sm:$0xff]
        %v2639 = vld [vmem:[%s2436 + $0x650] sm:$0xff]
        %v2640 = vld [vmem:[%s2436 + $0x658] sm:$0xff]
        %v2641 = vld [vmem:[%s2436 + $0x660] sm:$0xff]
        %v2642 = vld [vmem:[%s2436 + $0x668] sm:$0xff]
        %v2643 = vld [vmem:[%s2436 + $0x670] sm:$0xff]
        %v2644 = vld [vmem:[%s2436 + $0x678] sm:$0xff]
        %v2645 = vld [vmem:[%s2436 + $0x680] sm:$0xff]
        %v2646 = vld [vmem:[%s2436 + $0x688] sm:$0xff]
        %v2647 = vld [vmem:[%s2436 + $0x690] sm:$0xff]
        %v2648 = vld [vmem:[%s2436 + $0x698] sm:$0xff]
        %v2649 = vld [vmem:[%s2436 + $0x6a0] sm:$0xff]
        %v2650 = vld [vmem:[%s2436 + $0x6a8] sm:$0xff]
        %v2651 = vld [vmem:[%s2436 + $0x6b0] sm:$0xff]
        %v2652 = vld [vmem:[%s2436 + $0x6b8] sm:$0xff]
        %v2653 = vld [vmem:[%s2436 + $0x6c0] sm:$0xff]
        %v2654 = vld [vmem:[%s2436 + $0x6c8] sm:$0xff]
        %v2655 = vld [vmem:[%s2436 + $0x6d0] sm:$0xff]
        %v2656 = vld [vmem:[%s2436 + $0x6d8] sm:$0xff]
        %v2657 = vld [vmem:[%s2436 + $0x6e0] sm:$0xff]
        %v2658 = vld [vmem:[%s2436 + $0x6e8] sm:$0xff]
        %v2659 = vld [vmem:[%s2436 + $0x6f0] sm:$0xff]
        %v2660 = vld [vmem:[%s2436 + $0x6f8] sm:$0xff]
        %v2661 = vld [vmem:[%s2436 + $0x700] sm:$0xff]
        %v2662 = vld [vmem:[%s2436 + $0x708] sm:$0xff]
        %v2663 = vld [vmem:[%s2436 + $0x710] sm:$0xff]
        %v2664 = vld [vmem:[%s2436 + $0x718] sm:$0xff]
        %v2665 = vld [vmem:[%s2436 + $0x720] sm:$0xff]
        %v2666 = vld [vmem:[%s2436 + $0x728] sm:$0xff]
        %v2667 = vld [vmem:[%s2436 + $0x730] sm:$0xff]
        %v2668 = vld [vmem:[%s2436 + $0x738] sm:$0xff]
        %v2669 = vld [vmem:[%s2436 + $0x740] sm:$0xff]
        %v2670 = vld [vmem:[%s2436 + $0x748] sm:$0xff]
        %v2671 = vld [vmem:[%s2436 + $0x750] sm:$0xff]
        %v2672 = vld [vmem:[%s2436 + $0x758] sm:$0xff]
        %v2673 = vld [vmem:[%s2436 + $0x760] sm:$0xff]
        %v2674 = vld [vmem:[%s2436 + $0x768] sm:$0xff]
        %v2675 = vld [vmem:[%s2436 + $0x770] sm:$0xff]
        %v2676 = vld [vmem:[%s2436 + $0x778] sm:$0xff]
        %v2677 = vld [vmem:[%s2436 + $0x780] sm:$0xff]
        %v2678 = vld [vmem:[%s2436 + $0x788] sm:$0xff]
        %v2679 = vld [vmem:[%s2436 + $0x790] sm:$0xff]
        %v2680 = vld [vmem:[%s2436 + $0x798] sm:$0xff]
        %v2681 = vld [vmem:[%s2436 + $0x7a0] sm:$0xff]
        %v2682 = vld [vmem:[%s2436 + $0x7a8] sm:$0xff]
        %v2683 = vld [vmem:[%s2436 + $0x7b0] sm:$0xff]
        %v2684 = vld [vmem:[%s2436 + $0x7b8] sm:$0xff]
        %v2685 = vld [vmem:[%s2436 + $0x7c0] sm:$0xff]
        %v2686 = vld [vmem:[%s2436 + $0x7c8] sm:$0xff]
        %v2687 = vld [vmem:[%s2436 + $0x7d0] sm:$0xff]
        %v2688 = vld [vmem:[%s2436 + $0x7d8] sm:$0xff]
        %v2689 = vld [vmem:[%s2436 + $0x7e0] sm:$0xff]
        %v2690 = vld [vmem:[%s2436 + $0x7e8] sm:$0xff]
        %v2691 = vld [vmem:[%s2436 + $0x7f0] sm:$0xff]
        %v2692 = vld [vmem:[%s2436 + $0x7f8] sm:$0xff]
        %v2701 = vrot.slane %v2428, 1
        %v2702 = vrot.slane %v2432, 1
        %v2703 = vsel %vm854, %v2701, %v2702
        %v2704 = vrot.slane %v2429, 1
        %v2705 = vrot.slane %v2433, 1
        %v2706 = vsel %vm854, %v2704, %v2705
        %v2707 = vrot.slane %v2430, 1
        %v2708 = vrot.slane %v2434, 1
        %v2709 = vsel %vm854, %v2707, %v2708
        %v2710 = vrot.slane %v2431, 1
        %v2711 = vrot.slane %v2435, 1
        %v2712 = vsel %vm854, %v2710, %v2711
        %2717 = vmatpush.msra.mxu0 %v2497
        %2718 = vmatpush.msra.mxu0 %v2493
        %2719 = vmatpush.msra.mxu0 %v2489
        %2720 = vmatpush.msra.mxu0 %v2485
        %2721 = vmatpush.msra.mxu0 %v2481
        %2722 = vmatpush.msra.mxu0 %v2477
        %2723 = vmatpush.msra.mxu0 %v2473
        %2724 = vmatpush.msra.mxu0 %v2469
        %2725 = vmatpush.msra.mxu0 %v2465
        %2726 = vmatpush.msra.mxu0 %v2461
        %2727 = vmatpush.msra.mxu0 %v2457
        %2728 = vmatpush.msra.mxu0 %v2453
        %2729 = vmatpush.msra.mxu0 %v2449
        %2730 = vmatpush.msra.mxu0 %v2445
        %2731 = vmatpush.msra.mxu0 %v2441
        %2732 = vmatpush.msra.mxu0 %v2437
        %2733 = vmatmul.f32.gmra.mxu0 %v2703
        %v2734 = vpop.f32.mrf.mxu0
        %v2735 = vadd.f32 0.0, %v2734
        %2736 = vdwg.mxu0
        %2737 = vmatpush.msra.mxu0 %v2561
        %2738 = vmatpush.msra.mxu0 %v2557
        %2739 = vmatpush.msra.mxu0 %v2553
        %2740 = vmatpush.msra.mxu0 %v2549
        %2741 = vmatpush.msra.mxu0 %v2545
        %2742 = vmatpush.msra.mxu0 %v2541
        %2743 = vmatpush.msra.mxu0 %v2537
        %2744 = vmatpush.msra.mxu0 %v2533
        %2745 = vmatpush.msra.mxu0 %v2529
        %2746 = vmatpush.msra.mxu0 %v2525
        %2747 = vmatpush.msra.mxu0 %v2521
        %2748 = vmatpush.msra.mxu0 %v2517
        %2749 = vmatpush.msra.mxu0 %v2513
        %2750 = vmatpush.msra.mxu0 %v2509
        %2751 = vmatpush.msra.mxu0 %v2505
        %2752 = vmatpush.msra.mxu0 %v2501
        %2753 = vmatmul.f32.gmra.mxu0 %v2706
        %v2754 = vpop.f32.mrf.mxu0
        %v2755 = vadd.f32 %v2735, %v2754
        %2756 = vdwg.mxu0
        %2757 = vmatpush.msra.mxu0 %v2625
        %2758 = vmatpush.msra.mxu0 %v2621
        %2759 = vmatpush.msra.mxu0 %v2617
        %2760 = vmatpush.msra.mxu0 %v2613
        %2761 = vmatpush.msra.mxu0 %v2609
        %2762 = vmatpush.msra.mxu0 %v2605
        %2763 = vmatpush.msra.mxu0 %v2601
        %2764 = vmatpush.msra.mxu0 %v2597
        %2765 = vmatpush.msra.mxu0 %v2593
        %2766 = vmatpush.msra.mxu0 %v2589
        %2767 = vmatpush.msra.mxu0 %v2585
        %2768 = vmatpush.msra.mxu0 %v2581
        %2769 = vmatpush.msra.mxu0 %v2577
        %2770 = vmatpush.msra.mxu0 %v2573
        %2771 = vmatpush.msra.mxu0 %v2569
        %2772 = vmatpush.msra.mxu0 %v2565
        %2773 = vmatmul.f32.gmra.mxu0 %v2709
        %v2774 = vpop.f32.mrf.mxu0
        %v2775 = vadd.f32 %v2755, %v2774
        %2776 = vdwg.mxu0
        %2777 = vmatpush.msra.mxu0 %v2689
        %2778 = vmatpush.msra.mxu0 %v2685
        %2779 = vmatpush.msra.mxu0 %v2681
        %2780 = vmatpush.msra.mxu0 %v2677
        %2781 = vmatpush.msra.mxu0 %v2673
        %2782 = vmatpush.msra.mxu0 %v2669
        %2783 = vmatpush.msra.mxu0 %v2665
        %2784 = vmatpush.msra.mxu0 %v2661
        %2785 = vmatpush.msra.mxu0 %v2657
        %2786 = vmatpush.msra.mxu0 %v2653
        %2787 = vmatpush.msra.mxu0 %v2649
        %2788 = vmatpush.msra.mxu0 %v2645
        %2789 = vmatpush.msra.mxu0 %v2641
        %2790 = vmatpush.msra.mxu0 %v2637
        %2791 = vmatpush.msra.mxu0 %v2633
        %2792 = vmatpush.msra.mxu0 %v2629
        %2793 = vmatmul.f32.gmra.mxu0 %v2712
        %v2794 = vpop.f32.mrf.mxu0
        %v2795 = vadd.f32 %v2775, %v2794
        %2796 = vdwg.mxu0
        %2797 = vmatpush.msra.mxu0 %v2498
        %2798 = vmatpush.msra.mxu0 %v2494
        %2799 = vmatpush.msra.mxu0 %v2490
        %2800 = vmatpush.msra.mxu0 %v2486
        %2801 = vmatpush.msra.mxu0 %v2482
        %2802 = vmatpush.msra.mxu0 %v2478
        %2803 = vmatpush.msra.mxu0 %v2474
        %2804 = vmatpush.msra.mxu0 %v2470
        %2805 = vmatpush.msra.mxu0 %v2466
        %2806 = vmatpush.msra.mxu0 %v2462
        %2807 = vmatpush.msra.mxu0 %v2458
        %2808 = vmatpush.msra.mxu0 %v2454
        %2809 = vmatpush.msra.mxu0 %v2450
        %2810 = vmatpush.msra.mxu0 %v2446
        %2811 = vmatpush.msra.mxu0 %v2442
        %2812 = vmatpush.msra.mxu0 %v2438
        %2813 = vmatmul.f32.gmra.mxu0 %v2703
        %v2814 = vpop.f32.mrf.mxu0
        %v2815 = vadd.f32 0.0, %v2814
        %2816 = vdwg.mxu0
        %2817 = vmatpush.msra.mxu0 %v2562
        %2818 = vmatpush.msra.mxu0 %v2558
        %2819 = vmatpush.msra.mxu0 %v2554
        %2820 = vmatpush.msra.mxu0 %v2550
        %2821 = vmatpush.msra.mxu0 %v2546
        %2822 = vmatpush.msra.mxu0 %v2542
        %2823 = vmatpush.msra.mxu0 %v2538
        %2824 = vmatpush.msra.mxu0 %v2534
        %2825 = vmatpush.msra.mxu0 %v2530
        %2826 = vmatpush.msra.mxu0 %v2526
        %2827 = vmatpush.msra.mxu0 %v2522
        %2828 = vmatpush.msra.mxu0 %v2518
        %2829 = vmatpush.msra.mxu0 %v2514
        %2830 = vmatpush.msra.mxu0 %v2510
        %2831 = vmatpush.msra.mxu0 %v2506
        %2832 = vmatpush.msra.mxu0 %v2502
        %2833 = vmatmul.f32.gmra.mxu0 %v2706
        %v2834 = vpop.f32.mrf.mxu0
        %v2835 = vadd.f32 %v2815, %v2834
        %2836 = vdwg.mxu0
        %2837 = vmatpush.msra.mxu0 %v2626
        %2838 = vmatpush.msra.mxu0 %v2622
        %2839 = vmatpush.msra.mxu0 %v2618
        %2840 = vmatpush.msra.mxu0 %v2614
        %2841 = vmatpush.msra.mxu0 %v2610
        %2842 = vmatpush.msra.mxu0 %v2606
        %2843 = vmatpush.msra.mxu0 %v2602
        %2844 = vmatpush.msra.mxu0 %v2598
        %2845 = vmatpush.msra.mxu0 %v2594
        %2846 = vmatpush.msra.mxu0 %v2590
        %2847 = vmatpush.msra.mxu0 %v2586
        %2848 = vmatpush.msra.mxu0 %v2582
        %2849 = vmatpush.msra.mxu0 %v2578
        %2850 = vmatpush.msra.mxu0 %v2574
        %2851 = vmatpush.msra.mxu0 %v2570
        %2852 = vmatpush.msra.mxu0 %v2566
        %2853 = vmatmul.f32.gmra.mxu0 %v2709
        %v2854 = vpop.f32.mrf.mxu0
        %v2855 = vadd.f32 %v2835, %v2854
        %2856 = vdwg.mxu0
        %2857 = vmatpush.msra.mxu0 %v2690
        %2858 = vmatpush.msra.mxu0 %v2686
        %2859 = vmatpush.msra.mxu0 %v2682
        %2860 = vmatpush.msra.mxu0 %v2678
        %2861 = vmatpush.msra.mxu0 %v2674
        %2862 = vmatpush.msra.mxu0 %v2670
        %2863 = vmatpush.msra.mxu0 %v2666
        %2864 = vmatpush.msra.mxu0 %v2662
        %2865 = vmatpush.msra.mxu0 %v2658
        %2866 = vmatpush.msra.mxu0 %v2654
        %2867 = vmatpush.msra.mxu0 %v2650
        %2868 = vmatpush.msra.mxu0 %v2646
        %2869 = vmatpush.msra.mxu0 %v2642
        %2870 = vmatpush.msra.mxu0 %v2638
        %2871 = vmatpush.msra.mxu0 %v2634
        %2872 = vmatpush.msra.mxu0 %v2630
        %2873 = vmatmul.f32.gmra.mxu0 %v2712
        %v2874 = vpop.f32.mrf.mxu0
        %v2875 = vadd.f32 %v2855, %v2874
        %2876 = vdwg.mxu0
        %2877 = vmatpush.msra.mxu0 %v2499
        %2878 = vmatpush.msra.mxu0 %v2495
        %2879 = vmatpush.msra.mxu0 %v2491
        %2880 = vmatpush.msra.mxu0 %v2487
        %2881 = vmatpush.msra.mxu0 %v2483
        %2882 = vmatpush.msra.mxu0 %v2479
        %2883 = vmatpush.msra.mxu0 %v2475
        %2884 = vmatpush.msra.mxu0 %v2471
        %2885 = vmatpush.msra.mxu0 %v2467
        %2886 = vmatpush.msra.mxu0 %v2463
        %2887 = vmatpush.msra.mxu0 %v2459
        %2888 = vmatpush.msra.mxu0 %v2455
        %2889 = vmatpush.msra.mxu0 %v2451
        %2890 = vmatpush.msra.mxu0 %v2447
        %2891 = vmatpush.msra.mxu0 %v2443
        %2892 = vmatpush.msra.mxu0 %v2439
        %2893 = vmatmul.f32.gmra.mxu0 %v2703
        %v2894 = vpop.f32.mrf.mxu0
        %v2895 = vadd.f32 0.0, %v2894
        %2896 = vdwg.mxu0
        %2897 = vmatpush.msra.mxu0 %v2563
        %2898 = vmatpush.msra.mxu0 %v2559
        %2899 = vmatpush.msra.mxu0 %v2555
        %2900 = vmatpush.msra.mxu0 %v2551
        %2901 = vmatpush.msra.mxu0 %v2547
        %2902 = vmatpush.msra.mxu0 %v2543
        %2903 = vmatpush.msra.mxu0 %v2539
        %2904 = vmatpush.msra.mxu0 %v2535
        %2905 = vmatpush.msra.mxu0 %v2531
        %2906 = vmatpush.msra.mxu0 %v2527
        %2907 = vmatpush.msra.mxu0 %v2523
        %2908 = vmatpush.msra.mxu0 %v2519
        %2909 = vmatpush.msra.mxu0 %v2515
        %2910 = vmatpush.msra.mxu0 %v2511
        %2911 = vmatpush.msra.mxu0 %v2507
        %2912 = vmatpush.msra.mxu0 %v2503
        %2913 = vmatmul.f32.gmra.mxu0 %v2706
        %v2914 = vpop.f32.mrf.mxu0
        %v2915 = vadd.f32 %v2895, %v2914
        %2916 = vdwg.mxu0
        %2917 = vmatpush.msra.mxu0 %v2627
        %2918 = vmatpush.msra.mxu0 %v2623
        %2919 = vmatpush.msra.mxu0 %v2619
        %2920 = vmatpush.msra.mxu0 %v2615
        %2921 = vmatpush.msra.mxu0 %v2611
        %2922 = vmatpush.msra.mxu0 %v2607
        %2923 = vmatpush.msra.mxu0 %v2603
        %2924 = vmatpush.msra.mxu0 %v2599
        %2925 = vmatpush.msra.mxu0 %v2595
        %2926 = vmatpush.msra.mxu0 %v2591
        %2927 = vmatpush.msra.mxu0 %v2587
        %2928 = vmatpush.msra.mxu0 %v2583
        %2929 = vmatpush.msra.mxu0 %v2579
        %2930 = vmatpush.msra.mxu0 %v2575
        %2931 = vmatpush.msra.mxu0 %v2571
        %2932 = vmatpush.msra.mxu0 %v2567
        %2933 = vmatmul.f32.gmra.mxu0 %v2709
        %v2934 = vpop.f32.mrf.mxu0
        %v2935 = vadd.f32 %v2915, %v2934
        %2936 = vdwg.mxu0
        %2937 = vmatpush.msra.mxu0 %v2691
        %2938 = vmatpush.msra.mxu0 %v2687
        %2939 = vmatpush.msra.mxu0 %v2683
        %2940 = vmatpush.msra.mxu0 %v2679
        %2941 = vmatpush.msra.mxu0 %v2675
        %2942 = vmatpush.msra.mxu0 %v2671
        %2943 = vmatpush.msra.mxu0 %v2667
        %2944 = vmatpush.msra.mxu0 %v2663
        %2945 = vmatpush.msra.mxu0 %v2659
        %2946 = vmatpush.msra.mxu0 %v2655
        %2947 = vmatpush.msra.mxu0 %v2651
        %2948 = vmatpush.msra.mxu0 %v2647
        %2949 = vmatpush.msra.mxu0 %v2643
        %2950 = vmatpush.msra.mxu0 %v2639
        %2951 = vmatpush.msra.mxu0 %v2635
        %2952 = vmatpush.msra.mxu0 %v2631
        %2953 = vmatmul.f32.gmra.mxu0 %v2712
        %v2954 = vpop.f32.mrf.mxu0
        %v2955 = vadd.f32 %v2935, %v2954
        %2956 = vdwg.mxu0
        %2957 = vmatpush.msra.mxu0 %v2500
        %2958 = vmatpush.msra.mxu0 %v2496
        %2959 = vmatpush.msra.mxu0 %v2492
        %2960 = vmatpush.msra.mxu0 %v2488
        %2961 = vmatpush.msra.mxu0 %v2484
        %2962 = vmatpush.msra.mxu0 %v2480
        %2963 = vmatpush.msra.mxu0 %v2476
        %2964 = vmatpush.msra.mxu0 %v2472
        %2965 = vmatpush.msra.mxu0 %v2468
        %2966 = vmatpush.msra.mxu0 %v2464
        %2967 = vmatpush.msra.mxu0 %v2460
        %2968 = vmatpush.msra.mxu0 %v2456
        %2969 = vmatpush.msra.mxu0 %v2452
        %2970 = vmatpush.msra.mxu0 %v2448
        %2971 = vmatpush.msra.mxu0 %v2444
        %2972 = vmatpush.msra.mxu0 %v2440
        %2973 = vmatmul.f32.gmra.mxu0 %v2703
        %v2974 = vpop.f32.mrf.mxu0
        %v2975 = vadd.f32 0.0, %v2974
        %2976 = vdwg.mxu0
        %2977 = vmatpush.msra.mxu0 %v2564
        %2978 = vmatpush.msra.mxu0 %v2560
        %2979 = vmatpush.msra.mxu0 %v2556
        %2980 = vmatpush.msra.mxu0 %v2552
        %2981 = vmatpush.msra.mxu0 %v2548
        %2982 = vmatpush.msra.mxu0 %v2544
        %2983 = vmatpush.msra.mxu0 %v2540
        %2984 = vmatpush.msra.mxu0 %v2536
        %2985 = vmatpush.msra.mxu0 %v2532
        %2986 = vmatpush.msra.mxu0 %v2528
        %2987 = vmatpush.msra.mxu0 %v2524
        %2988 = vmatpush.msra.mxu0 %v2520
        %2989 = vmatpush.msra.mxu0 %v2516
        %2990 = vmatpush.msra.mxu0 %v2512
        %2991 = vmatpush.msra.mxu0 %v2508
        %2992 = vmatpush.msra.mxu0 %v2504
        %2993 = vmatmul.f32.gmra.mxu0 %v2706
        %v2994 = vpop.f32.mrf.mxu0
        %v2995 = vadd.f32 %v2975, %v2994
        %2996 = vdwg.mxu0
        %2997 = vmatpush.msra.mxu0 %v2628
        %2998 = vmatpush.msra.mxu0 %v2624
        %2999 = vmatpush.msra.mxu0 %v2620
        %3000 = vmatpush.msra.mxu0 %v2616
        %3001 = vmatpush.msra.mxu0 %v2612
        %3002 = vmatpush.msra.mxu0 %v2608
        %3003 = vmatpush.msra.mxu0 %v2604
        %3004 = vmatpush.msra.mxu0 %v2600
        %3005 = vmatpush.msra.mxu0 %v2596
        %3006 = vmatpush.msra.mxu0 %v2592
        %3007 = vmatpush.msra.mxu0 %v2588
        %3008 = vmatpush.msra.mxu0 %v2584
        %3009 = vmatpush.msra.mxu0 %v2580
        %3010 = vmatpush.msra.mxu0 %v2576
        %3011 = vmatpush.msra.mxu0 %v2572
        %3012 = vmatpush.msra.mxu0 %v2568
        %3013 = vmatmul.f32.gmra.mxu0 %v2709
        %v3014 = vpop.f32.mrf.mxu0
        %v3015 = vadd.f32 %v2995, %v3014
        %3016 = vdwg.mxu0
        %3017 = vmatpush.msra.mxu0 %v2692
        %3018 = vmatpush.msra.mxu0 %v2688
        %3019 = vmatpush.msra.mxu0 %v2684
        %3020 = vmatpush.msra.mxu0 %v2680
        %3021 = vmatpush.msra.mxu0 %v2676
        %3022 = vmatpush.msra.mxu0 %v2672
        %3023 = vmatpush.msra.mxu0 %v2668
        %3024 = vmatpush.msra.mxu0 %v2664
        %3025 = vmatpush.msra.mxu0 %v2660
        %3026 = vmatpush.msra.mxu0 %v2656
        %3027 = vmatpush.msra.mxu0 %v2652
        %3028 = vmatpush.msra.mxu0 %v2648
        %3029 = vmatpush.msra.mxu0 %v2644
        %3030 = vmatpush.msra.mxu0 %v2640
        %3031 = vmatpush.msra.mxu0 %v2636
        %3032 = vmatpush.msra.mxu0 %v2632
        %3033 = vmatmul.f32.gmra.mxu0 %v2712
        %v3034 = vpop.f32.mrf.mxu0
        %v3035 = vadd.f32 %v3015, %v3034
        %3036 = vdwg.mxu0
        %3037 = vmatpush.msra.mxu0 %v2232
        %3038 = vmatpush.msra.mxu0 %v2228
        %3039 = vmatpush.msra.mxu0 %v2224
        %3040 = vmatpush.msra.mxu0 %v2220
        %3041 = vmatpush.msra.mxu0 %v2216
        %3042 = vmatpush.msra.mxu0 %v2212
        %3043 = vmatpush.msra.mxu0 %v2208
        %3044 = vmatpush.msra.mxu0 %v2204
        %3045 = vmatpush.msra.mxu0 %v2200
        %3046 = vmatpush.msra.mxu0 %v2196
        %3047 = vmatpush.msra.mxu0 %v2192
        %3048 = vmatpush.msra.mxu0 %v2188
        %3049 = vmatpush.msra.mxu0 %v2184
        %3050 = vmatpush.msra.mxu0 %v2180
        %3051 = vmatpush.msra.mxu0 %v2176
        %3052 = vmatpush.msra.mxu0 %v2172
        %3053 = vmatmul.f32.gmra.mxu0 %v2168
        %v3054 = vpop.f32.mrf.mxu0
        %v3055 = vadd.f32 %v2795, %v3054
        %3056 = vdwg.mxu0
        %3057 = vmatpush.msra.mxu0 %v2296
        %3058 = vmatpush.msra.mxu0 %v2292
        %3059 = vmatpush.msra.mxu0 %v2288
        %3060 = vmatpush.msra.mxu0 %v2284
        %3061 = vmatpush.msra.mxu0 %v2280
        %3062 = vmatpush.msra.mxu0 %v2276
        %3063 = vmatpush.msra.mxu0 %v2272
        %3064 = vmatpush.msra.mxu0 %v2268
        %3065 = vmatpush.msra.mxu0 %v2264
        %3066 = vmatpush.msra.mxu0 %v2260
        %3067 = vmatpush.msra.mxu0 %v2256
        %3068 = vmatpush.msra.mxu0 %v2252
        %3069 = vmatpush.msra.mxu0 %v2248
        %3070 = vmatpush.msra.mxu0 %v2244
        %3071 = vmatpush.msra.mxu0 %v2240
        %3072 = vmatpush.msra.mxu0 %v2236
        %3073 = vmatmul.f32.gmra.mxu0 %v2169
        %v3074 = vpop.f32.mrf.mxu0
        %v3075 = vadd.f32 %v3055, %v3074
        %3076 = vdwg.mxu0
        %3077 = vmatpush.msra.mxu0 %v2360
        %3078 = vmatpush.msra.mxu0 %v2356
        %3079 = vmatpush.msra.mxu0 %v2352
        %3080 = vmatpush.msra.mxu0 %v2348
        %3081 = vmatpush.msra.mxu0 %v2344
        %3082 = vmatpush.msra.mxu0 %v2340
        %3083 = vmatpush.msra.mxu0 %v2336
        %3084 = vmatpush.msra.mxu0 %v2332
        %3085 = vmatpush.msra.mxu0 %v2328
        %3086 = vmatpush.msra.mxu0 %v2324
        %3087 = vmatpush.msra.mxu0 %v2320
        %3088 = vmatpush.msra.mxu0 %v2316
        %3089 = vmatpush.msra.mxu0 %v2312
        %3090 = vmatpush.msra.mxu0 %v2308
        %3091 = vmatpush.msra.mxu0 %v2304
        %3092 = vmatpush.msra.mxu0 %v2300
        %3093 = vmatmul.f32.gmra.mxu0 %v2170
        %v3094 = vpop.f32.mrf.mxu0
        %v3095 = vadd.f32 %v3075, %v3094
        %3096 = vdwg.mxu0
        %3097 = vmatpush.msra.mxu0 %v2424
        %3098 = vmatpush.msra.mxu0 %v2420
        %3099 = vmatpush.msra.mxu0 %v2416
        %3100 = vmatpush.msra.mxu0 %v2412
        %3101 = vmatpush.msra.mxu0 %v2408
        %3102 = vmatpush.msra.mxu0 %v2404
        %3103 = vmatpush.msra.mxu0 %v2400
        %3104 = vmatpush.msra.mxu0 %v2396
        %3105 = vmatpush.msra.mxu0 %v2392
        %3106 = vmatpush.msra.mxu0 %v2388
        %3107 = vmatpush.msra.mxu0 %v2384
        %3108 = vmatpush.msra.mxu0 %v2380
        %3109 = vmatpush.msra.mxu0 %v2376
        %3110 = vmatpush.msra.mxu0 %v2372
        %3111 = vmatpush.msra.mxu0 %v2368
        %3112 = vmatpush.msra.mxu0 %v2364
        %3113 = vmatmul.f32.gmra.mxu0 %v2171
        %v3114 = vpop.f32.mrf.mxu0
        %v3115 = vadd.f32 %v3095, %v3114
        %3116 = vdwg.mxu0
        %3117 = vmatpush.msra.mxu0 %v2233
        %3118 = vmatpush.msra.mxu0 %v2229
        %3119 = vmatpush.msra.mxu0 %v2225
        %3120 = vmatpush.msra.mxu0 %v2221
        %3121 = vmatpush.msra.mxu0 %v2217
        %3122 = vmatpush.msra.mxu0 %v2213
        %3123 = vmatpush.msra.mxu0 %v2209
        %3124 = vmatpush.msra.mxu0 %v2205
        %3125 = vmatpush.msra.mxu0 %v2201
        %3126 = vmatpush.msra.mxu0 %v2197
        %3127 = vmatpush.msra.mxu0 %v2193
        %3128 = vmatpush.msra.mxu0 %v2189
        %3129 = vmatpush.msra.mxu0 %v2185
        %3130 = vmatpush.msra.mxu0 %v2181
        %3131 = vmatpush.msra.mxu0 %v2177
        %3132 = vmatpush.msra.mxu0 %v2173
        %3133 = vmatmul.f32.gmra.mxu0 %v2168
        %v3134 = vpop.f32.mrf.mxu0
        %v3135 = vadd.f32 %v2875, %v3134
        %3136 = vdwg.mxu0
        %3137 = vmatpush.msra.mxu0 %v2297
        %3138 = vmatpush.msra.mxu0 %v2293
        %3139 = vmatpush.msra.mxu0 %v2289
        %3140 = vmatpush.msra.mxu0 %v2285
        %3141 = vmatpush.msra.mxu0 %v2281
        %3142 = vmatpush.msra.mxu0 %v2277
        %3143 = vmatpush.msra.mxu0 %v2273
        %3144 = vmatpush.msra.mxu0 %v2269
        %3145 = vmatpush.msra.mxu0 %v2265
        %3146 = vmatpush.msra.mxu0 %v2261
        %3147 = vmatpush.msra.mxu0 %v2257
        %3148 = vmatpush.msra.mxu0 %v2253
        %3149 = vmatpush.msra.mxu0 %v2249
        %3150 = vmatpush.msra.mxu0 %v2245
        %3151 = vmatpush.msra.mxu0 %v2241
        %3152 = vmatpush.msra.mxu0 %v2237
        %3153 = vmatmul.f32.gmra.mxu0 %v2169
        %v3154 = vpop.f32.mrf.mxu0
        %v3155 = vadd.f32 %v3135, %v3154
        %3156 = vdwg.mxu0
        %3157 = vmatpush.msra.mxu0 %v2361
        %3158 = vmatpush.msra.mxu0 %v2357
        %3159 = vmatpush.msra.mxu0 %v2353
        %3160 = vmatpush.msra.mxu0 %v2349
        %3161 = vmatpush.msra.mxu0 %v2345
        %3162 = vmatpush.msra.mxu0 %v2341
        %3163 = vmatpush.msra.mxu0 %v2337
        %3164 = vmatpush.msra.mxu0 %v2333
        %3165 = vmatpush.msra.mxu0 %v2329
        %3166 = vmatpush.msra.mxu0 %v2325
        %3167 = vmatpush.msra.mxu0 %v2321
        %3168 = vmatpush.msra.mxu0 %v2317
        %3169 = vmatpush.msra.mxu0 %v2313
        %3170 = vmatpush.msra.mxu0 %v2309
        %3171 = vmatpush.msra.mxu0 %v2305
        %3172 = vmatpush.msra.mxu0 %v2301
        %3173 = vmatmul.f32.gmra.mxu0 %v2170
        %v3174 = vpop.f32.mrf.mxu0
        %v3175 = vadd.f32 %v3155, %v3174
        %3176 = vdwg.mxu0
        %3177 = vmatpush.msra.mxu0 %v2425
        %3178 = vmatpush.msra.mxu0 %v2421
        %3179 = vmatpush.msra.mxu0 %v2417
        %3180 = vmatpush.msra.mxu0 %v2413
        %3181 = vmatpush.msra.mxu0 %v2409
        %3182 = vmatpush.msra.mxu0 %v2405
        %3183 = vmatpush.msra.mxu0 %v2401
        %3184 = vmatpush.msra.mxu0 %v2397
        %3185 = vmatpush.msra.mxu0 %v2393
        %3186 = vmatpush.msra.mxu0 %v2389
        %3187 = vmatpush.msra.mxu0 %v2385
        %3188 = vmatpush.msra.mxu0 %v2381
        %3189 = vmatpush.msra.mxu0 %v2377
        %3190 = vmatpush.msra.mxu0 %v2373
        %3191 = vmatpush.msra.mxu0 %v2369
        %3192 = vmatpush.msra.mxu0 %v2365
        %3193 = vmatmul.f32.gmra.mxu0 %v2171
        %v3194 = vpop.f32.mrf.mxu0
        %v3195 = vadd.f32 %v3175, %v3194
        %3196 = vdwg.mxu0
        %3197 = vmatpush.msra.mxu0 %v2234
        %3198 = vmatpush.msra.mxu0 %v2230
        %3199 = vmatpush.msra.mxu0 %v2226
        %3200 = vmatpush.msra.mxu0 %v2222
        %3201 = vmatpush.msra.mxu0 %v2218
        %3202 = vmatpush.msra.mxu0 %v2214
        %3203 = vmatpush.msra.mxu0 %v2210
        %3204 = vmatpush.msra.mxu0 %v2206
        %3205 = vmatpush.msra.mxu0 %v2202
        %3206 = vmatpush.msra.mxu0 %v2198
        %3207 = vmatpush.msra.mxu0 %v2194
        %3208 = vmatpush.msra.mxu0 %v2190
        %3209 = vmatpush.msra.mxu0 %v2186
        %3210 = vmatpush.msra.mxu0 %v2182
        %3211 = vmatpush.msra.mxu0 %v2178
        %3212 = vmatpush.msra.mxu0 %v2174
        %3213 = vmatmul.f32.gmra.mxu0 %v2168
        %v3214 = vpop.f32.mrf.mxu0
        %v3215 = vadd.f32 %v2955, %v3214
        %3216 = vdwg.mxu0
        %3217 = vmatpush.msra.mxu0 %v2298
        %3218 = vmatpush.msra.mxu0 %v2294
        %3219 = vmatpush.msra.mxu0 %v2290
        %3220 = vmatpush.msra.mxu0 %v2286
        %3221 = vmatpush.msra.mxu0 %v2282
        %3222 = vmatpush.msra.mxu0 %v2278
        %3223 = vmatpush.msra.mxu0 %v2274
        %3224 = vmatpush.msra.mxu0 %v2270
        %3225 = vmatpush.msra.mxu0 %v2266
        %3226 = vmatpush.msra.mxu0 %v2262
        %3227 = vmatpush.msra.mxu0 %v2258
        %3228 = vmatpush.msra.mxu0 %v2254
        %3229 = vmatpush.msra.mxu0 %v2250
        %3230 = vmatpush.msra.mxu0 %v2246
        %3231 = vmatpush.msra.mxu0 %v2242
        %3232 = vmatpush.msra.mxu0 %v2238
        %3233 = vmatmul.f32.gmra.mxu0 %v2169
        %v3234 = vpop.f32.mrf.mxu0
        %v3235 = vadd.f32 %v3215, %v3234
        %3236 = vdwg.mxu0
        %3237 = vmatpush.msra.mxu0 %v2362
        %3238 = vmatpush.msra.mxu0 %v2358
        %3239 = vmatpush.msra.mxu0 %v2354
        %3240 = vmatpush.msra.mxu0 %v2350
        %3241 = vmatpush.msra.mxu0 %v2346
        %3242 = vmatpush.msra.mxu0 %v2342
        %3243 = vmatpush.msra.mxu0 %v2338
        %3244 = vmatpush.msra.mxu0 %v2334
        %3245 = vmatpush.msra.mxu0 %v2330
        %3246 = vmatpush.msra.mxu0 %v2326
        %3247 = vmatpush.msra.mxu0 %v2322
        %3248 = vmatpush.msra.mxu0 %v2318
        %3249 = vmatpush.msra.mxu0 %v2314
        %3250 = vmatpush.msra.mxu0 %v2310
        %3251 = vmatpush.msra.mxu0 %v2306
        %3252 = vmatpush.msra.mxu0 %v2302
        %3253 = vmatmul.f32.gmra.mxu0 %v2170
        %v3254 = vpop.f32.mrf.mxu0
        %v3255 = vadd.f32 %v3235, %v3254
        %3256 = vdwg.mxu0
        %3257 = vmatpush.msra.mxu0 %v2426
        %3258 = vmatpush.msra.mxu0 %v2422
        %3259 = vmatpush.msra.mxu0 %v2418
        %3260 = vmatpush.msra.mxu0 %v2414
        %3261 = vmatpush.msra.mxu0 %v2410
        %3262 = vmatpush.msra.mxu0 %v2406
        %3263 = vmatpush.msra.mxu0 %v2402
        %3264 = vmatpush.msra.mxu0 %v2398
        %3265 = vmatpush.msra.mxu0 %v2394
        %3266 = vmatpush.msra.mxu0 %v2390
        %3267 = vmatpush.msra.mxu0 %v2386
        %3268 = vmatpush.msra.mxu0 %v2382
        %3269 = vmatpush.msra.mxu0 %v2378
        %3270 = vmatpush.msra.mxu0 %v2374
        %3271 = vmatpush.msra.mxu0 %v2370
        %3272 = vmatpush.msra.mxu0 %v2366
        %3273 = vmatmul.f32.gmra.mxu0 %v2171
        %v3274 = vpop.f32.mrf.mxu0
        %v3275 = vadd.f32 %v3255, %v3274
        %3276 = vdwg.mxu0
        %3277 = vmatpush.msra.mxu0 %v2235
        %3278 = vmatpush.msra.mxu0 %v2231
        %3279 = vmatpush.msra.mxu0 %v2227
        %3280 = vmatpush.msra.mxu0 %v2223
        %3281 = vmatpush.msra.mxu0 %v2219
        %3282 = vmatpush.msra.mxu0 %v2215
        %3283 = vmatpush.msra.mxu0 %v2211
        %3284 = vmatpush.msra.mxu0 %v2207
        %3285 = vmatpush.msra.mxu0 %v2203
        %3286 = vmatpush.msra.mxu0 %v2199
        %3287 = vmatpush.msra.mxu0 %v2195
        %3288 = vmatpush.msra.mxu0 %v2191
        %3289 = vmatpush.msra.mxu0 %v2187
        %3290 = vmatpush.msra.mxu0 %v2183
        %3291 = vmatpush.msra.mxu0 %v2179
        %3292 = vmatpush.msra.mxu0 %v2175
        %3293 = vmatmul.f32.gmra.mxu0 %v2168
        %v3294 = vpop.f32.mrf.mxu0
        %v3295 = vadd.f32 %v3035, %v3294
        %3296 = vdwg.mxu0
        %3297 = vmatpush.msra.mxu0 %v2299
        %3298 = vmatpush.msra.mxu0 %v2295
        %3299 = vmatpush.msra.mxu0 %v2291
        %3300 = vmatpush.msra.mxu0 %v2287
        %3301 = vmatpush.msra.mxu0 %v2283
        %3302 = vmatpush.msra.mxu0 %v2279
        %3303 = vmatpush.msra.mxu0 %v2275
        %3304 = vmatpush.msra.mxu0 %v2271
        %3305 = vmatpush.msra.mxu0 %v2267
        %3306 = vmatpush.msra.mxu0 %v2263
        %3307 = vmatpush.msra.mxu0 %v2259
        %3308 = vmatpush.msra.mxu0 %v2255
        %3309 = vmatpush.msra.mxu0 %v2251
        %3310 = vmatpush.msra.mxu0 %v2247
        %3311 = vmatpush.msra.mxu0 %v2243
        %3312 = vmatpush.msra.mxu0 %v2239
        %3313 = vmatmul.f32.gmra.mxu0 %v2169
        %v3314 = vpop.f32.mrf.mxu0
        %v3315 = vadd.f32 %v3295, %v3314
        %3316 = vdwg.mxu0
        %3317 = vmatpush.msra.mxu0 %v2363
        %3318 = vmatpush.msra.mxu0 %v2359
        %3319 = vmatpush.msra.mxu0 %v2355
        %3320 = vmatpush.msra.mxu0 %v2351
        %3321 = vmatpush.msra.mxu0 %v2347
        %3322 = vmatpush.msra.mxu0 %v2343
        %3323 = vmatpush.msra.mxu0 %v2339
        %3324 = vmatpush.msra.mxu0 %v2335
        %3325 = vmatpush.msra.mxu0 %v2331
        %3326 = vmatpush.msra.mxu0 %v2327
        %3327 = vmatpush.msra.mxu0 %v2323
        %3328 = vmatpush.msra.mxu0 %v2319
        %3329 = vmatpush.msra.mxu0 %v2315
        %3330 = vmatpush.msra.mxu0 %v2311
        %3331 = vmatpush.msra.mxu0 %v2307
        %3332 = vmatpush.msra.mxu0 %v2303
        %3333 = vmatmul.f32.gmra.mxu0 %v2170
        %v3334 = vpop.f32.mrf.mxu0
        %v3335 = vadd.f32 %v3315, %v3334
        %3336 = vdwg.mxu0
        %3337 = vmatpush.msra.mxu0 %v2427
        %3338 = vmatpush.msra.mxu0 %v2423
        %3339 = vmatpush.msra.mxu0 %v2419
        %3340 = vmatpush.msra.mxu0 %v2415
        %3341 = vmatpush.msra.mxu0 %v2411
        %3342 = vmatpush.msra.mxu0 %v2407
        %3343 = vmatpush.msra.mxu0 %v2403
        %3344 = vmatpush.msra.mxu0 %v2399
        %3345 = vmatpush.msra.mxu0 %v2395
        %3346 = vmatpush.msra.mxu0 %v2391
        %3347 = vmatpush.msra.mxu0 %v2387
        %3348 = vmatpush.msra.mxu0 %v2383
        %3349 = vmatpush.msra.mxu0 %v2379
        %3350 = vmatpush.msra.mxu0 %v2375
        %3351 = vmatpush.msra.mxu0 %v2371
        %3352 = vmatpush.msra.mxu0 %v2367
        %3353 = vmatmul.f32.gmra.mxu0 %v2171
        %v3354 = vpop.f32.mrf.mxu0
        %v3355 = vadd.f32 %v3335, %v3354
        %3356 = vdwg.mxu0
        %v3357 = vld [vmem:[#allocation3] sm:$0xfc]
        %v3358 = vld [vmem:[#allocation3 + $0x8] sm:$0xfc]
        %v3359 = vld [vmem:[#allocation3 + $0x10] sm:$0xfc]
        %v3360 = vld [vmem:[#allocation3 + $0x18] sm:$0xfc]
        %v3361 = vld [vmem:[#allocation3 + $0x20] sm:$0x3]
        %v3362 = vld [vmem:[#allocation3 + $0x28] sm:$0x3]
        %v3363 = vld [vmem:[#allocation3 + $0x30] sm:$0x3]
        %v3364 = vld [vmem:[#allocation3 + $0x38] sm:$0x3]
        %s3365 = scalar_lea.vmem [#allocation8], 4096
        %v3366 = vld [vmem:[%s3365] sm:$0xff]
        %v3367 = vld [vmem:[%s3365 + $0x8] sm:$0xff]
        %v3368 = vld [vmem:[%s3365 + $0x10] sm:$0xff]
        %v3369 = vld [vmem:[%s3365 + $0x18] sm:$0xff]
        %v3370 = vld [vmem:[%s3365 + $0x20] sm:$0xff]
        %v3371 = vld [vmem:[%s3365 + $0x28] sm:$0xff]
        %v3372 = vld [vmem:[%s3365 + $0x30] sm:$0xff]
        %v3373 = vld [vmem:[%s3365 + $0x38] sm:$0xff]
        %v3374 = vld [vmem:[%s3365 + $0x40] sm:$0xff]
        %v3375 = vld [vmem:[%s3365 + $0x48] sm:$0xff]
        %v3376 = vld [vmem:[%s3365 + $0x50] sm:$0xff]
        %v3377 = vld [vmem:[%s3365 + $0x58] sm:$0xff]
        %v3378 = vld [vmem:[%s3365 + $0x60] sm:$0xff]
        %v3379 = vld [vmem:[%s3365 + $0x68] sm:$0xff]
        %v3380 = vld [vmem:[%s3365 + $0x70] sm:$0xff]
        %v3381 = vld [vmem:[%s3365 + $0x78] sm:$0xff]
        %v3382 = vld [vmem:[%s3365 + $0x80] sm:$0xff]
        %v3383 = vld [vmem:[%s3365 + $0x88] sm:$0xff]
        %v3384 = vld [vmem:[%s3365 + $0x90] sm:$0xff]
        %v3385 = vld [vmem:[%s3365 + $0x98] sm:$0xff]
        %v3386 = vld [vmem:[%s3365 + $0xa0] sm:$0xff]
        %v3387 = vld [vmem:[%s3365 + $0xa8] sm:$0xff]
        %v3388 = vld [vmem:[%s3365 + $0xb0] sm:$0xff]
        %v3389 = vld [vmem:[%s3365 + $0xb8] sm:$0xff]
        %v3390 = vld [vmem:[%s3365 + $0xc0] sm:$0xff]
        %v3391 = vld [vmem:[%s3365 + $0xc8] sm:$0xff]
        %v3392 = vld [vmem:[%s3365 + $0xd0] sm:$0xff]
        %v3393 = vld [vmem:[%s3365 + $0xd8] sm:$0xff]
        %v3394 = vld [vmem:[%s3365 + $0xe0] sm:$0xff]
        %v3395 = vld [vmem:[%s3365 + $0xe8] sm:$0xff]
        %v3396 = vld [vmem:[%s3365 + $0xf0] sm:$0xff]
        %v3397 = vld [vmem:[%s3365 + $0xf8] sm:$0xff]
        %v3398 = vld [vmem:[%s3365 + $0x100] sm:$0xff]
        %v3399 = vld [vmem:[%s3365 + $0x108] sm:$0xff]
        %v3400 = vld [vmem:[%s3365 + $0x110] sm:$0xff]
        %v3401 = vld [vmem:[%s3365 + $0x118] sm:$0xff]
        %v3402 = vld [vmem:[%s3365 + $0x120] sm:$0xff]
        %v3403 = vld [vmem:[%s3365 + $0x128] sm:$0xff]
        %v3404 = vld [vmem:[%s3365 + $0x130] sm:$0xff]
        %v3405 = vld [vmem:[%s3365 + $0x138] sm:$0xff]
        %v3406 = vld [vmem:[%s3365 + $0x140] sm:$0xff]
        %v3407 = vld [vmem:[%s3365 + $0x148] sm:$0xff]
        %v3408 = vld [vmem:[%s3365 + $0x150] sm:$0xff]
        %v3409 = vld [vmem:[%s3365 + $0x158] sm:$0xff]
        %v3410 = vld [vmem:[%s3365 + $0x160] sm:$0xff]
        %v3411 = vld [vmem:[%s3365 + $0x168] sm:$0xff]
        %v3412 = vld [vmem:[%s3365 + $0x170] sm:$0xff]
        %v3413 = vld [vmem:[%s3365 + $0x178] sm:$0xff]
        %v3414 = vld [vmem:[%s3365 + $0x180] sm:$0xff]
        %v3415 = vld [vmem:[%s3365 + $0x188] sm:$0xff]
        %v3416 = vld [vmem:[%s3365 + $0x190] sm:$0xff]
        %v3417 = vld [vmem:[%s3365 + $0x198] sm:$0xff]
        %v3418 = vld [vmem:[%s3365 + $0x1a0] sm:$0xff]
        %v3419 = vld [vmem:[%s3365 + $0x1a8] sm:$0xff]
        %v3420 = vld [vmem:[%s3365 + $0x1b0] sm:$0xff]
        %v3421 = vld [vmem:[%s3365 + $0x1b8] sm:$0xff]
        %v3422 = vld [vmem:[%s3365 + $0x1c0] sm:$0xff]
        %v3423 = vld [vmem:[%s3365 + $0x1c8] sm:$0xff]
        %v3424 = vld [vmem:[%s3365 + $0x1d0] sm:$0xff]
        %v3425 = vld [vmem:[%s3365 + $0x1d8] sm:$0xff]
        %v3426 = vld [vmem:[%s3365 + $0x1e0] sm:$0xff]
        %v3427 = vld [vmem:[%s3365 + $0x1e8] sm:$0xff]
        %v3428 = vld [vmem:[%s3365 + $0x1f0] sm:$0xff]
        %v3429 = vld [vmem:[%s3365 + $0x1f8] sm:$0xff]
        %v3430 = vld [vmem:[%s3365 + $0x200] sm:$0xff]
        %v3431 = vld [vmem:[%s3365 + $0x208] sm:$0xff]
        %v3432 = vld [vmem:[%s3365 + $0x210] sm:$0xff]
        %v3433 = vld [vmem:[%s3365 + $0x218] sm:$0xff]
        %v3434 = vld [vmem:[%s3365 + $0x220] sm:$0xff]
        %v3435 = vld [vmem:[%s3365 + $0x228] sm:$0xff]
        %v3436 = vld [vmem:[%s3365 + $0x230] sm:$0xff]
        %v3437 = vld [vmem:[%s3365 + $0x238] sm:$0xff]
        %v3438 = vld [vmem:[%s3365 + $0x240] sm:$0xff]
        %v3439 = vld [vmem:[%s3365 + $0x248] sm:$0xff]
        %v3440 = vld [vmem:[%s3365 + $0x250] sm:$0xff]
        %v3441 = vld [vmem:[%s3365 + $0x258] sm:$0xff]
        %v3442 = vld [vmem:[%s3365 + $0x260] sm:$0xff]
        %v3443 = vld [vmem:[%s3365 + $0x268] sm:$0xff]
        %v3444 = vld [vmem:[%s3365 + $0x270] sm:$0xff]
        %v3445 = vld [vmem:[%s3365 + $0x278] sm:$0xff]
        %v3446 = vld [vmem:[%s3365 + $0x280] sm:$0xff]
        %v3447 = vld [vmem:[%s3365 + $0x288] sm:$0xff]
        %v3448 = vld [vmem:[%s3365 + $0x290] sm:$0xff]
        %v3449 = vld [vmem:[%s3365 + $0x298] sm:$0xff]
        %v3450 = vld [vmem:[%s3365 + $0x2a0] sm:$0xff]
        %v3451 = vld [vmem:[%s3365 + $0x2a8] sm:$0xff]
        %v3452 = vld [vmem:[%s3365 + $0x2b0] sm:$0xff]
        %v3453 = vld [vmem:[%s3365 + $0x2b8] sm:$0xff]
        %v3454 = vld [vmem:[%s3365 + $0x2c0] sm:$0xff]
        %v3455 = vld [vmem:[%s3365 + $0x2c8] sm:$0xff]
        %v3456 = vld [vmem:[%s3365 + $0x2d0] sm:$0xff]
        %v3457 = vld [vmem:[%s3365 + $0x2d8] sm:$0xff]
        %v3458 = vld [vmem:[%s3365 + $0x2e0] sm:$0xff]
        %v3459 = vld [vmem:[%s3365 + $0x2e8] sm:$0xff]
        %v3460 = vld [vmem:[%s3365 + $0x2f0] sm:$0xff]
        %v3461 = vld [vmem:[%s3365 + $0x2f8] sm:$0xff]
        %v3462 = vld [vmem:[%s3365 + $0x300] sm:$0xff]
        %v3463 = vld [vmem:[%s3365 + $0x308] sm:$0xff]
        %v3464 = vld [vmem:[%s3365 + $0x310] sm:$0xff]
        %v3465 = vld [vmem:[%s3365 + $0x318] sm:$0xff]
        %v3466 = vld [vmem:[%s3365 + $0x320] sm:$0xff]
        %v3467 = vld [vmem:[%s3365 + $0x328] sm:$0xff]
        %v3468 = vld [vmem:[%s3365 + $0x330] sm:$0xff]
        %v3469 = vld [vmem:[%s3365 + $0x338] sm:$0xff]
        %v3470 = vld [vmem:[%s3365 + $0x340] sm:$0xff]
        %v3471 = vld [vmem:[%s3365 + $0x348] sm:$0xff]
        %v3472 = vld [vmem:[%s3365 + $0x350] sm:$0xff]
        %v3473 = vld [vmem:[%s3365 + $0x358] sm:$0xff]
        %v3474 = vld [vmem:[%s3365 + $0x360] sm:$0xff]
        %v3475 = vld [vmem:[%s3365 + $0x368] sm:$0xff]
        %v3476 = vld [vmem:[%s3365 + $0x370] sm:$0xff]
        %v3477 = vld [vmem:[%s3365 + $0x378] sm:$0xff]
        %v3478 = vld [vmem:[%s3365 + $0x380] sm:$0xff]
        %v3479 = vld [vmem:[%s3365 + $0x388] sm:$0xff]
        %v3480 = vld [vmem:[%s3365 + $0x390] sm:$0xff]
        %v3481 = vld [vmem:[%s3365 + $0x398] sm:$0xff]
        %v3482 = vld [vmem:[%s3365 + $0x3a0] sm:$0xff]
        %v3483 = vld [vmem:[%s3365 + $0x3a8] sm:$0xff]
        %v3484 = vld [vmem:[%s3365 + $0x3b0] sm:$0xff]
        %v3485 = vld [vmem:[%s3365 + $0x3b8] sm:$0xff]
        %v3486 = vld [vmem:[%s3365 + $0x3c0] sm:$0xff]
        %v3487 = vld [vmem:[%s3365 + $0x3c8] sm:$0xff]
        %v3488 = vld [vmem:[%s3365 + $0x3d0] sm:$0xff]
        %v3489 = vld [vmem:[%s3365 + $0x3d8] sm:$0xff]
        %v3490 = vld [vmem:[%s3365 + $0x3e0] sm:$0xff]
        %v3491 = vld [vmem:[%s3365 + $0x3e8] sm:$0xff]
        %v3492 = vld [vmem:[%s3365 + $0x3f0] sm:$0xff]
        %v3493 = vld [vmem:[%s3365 + $0x3f8] sm:$0xff]
        %v3494 = vld [vmem:[%s3365 + $0x400] sm:$0xff]
        %v3495 = vld [vmem:[%s3365 + $0x408] sm:$0xff]
        %v3496 = vld [vmem:[%s3365 + $0x410] sm:$0xff]
        %v3497 = vld [vmem:[%s3365 + $0x418] sm:$0xff]
        %v3498 = vld [vmem:[%s3365 + $0x420] sm:$0xff]
        %v3499 = vld [vmem:[%s3365 + $0x428] sm:$0xff]
        %v3500 = vld [vmem:[%s3365 + $0x430] sm:$0xff]
        %v3501 = vld [vmem:[%s3365 + $0x438] sm:$0xff]
        %v3502 = vld [vmem:[%s3365 + $0x440] sm:$0xff]
        %v3503 = vld [vmem:[%s3365 + $0x448] sm:$0xff]
        %v3504 = vld [vmem:[%s3365 + $0x450] sm:$0xff]
        %v3505 = vld [vmem:[%s3365 + $0x458] sm:$0xff]
        %v3506 = vld [vmem:[%s3365 + $0x460] sm:$0xff]
        %v3507 = vld [vmem:[%s3365 + $0x468] sm:$0xff]
        %v3508 = vld [vmem:[%s3365 + $0x470] sm:$0xff]
        %v3509 = vld [vmem:[%s3365 + $0x478] sm:$0xff]
        %v3510 = vld [vmem:[%s3365 + $0x480] sm:$0xff]
        %v3511 = vld [vmem:[%s3365 + $0x488] sm:$0xff]
        %v3512 = vld [vmem:[%s3365 + $0x490] sm:$0xff]
        %v3513 = vld [vmem:[%s3365 + $0x498] sm:$0xff]
        %v3514 = vld [vmem:[%s3365 + $0x4a0] sm:$0xff]
        %v3515 = vld [vmem:[%s3365 + $0x4a8] sm:$0xff]
        %v3516 = vld [vmem:[%s3365 + $0x4b0] sm:$0xff]
        %v3517 = vld [vmem:[%s3365 + $0x4b8] sm:$0xff]
        %v3518 = vld [vmem:[%s3365 + $0x4c0] sm:$0xff]
        %v3519 = vld [vmem:[%s3365 + $0x4c8] sm:$0xff]
        %v3520 = vld [vmem:[%s3365 + $0x4d0] sm:$0xff]
        %v3521 = vld [vmem:[%s3365 + $0x4d8] sm:$0xff]
        %v3522 = vld [vmem:[%s3365 + $0x4e0] sm:$0xff]
        %v3523 = vld [vmem:[%s3365 + $0x4e8] sm:$0xff]
        %v3524 = vld [vmem:[%s3365 + $0x4f0] sm:$0xff]
        %v3525 = vld [vmem:[%s3365 + $0x4f8] sm:$0xff]
        %v3526 = vld [vmem:[%s3365 + $0x500] sm:$0xff]
        %v3527 = vld [vmem:[%s3365 + $0x508] sm:$0xff]
        %v3528 = vld [vmem:[%s3365 + $0x510] sm:$0xff]
        %v3529 = vld [vmem:[%s3365 + $0x518] sm:$0xff]
        %v3530 = vld [vmem:[%s3365 + $0x520] sm:$0xff]
        %v3531 = vld [vmem:[%s3365 + $0x528] sm:$0xff]
        %v3532 = vld [vmem:[%s3365 + $0x530] sm:$0xff]
        %v3533 = vld [vmem:[%s3365 + $0x538] sm:$0xff]
        %v3534 = vld [vmem:[%s3365 + $0x540] sm:$0xff]
        %v3535 = vld [vmem:[%s3365 + $0x548] sm:$0xff]
        %v3536 = vld [vmem:[%s3365 + $0x550] sm:$0xff]
        %v3537 = vld [vmem:[%s3365 + $0x558] sm:$0xff]
        %v3538 = vld [vmem:[%s3365 + $0x560] sm:$0xff]
        %v3539 = vld [vmem:[%s3365 + $0x568] sm:$0xff]
        %v3540 = vld [vmem:[%s3365 + $0x570] sm:$0xff]
        %v3541 = vld [vmem:[%s3365 + $0x578] sm:$0xff]
        %v3542 = vld [vmem:[%s3365 + $0x580] sm:$0xff]
        %v3543 = vld [vmem:[%s3365 + $0x588] sm:$0xff]
        %v3544 = vld [vmem:[%s3365 + $0x590] sm:$0xff]
        %v3545 = vld [vmem:[%s3365 + $0x598] sm:$0xff]
        %v3546 = vld [vmem:[%s3365 + $0x5a0] sm:$0xff]
        %v3547 = vld [vmem:[%s3365 + $0x5a8] sm:$0xff]
        %v3548 = vld [vmem:[%s3365 + $0x5b0] sm:$0xff]
        %v3549 = vld [vmem:[%s3365 + $0x5b8] sm:$0xff]
        %v3550 = vld [vmem:[%s3365 + $0x5c0] sm:$0xff]
        %v3551 = vld [vmem:[%s3365 + $0x5c8] sm:$0xff]
        %v3552 = vld [vmem:[%s3365 + $0x5d0] sm:$0xff]
        %v3553 = vld [vmem:[%s3365 + $0x5d8] sm:$0xff]
        %v3554 = vld [vmem:[%s3365 + $0x5e0] sm:$0xff]
        %v3555 = vld [vmem:[%s3365 + $0x5e8] sm:$0xff]
        %v3556 = vld [vmem:[%s3365 + $0x5f0] sm:$0xff]
        %v3557 = vld [vmem:[%s3365 + $0x5f8] sm:$0xff]
        %v3558 = vld [vmem:[%s3365 + $0x600] sm:$0xff]
        %v3559 = vld [vmem:[%s3365 + $0x608] sm:$0xff]
        %v3560 = vld [vmem:[%s3365 + $0x610] sm:$0xff]
        %v3561 = vld [vmem:[%s3365 + $0x618] sm:$0xff]
        %v3562 = vld [vmem:[%s3365 + $0x620] sm:$0xff]
        %v3563 = vld [vmem:[%s3365 + $0x628] sm:$0xff]
        %v3564 = vld [vmem:[%s3365 + $0x630] sm:$0xff]
        %v3565 = vld [vmem:[%s3365 + $0x638] sm:$0xff]
        %v3566 = vld [vmem:[%s3365 + $0x640] sm:$0xff]
        %v3567 = vld [vmem:[%s3365 + $0x648] sm:$0xff]
        %v3568 = vld [vmem:[%s3365 + $0x650] sm:$0xff]
        %v3569 = vld [vmem:[%s3365 + $0x658] sm:$0xff]
        %v3570 = vld [vmem:[%s3365 + $0x660] sm:$0xff]
        %v3571 = vld [vmem:[%s3365 + $0x668] sm:$0xff]
        %v3572 = vld [vmem:[%s3365 + $0x670] sm:$0xff]
        %v3573 = vld [vmem:[%s3365 + $0x678] sm:$0xff]
        %v3574 = vld [vmem:[%s3365 + $0x680] sm:$0xff]
        %v3575 = vld [vmem:[%s3365 + $0x688] sm:$0xff]
        %v3576 = vld [vmem:[%s3365 + $0x690] sm:$0xff]
        %v3577 = vld [vmem:[%s3365 + $0x698] sm:$0xff]
        %v3578 = vld [vmem:[%s3365 + $0x6a0] sm:$0xff]
        %v3579 = vld [vmem:[%s3365 + $0x6a8] sm:$0xff]
        %v3580 = vld [vmem:[%s3365 + $0x6b0] sm:$0xff]
        %v3581 = vld [vmem:[%s3365 + $0x6b8] sm:$0xff]
        %v3582 = vld [vmem:[%s3365 + $0x6c0] sm:$0xff]
        %v3583 = vld [vmem:[%s3365 + $0x6c8] sm:$0xff]
        %v3584 = vld [vmem:[%s3365 + $0x6d0] sm:$0xff]
        %v3585 = vld [vmem:[%s3365 + $0x6d8] sm:$0xff]
        %v3586 = vld [vmem:[%s3365 + $0x6e0] sm:$0xff]
        %v3587 = vld [vmem:[%s3365 + $0x6e8] sm:$0xff]
        %v3588 = vld [vmem:[%s3365 + $0x6f0] sm:$0xff]
        %v3589 = vld [vmem:[%s3365 + $0x6f8] sm:$0xff]
        %v3590 = vld [vmem:[%s3365 + $0x700] sm:$0xff]
        %v3591 = vld [vmem:[%s3365 + $0x708] sm:$0xff]
        %v3592 = vld [vmem:[%s3365 + $0x710] sm:$0xff]
        %v3593 = vld [vmem:[%s3365 + $0x718] sm:$0xff]
        %v3594 = vld [vmem:[%s3365 + $0x720] sm:$0xff]
        %v3595 = vld [vmem:[%s3365 + $0x728] sm:$0xff]
        %v3596 = vld [vmem:[%s3365 + $0x730] sm:$0xff]
        %v3597 = vld [vmem:[%s3365 + $0x738] sm:$0xff]
        %v3598 = vld [vmem:[%s3365 + $0x740] sm:$0xff]
        %v3599 = vld [vmem:[%s3365 + $0x748] sm:$0xff]
        %v3600 = vld [vmem:[%s3365 + $0x750] sm:$0xff]
        %v3601 = vld [vmem:[%s3365 + $0x758] sm:$0xff]
        %v3602 = vld [vmem:[%s3365 + $0x760] sm:$0xff]
        %v3603 = vld [vmem:[%s3365 + $0x768] sm:$0xff]
        %v3604 = vld [vmem:[%s3365 + $0x770] sm:$0xff]
        %v3605 = vld [vmem:[%s3365 + $0x778] sm:$0xff]
        %v3606 = vld [vmem:[%s3365 + $0x780] sm:$0xff]
        %v3607 = vld [vmem:[%s3365 + $0x788] sm:$0xff]
        %v3608 = vld [vmem:[%s3365 + $0x790] sm:$0xff]
        %v3609 = vld [vmem:[%s3365 + $0x798] sm:$0xff]
        %v3610 = vld [vmem:[%s3365 + $0x7a0] sm:$0xff]
        %v3611 = vld [vmem:[%s3365 + $0x7a8] sm:$0xff]
        %v3612 = vld [vmem:[%s3365 + $0x7b0] sm:$0xff]
        %v3613 = vld [vmem:[%s3365 + $0x7b8] sm:$0xff]
        %v3614 = vld [vmem:[%s3365 + $0x7c0] sm:$0xff]
        %v3615 = vld [vmem:[%s3365 + $0x7c8] sm:$0xff]
        %v3616 = vld [vmem:[%s3365 + $0x7d0] sm:$0xff]
        %v3617 = vld [vmem:[%s3365 + $0x7d8] sm:$0xff]
        %v3618 = vld [vmem:[%s3365 + $0x7e0] sm:$0xff]
        %v3619 = vld [vmem:[%s3365 + $0x7e8] sm:$0xff]
        %v3620 = vld [vmem:[%s3365 + $0x7f0] sm:$0xff]
        %v3621 = vld [vmem:[%s3365 + $0x7f8] sm:$0xff]
        %v3630 = vrot.slane %v3357, 2
        %v3631 = vrot.slane %v3361, 2
        %v3632 = vsel %vm1784, %v3630, %v3631
        %v3633 = vrot.slane %v3358, 2
        %v3634 = vrot.slane %v3362, 2
        %v3635 = vsel %vm1784, %v3633, %v3634
        %v3636 = vrot.slane %v3359, 2
        %v3637 = vrot.slane %v3363, 2
        %v3638 = vsel %vm1784, %v3636, %v3637
        %v3639 = vrot.slane %v3360, 2
        %v3640 = vrot.slane %v3364, 2
        %v3641 = vsel %vm1784, %v3639, %v3640
        %3646 = vmatpush.msra.mxu0 %v3426
        %3647 = vmatpush.msra.mxu0 %v3422
        %3648 = vmatpush.msra.mxu0 %v3418
        %3649 = vmatpush.msra.mxu0 %v3414
        %3650 = vmatpush.msra.mxu0 %v3410
        %3651 = vmatpush.msra.mxu0 %v3406
        %3652 = vmatpush.msra.mxu0 %v3402
        %3653 = vmatpush.msra.mxu0 %v3398
        %3654 = vmatpush.msra.mxu0 %v3394
        %3655 = vmatpush.msra.mxu0 %v3390
        %3656 = vmatpush.msra.mxu0 %v3386
        %3657 = vmatpush.msra.mxu0 %v3382
        %3658 = vmatpush.msra.mxu0 %v3378
        %3659 = vmatpush.msra.mxu0 %v3374
        %3660 = vmatpush.msra.mxu0 %v3370
        %3661 = vmatpush.msra.mxu0 %v3366
        %3662 = vmatmul.f32.gmra.mxu0 %v3632
        %v3663 = vpop.f32.mrf.mxu0
        %v3664 = vadd.f32 0.0, %v3663
        %3665 = vdwg.mxu0
        %3666 = vmatpush.msra.mxu0 %v3490
        %3667 = vmatpush.msra.mxu0 %v3486
        %3668 = vmatpush.msra.mxu0 %v3482
        %3669 = vmatpush.msra.mxu0 %v3478
        %3670 = vmatpush.msra.mxu0 %v3474
        %3671 = vmatpush.msra.mxu0 %v3470
        %3672 = vmatpush.msra.mxu0 %v3466
        %3673 = vmatpush.msra.mxu0 %v3462
        %3674 = vmatpush.msra.mxu0 %v3458
        %3675 = vmatpush.msra.mxu0 %v3454
        %3676 = vmatpush.msra.mxu0 %v3450
        %3677 = vmatpush.msra.mxu0 %v3446
        %3678 = vmatpush.msra.mxu0 %v3442
        %3679 = vmatpush.msra.mxu0 %v3438
        %3680 = vmatpush.msra.mxu0 %v3434
        %3681 = vmatpush.msra.mxu0 %v3430
        %3682 = vmatmul.f32.gmra.mxu0 %v3635
        %v3683 = vpop.f32.mrf.mxu0
        %v3684 = vadd.f32 %v3664, %v3683
        %3685 = vdwg.mxu0
        %3686 = vmatpush.msra.mxu0 %v3554
        %3687 = vmatpush.msra.mxu0 %v3550
        %3688 = vmatpush.msra.mxu0 %v3546
        %3689 = vmatpush.msra.mxu0 %v3542
        %3690 = vmatpush.msra.mxu0 %v3538
        %3691 = vmatpush.msra.mxu0 %v3534
        %3692 = vmatpush.msra.mxu0 %v3530
        %3693 = vmatpush.msra.mxu0 %v3526
        %3694 = vmatpush.msra.mxu0 %v3522
        %3695 = vmatpush.msra.mxu0 %v3518
        %3696 = vmatpush.msra.mxu0 %v3514
        %3697 = vmatpush.msra.mxu0 %v3510
        %3698 = vmatpush.msra.mxu0 %v3506
        %3699 = vmatpush.msra.mxu0 %v3502
        %3700 = vmatpush.msra.mxu0 %v3498
        %3701 = vmatpush.msra.mxu0 %v3494
        %3702 = vmatmul.f32.gmra.mxu0 %v3638
        %v3703 = vpop.f32.mrf.mxu0
        %v3704 = vadd.f32 %v3684, %v3703
        %3705 = vdwg.mxu0
        %3706 = vmatpush.msra.mxu0 %v3618
        %3707 = vmatpush.msra.mxu0 %v3614
        %3708 = vmatpush.msra.mxu0 %v3610
        %3709 = vmatpush.msra.mxu0 %v3606
        %3710 = vmatpush.msra.mxu0 %v3602
        %3711 = vmatpush.msra.mxu0 %v3598
        %3712 = vmatpush.msra.mxu0 %v3594
        %3713 = vmatpush.msra.mxu0 %v3590
        %3714 = vmatpush.msra.mxu0 %v3586
        %3715 = vmatpush.msra.mxu0 %v3582
        %3716 = vmatpush.msra.mxu0 %v3578
        %3717 = vmatpush.msra.mxu0 %v3574
        %3718 = vmatpush.msra.mxu0 %v3570
        %3719 = vmatpush.msra.mxu0 %v3566
        %3720 = vmatpush.msra.mxu0 %v3562
        %3721 = vmatpush.msra.mxu0 %v3558
        %3722 = vmatmul.f32.gmra.mxu0 %v3641
        %v3723 = vpop.f32.mrf.mxu0
        %v3724 = vadd.f32 %v3704, %v3723
        %3725 = vdwg.mxu0
        %3726 = vmatpush.msra.mxu0 %v3427
        %3727 = vmatpush.msra.mxu0 %v3423
        %3728 = vmatpush.msra.mxu0 %v3419
        %3729 = vmatpush.msra.mxu0 %v3415
        %3730 = vmatpush.msra.mxu0 %v3411
        %3731 = vmatpush.msra.mxu0 %v3407
        %3732 = vmatpush.msra.mxu0 %v3403
        %3733 = vmatpush.msra.mxu0 %v3399
        %3734 = vmatpush.msra.mxu0 %v3395
        %3735 = vmatpush.msra.mxu0 %v3391
        %3736 = vmatpush.msra.mxu0 %v3387
        %3737 = vmatpush.msra.mxu0 %v3383
        %3738 = vmatpush.msra.mxu0 %v3379
        %3739 = vmatpush.msra.mxu0 %v3375
        %3740 = vmatpush.msra.mxu0 %v3371
        %3741 = vmatpush.msra.mxu0 %v3367
        %3742 = vmatmul.f32.gmra.mxu0 %v3632
        %v3743 = vpop.f32.mrf.mxu0
        %v3744 = vadd.f32 0.0, %v3743
        %3745 = vdwg.mxu0
        %3746 = vmatpush.msra.mxu0 %v3491
        %3747 = vmatpush.msra.mxu0 %v3487
        %3748 = vmatpush.msra.mxu0 %v3483
        %3749 = vmatpush.msra.mxu0 %v3479
        %3750 = vmatpush.msra.mxu0 %v3475
        %3751 = vmatpush.msra.mxu0 %v3471
        %3752 = vmatpush.msra.mxu0 %v3467
        %3753 = vmatpush.msra.mxu0 %v3463
        %3754 = vmatpush.msra.mxu0 %v3459
        %3755 = vmatpush.msra.mxu0 %v3455
        %3756 = vmatpush.msra.mxu0 %v3451
        %3757 = vmatpush.msra.mxu0 %v3447
        %3758 = vmatpush.msra.mxu0 %v3443
        %3759 = vmatpush.msra.mxu0 %v3439
        %3760 = vmatpush.msra.mxu0 %v3435
        %3761 = vmatpush.msra.mxu0 %v3431
        %3762 = vmatmul.f32.gmra.mxu0 %v3635
        %v3763 = vpop.f32.mrf.mxu0
        %v3764 = vadd.f32 %v3744, %v3763
        %3765 = vdwg.mxu0
        %3766 = vmatpush.msra.mxu0 %v3555
        %3767 = vmatpush.msra.mxu0 %v3551
        %3768 = vmatpush.msra.mxu0 %v3547
        %3769 = vmatpush.msra.mxu0 %v3543
        %3770 = vmatpush.msra.mxu0 %v3539
        %3771 = vmatpush.msra.mxu0 %v3535
        %3772 = vmatpush.msra.mxu0 %v3531
        %3773 = vmatpush.msra.mxu0 %v3527
        %3774 = vmatpush.msra.mxu0 %v3523
        %3775 = vmatpush.msra.mxu0 %v3519
        %3776 = vmatpush.msra.mxu0 %v3515
        %3777 = vmatpush.msra.mxu0 %v3511
        %3778 = vmatpush.msra.mxu0 %v3507
        %3779 = vmatpush.msra.mxu0 %v3503
        %3780 = vmatpush.msra.mxu0 %v3499
        %3781 = vmatpush.msra.mxu0 %v3495
        %3782 = vmatmul.f32.gmra.mxu0 %v3638
        %v3783 = vpop.f32.mrf.mxu0
        %v3784 = vadd.f32 %v3764, %v3783
        %3785 = vdwg.mxu0
        %3786 = vmatpush.msra.mxu0 %v3619
        %3787 = vmatpush.msra.mxu0 %v3615
        %3788 = vmatpush.msra.mxu0 %v3611
        %3789 = vmatpush.msra.mxu0 %v3607
        %3790 = vmatpush.msra.mxu0 %v3603
        %3791 = vmatpush.msra.mxu0 %v3599
        %3792 = vmatpush.msra.mxu0 %v3595
        %3793 = vmatpush.msra.mxu0 %v3591
        %3794 = vmatpush.msra.mxu0 %v3587
        %3795 = vmatpush.msra.mxu0 %v3583
        %3796 = vmatpush.msra.mxu0 %v3579
        %3797 = vmatpush.msra.mxu0 %v3575
        %3798 = vmatpush.msra.mxu0 %v3571
        %3799 = vmatpush.msra.mxu0 %v3567
        %3800 = vmatpush.msra.mxu0 %v3563
        %3801 = vmatpush.msra.mxu0 %v3559
        %3802 = vmatmul.f32.gmra.mxu0 %v3641
        %v3803 = vpop.f32.mrf.mxu0
        %v3804 = vadd.f32 %v3784, %v3803
        %3805 = vdwg.mxu0
        %3806 = vmatpush.msra.mxu0 %v3428
        %3807 = vmatpush.msra.mxu0 %v3424
        %3808 = vmatpush.msra.mxu0 %v3420
        %3809 = vmatpush.msra.mxu0 %v3416
        %3810 = vmatpush.msra.mxu0 %v3412
        %3811 = vmatpush.msra.mxu0 %v3408
        %3812 = vmatpush.msra.mxu0 %v3404
        %3813 = vmatpush.msra.mxu0 %v3400
        %3814 = vmatpush.msra.mxu0 %v3396
        %3815 = vmatpush.msra.mxu0 %v3392
        %3816 = vmatpush.msra.mxu0 %v3388
        %3817 = vmatpush.msra.mxu0 %v3384
        %3818 = vmatpush.msra.mxu0 %v3380
        %3819 = vmatpush.msra.mxu0 %v3376
        %3820 = vmatpush.msra.mxu0 %v3372
        %3821 = vmatpush.msra.mxu0 %v3368
        %3822 = vmatmul.f32.gmra.mxu0 %v3632
        %v3823 = vpop.f32.mrf.mxu0
        %v3824 = vadd.f32 0.0, %v3823
        %3825 = vdwg.mxu0
        %3826 = vmatpush.msra.mxu0 %v3492
        %3827 = vmatpush.msra.mxu0 %v3488
        %3828 = vmatpush.msra.mxu0 %v3484
        %3829 = vmatpush.msra.mxu0 %v3480
        %3830 = vmatpush.msra.mxu0 %v3476
        %3831 = vmatpush.msra.mxu0 %v3472
        %3832 = vmatpush.msra.mxu0 %v3468
        %3833 = vmatpush.msra.mxu0 %v3464
        %3834 = vmatpush.msra.mxu0 %v3460
        %3835 = vmatpush.msra.mxu0 %v3456
        %3836 = vmatpush.msra.mxu0 %v3452
        %3837 = vmatpush.msra.mxu0 %v3448
        %3838 = vmatpush.msra.mxu0 %v3444
        %3839 = vmatpush.msra.mxu0 %v3440
        %3840 = vmatpush.msra.mxu0 %v3436
        %3841 = vmatpush.msra.mxu0 %v3432
        %3842 = vmatmul.f32.gmra.mxu0 %v3635
        %v3843 = vpop.f32.mrf.mxu0
        %v3844 = vadd.f32 %v3824, %v3843
        %3845 = vdwg.mxu0
        %3846 = vmatpush.msra.mxu0 %v3556
        %3847 = vmatpush.msra.mxu0 %v3552
        %3848 = vmatpush.msra.mxu0 %v3548
        %3849 = vmatpush.msra.mxu0 %v3544
        %3850 = vmatpush.msra.mxu0 %v3540
        %3851 = vmatpush.msra.mxu0 %v3536
        %3852 = vmatpush.msra.mxu0 %v3532
        %3853 = vmatpush.msra.mxu0 %v3528
        %3854 = vmatpush.msra.mxu0 %v3524
        %3855 = vmatpush.msra.mxu0 %v3520
        %3856 = vmatpush.msra.mxu0 %v3516
        %3857 = vmatpush.msra.mxu0 %v3512
        %3858 = vmatpush.msra.mxu0 %v3508
        %3859 = vmatpush.msra.mxu0 %v3504
        %3860 = vmatpush.msra.mxu0 %v3500
        %3861 = vmatpush.msra.mxu0 %v3496
        %3862 = vmatmul.f32.gmra.mxu0 %v3638
        %v3863 = vpop.f32.mrf.mxu0
        %v3864 = vadd.f32 %v3844, %v3863
        %3865 = vdwg.mxu0
        %3866 = vmatpush.msra.mxu0 %v3620
        %3867 = vmatpush.msra.mxu0 %v3616
        %3868 = vmatpush.msra.mxu0 %v3612
        %3869 = vmatpush.msra.mxu0 %v3608
        %3870 = vmatpush.msra.mxu0 %v3604
        %3871 = vmatpush.msra.mxu0 %v3600
        %3872 = vmatpush.msra.mxu0 %v3596
        %3873 = vmatpush.msra.mxu0 %v3592
        %3874 = vmatpush.msra.mxu0 %v3588
        %3875 = vmatpush.msra.mxu0 %v3584
        %3876 = vmatpush.msra.mxu0 %v3580
        %3877 = vmatpush.msra.mxu0 %v3576
        %3878 = vmatpush.msra.mxu0 %v3572
        %3879 = vmatpush.msra.mxu0 %v3568
        %3880 = vmatpush.msra.mxu0 %v3564
        %3881 = vmatpush.msra.mxu0 %v3560
        %3882 = vmatmul.f32.gmra.mxu0 %v3641
        %v3883 = vpop.f32.mrf.mxu0
        %v3884 = vadd.f32 %v3864, %v3883
        %3885 = vdwg.mxu0
        %3886 = vmatpush.msra.mxu0 %v3429
        %3887 = vmatpush.msra.mxu0 %v3425
        %3888 = vmatpush.msra.mxu0 %v3421
        %3889 = vmatpush.msra.mxu0 %v3417
        %3890 = vmatpush.msra.mxu0 %v3413
        %3891 = vmatpush.msra.mxu0 %v3409
        %3892 = vmatpush.msra.mxu0 %v3405
        %3893 = vmatpush.msra.mxu0 %v3401
        %3894 = vmatpush.msra.mxu0 %v3397
        %3895 = vmatpush.msra.mxu0 %v3393
        %3896 = vmatpush.msra.mxu0 %v3389
        %3897 = vmatpush.msra.mxu0 %v3385
        %3898 = vmatpush.msra.mxu0 %v3381
        %3899 = vmatpush.msra.mxu0 %v3377
        %3900 = vmatpush.msra.mxu0 %v3373
        %3901 = vmatpush.msra.mxu0 %v3369
        %3902 = vmatmul.f32.gmra.mxu0 %v3632
        %v3903 = vpop.f32.mrf.mxu0
        %v3904 = vadd.f32 0.0, %v3903
        %3905 = vdwg.mxu0
        %3906 = vmatpush.msra.mxu0 %v3493
        %3907 = vmatpush.msra.mxu0 %v3489
        %3908 = vmatpush.msra.mxu0 %v3485
        %3909 = vmatpush.msra.mxu0 %v3481
        %3910 = vmatpush.msra.mxu0 %v3477
        %3911 = vmatpush.msra.mxu0 %v3473
        %3912 = vmatpush.msra.mxu0 %v3469
        %3913 = vmatpush.msra.mxu0 %v3465
        %3914 = vmatpush.msra.mxu0 %v3461
        %3915 = vmatpush.msra.mxu0 %v3457
        %3916 = vmatpush.msra.mxu0 %v3453
        %3917 = vmatpush.msra.mxu0 %v3449
        %3918 = vmatpush.msra.mxu0 %v3445
        %3919 = vmatpush.msra.mxu0 %v3441
        %3920 = vmatpush.msra.mxu0 %v3437
        %3921 = vmatpush.msra.mxu0 %v3433
        %3922 = vmatmul.f32.gmra.mxu0 %v3635
        %v3923 = vpop.f32.mrf.mxu0
        %v3924 = vadd.f32 %v3904, %v3923
        %3925 = vdwg.mxu0
        %3926 = vmatpush.msra.mxu0 %v3557
        %3927 = vmatpush.msra.mxu0 %v3553
        %3928 = vmatpush.msra.mxu0 %v3549
        %3929 = vmatpush.msra.mxu0 %v3545
        %3930 = vmatpush.msra.mxu0 %v3541
        %3931 = vmatpush.msra.mxu0 %v3537
        %3932 = vmatpush.msra.mxu0 %v3533
        %3933 = vmatpush.msra.mxu0 %v3529
        %3934 = vmatpush.msra.mxu0 %v3525
        %3935 = vmatpush.msra.mxu0 %v3521
        %3936 = vmatpush.msra.mxu0 %v3517
        %3937 = vmatpush.msra.mxu0 %v3513
        %3938 = vmatpush.msra.mxu0 %v3509
        %3939 = vmatpush.msra.mxu0 %v3505
        %3940 = vmatpush.msra.mxu0 %v3501
        %3941 = vmatpush.msra.mxu0 %v3497
        %3942 = vmatmul.f32.gmra.mxu0 %v3638
        %v3943 = vpop.f32.mrf.mxu0
        %v3944 = vadd.f32 %v3924, %v3943
        %3945 = vdwg.mxu0
        %3946 = vmatpush.msra.mxu0 %v3621
        %3947 = vmatpush.msra.mxu0 %v3617
        %3948 = vmatpush.msra.mxu0 %v3613
        %3949 = vmatpush.msra.mxu0 %v3609
        %3950 = vmatpush.msra.mxu0 %v3605
        %3951 = vmatpush.msra.mxu0 %v3601
        %3952 = vmatpush.msra.mxu0 %v3597
        %3953 = vmatpush.msra.mxu0 %v3593
        %3954 = vmatpush.msra.mxu0 %v3589
        %3955 = vmatpush.msra.mxu0 %v3585
        %3956 = vmatpush.msra.mxu0 %v3581
        %3957 = vmatpush.msra.mxu0 %v3577
        %3958 = vmatpush.msra.mxu0 %v3573
        %3959 = vmatpush.msra.mxu0 %v3569
        %3960 = vmatpush.msra.mxu0 %v3565
        %3961 = vmatpush.msra.mxu0 %v3561
        %3962 = vmatmul.f32.gmra.mxu0 %v3641
        %v3963 = vpop.f32.mrf.mxu0
        %v3964 = vadd.f32 %v3944, %v3963
        %3965 = vdwg.mxu0
        %v3966 = vadd.f32 %v3115, %v3724
        %v3967 = vadd.f32 %v3195, %v3804
        %v3968 = vadd.f32 %v3275, %v3884
        %v3969 = vadd.f32 %v3355, %v3964
        %v3970 = vld [vmem:[#allocation9] sm:$0xf]
        %v3972 = vperm.slane %v3970, 0
        %v3973 = vperm.slane %v3970, 1
        %v3974 = vperm.slane %v3970, 2
        %v3975 = vperm.slane %v3970, 3
        %v3980 = vadd.f32 %v3966, %v3972
        %v3981 = vadd.f32 %v3967, %v3973
        %v3982 = vadd.f32 %v3968, %v3974
        %v3983 = vadd.f32 %v3969, %v3975
        %v3984 = vld [vmem:[%s282] sm:$0xff]
        %v3985 = vld [vmem:[%s282 + $0x8] sm:$0xff]
        %v3986 = vld [vmem:[%s282 + $0x10] sm:$0xff]
        %v3987 = vld [vmem:[%s282 + $0x18] sm:$0xff]
        %v3988 = vadd.f32 %v3980, %v3984
        %v3989 = vadd.f32 %v3981, %v3985
        %v3990 = vadd.f32 %v3982, %v3986
        %v3991 = vadd.f32 %v3983, %v3987
        %v3992 = vmax.f32 %v3988, 0.0
        %v3993 = vmax.f32 %v3989, 0.0
        %v3994 = vmax.f32 %v3990, 0.0
        %v3995 = vmax.f32 %v3991, 0.0
        %3996 = vst [vmem:[%s287] sm:$0xff] %v3992
        %3997 = vst [vmem:[%s287 + $0x8] sm:$0xff] %v3993
        %3998 = vst [vmem:[%s287 + $0x10] sm:$0xff] %v3994
        %3999 = vst [vmem:[%s287 + $0x18] sm:$0xff] %v3995
        %p4000 = scmp.lt.s32.totalorder %s19, 1
        %s4001 = scalar_select %p4000, %s19, 1
        %s4002 = smul.addr %s4001, 4
        %s4003 = smul.addr %s4002, 8
        %s4004 = scalar_lea.vmem %s5, %s4003
        // Predicated region
        $region57: #{basic_block_forward.1} parent=39 // pred_check
          %p4005 = pneg %p147
        $region58: #{basic_block_forward.1} parent=39 // pred_check_branch
          %4007 = sbr.rel (%p4005) target = $region60
        $region59: #{basic_block_forward.1} parent=39 // pred_region
          _
        $region60: #{basic_block_forward.1} parent=39 // pred_fallthru
          _
      $region40: #{basic_block_forward.1} parent=5 // pred_fallthru
        _
      %p4008 = scmp.le.s32.totalorder 2, %s14
      // Predicated region
      $region61: #{basic_block_forward.1} parent=5 // pred_check
        %p4009 = pneg %p4008
      $region62: #{basic_block_forward.1} parent=5 // pred_check_branch
        %4011 = sbr.rel (%p4009) target = $region64
      $region63: #{basic_block_forward.1} parent=5 // pred_region
        %s4012 = ssub.s32 %s14, 2
        // Predicated region
        $region65: #{basic_block_forward.1} parent=63 // pred_check
          %p4013 = pneg %p153
        $region66: #{basic_block_forward.1} parent=63 // pred_check_branch
          %4015 = sbr.rel (%p4013) target = $region68
        $region67: #{basic_block_forward.1} parent=63 // pred_region
          %p4016 = scmp.lt.s32.totalorder %s20, 1
          %s4017 = scalar_select %p4016, %s20, 1
          %s4018 = smul.addr %s4017, 4
          %s4019 = smul.addr %s4018, 8
          %s4020 = scalar_lea.vmem %s5, %s4019
        $region68: #{basic_block_forward.1} parent=63 // pred_fallthru
          _
      $region64: #{basic_block_forward.1} parent=5 // pred_fallthru
        _
    $region6: #{basic_block_forward.1} parent=1 // loop_footer
      %s18 = sadd.s32 1, %s14
    $region7: #{basic_block_forward.1} parent=1 // loop_footer_branch
      %13 = sbr.rel target = $region3
    $region8: #{basic_block_forward.1} parent=1 // loop_exit
      _
    %4021 = vsyncpa [#allocation5], 1
    %s4022 = scalar_lea.sflag [#allocation5], 1
    %4023 = vsyncpa %s4022, 1
    %4024 = vsyncpa [#allocation7], 1
    %4025 = vsyncpa [#allocation10], 1

</llo_original>
